<compile_context>
chip_gen: v7x
topology: tpu7x:2x2x1
jax: 0.10.0
libtpu: 0.0.40
codegen_flags: <defaults>
</compile_context>

<pallas_src>
import jax
import jax.numpy as jnp
import numpy as np
from jax import lax
from jax.experimental import pallas as pl
from jax.experimental.pallas import tpu as pltpu


def _bottleneck_kernel(
    # scalar-prefetch refs (SMEM) -- consumed only by the index_maps
    _top_idx_ref, _bot_idx_ref,
    # inputs
    x_ref,     # (1, tH*W, Cin) f32   rows of this H-tile (also the residual)
    xt_ref,    # (1, W, Cin)    f32   image row just above the tile (clamped)
    xb_ref,    # (1, W, Cin)    f32   image row just below the tile (clamped)
    w1_ref,    # (Cin, P)  bf16  (BN1 scale folded)
    b1_ref,    # (1, P)    f32
    w2_ref,    # (9P, P)   bf16  (HWIO reshaped, BN2 scale folded)
    b2_ref,    # (1, P)    f32
    w3_ref,    # (P, C2)   bf16  (BN3 scale folded)
    b3_ref,    # (1, C2)   f32
    # output
    out_ref,   # (1, tH*W, C2)
    # scratch
    pad_ref,   # ((tH+2)*(W+2)+2, P) bf16   flat zero-padded h1 band
    slab_ref,  # (tH*(W+2), 9P)      bf16   im2col slab (2 junk cols / row)
):
    j = pl.program_id(1)
    n_tiles = pl.num_programs(1)

    tHW = x_ref.shape[1]
    W = xt_ref.shape[1]
    P = w1_ref.shape[1]
    tH = tHW // W
    Wp2 = W + 2
    rows = tH * Wp2                      # slab rows (incl. 2 junk cols per row)

    w1 = w1_ref[...]
    b1 = b1_ref[...]

    def conv1(v):                        # 1x1 conv + BN1 + relu -> bf16
        h = jnp.dot(v.astype(jnp.bfloat16), w1,
                    preferred_element_type=jnp.float32)
        return jnp.maximum(h + b1, 0.0).astype(jnp.bfloat16)

    x_main = x_ref[0]                    # (tH*W, Cin) f32
    h1 = conv1(x_main)                   # (tH*W, P)  bf16
    h1_top = conv1(xt_ref[0])            # (W, P)     bf16
    h1_bot = conv1(xb_ref[0])            # (W, P)     bf16

    # ---- flat zero-padded h1 band ------------------------------------------
    # pad_ref[a*(W+2) + b] == zero-padded h1[tile_row0 - 1 + a, b - 1]
    zrow = jnp.zeros((1, P), jnp.bfloat16)
    zcol = jnp.zeros((tH, 1, P), jnp.bfloat16)

    pad_ref[0:Wp2, :] = jnp.concatenate([zrow, h1_top, zrow], axis=0)
    interior = jnp.concatenate([zcol, h1.reshape(tH, W, P), zcol], axis=1)
    pad_ref[Wp2:Wp2 + rows, :] = interior.reshape(rows, P)
    pad_ref[Wp2 + rows:2 * Wp2 + rows, :] = jnp.concatenate(
        [zrow, h1_bot, zrow], axis=0)
    pad_ref[2 * Wp2 + rows:2 * Wp2 + rows + 2, :] = jnp.zeros((2, P),
                                                              jnp.bfloat16)

    # First / last tile of the image: the halo row is the conv zero-padding.
    @pl.when(j == 0)
    def _():
        pad_ref[0:Wp2, :] = jnp.zeros((Wp2, P), jnp.bfloat16)

    @pl.when(j == n_tiles - 1)
    def _():
        pad_ref[Wp2 + rows:2 * Wp2 + rows, :] = jnp.zeros((Wp2, P),
                                                          jnp.bfloat16)

    # ---- conv2 (3x3) : in-place im2col + one K=9P MXU matmul ----------------
    # Tap (dy,dx) of flat output row r is pad_ref[r + dy*(W+2) + dx]: a plain
    # contiguous slice -> each tap is one load + one 128-wide aligned store
    # (no concatenate, no reshape relayouts, no masked column stores).
    for dy in range(3):
        for dx in range(3):
            t = 3 * dy + dx
            off = dy * Wp2 + dx
            slab_ref[:, t * P:(t + 1) * P] = pad_ref[off:off + rows, :]

    h2f = jnp.dot(slab_ref[...], w2_ref[...],
                  preferred_element_type=jnp.float32)      # (rows, P) f32
    # drop the 2 junk columns per image row
    h2 = h2f.reshape(tH, Wp2, P)[:, :W, :].reshape(tHW, P)
    h2 = jnp.maximum(h2 + b2_ref[...], 0.0)

    # ---- conv3 (1x1) + bias + residual add (no final relu) ------------------
    h3 = jnp.dot(h2.astype(jnp.bfloat16), w3_ref[...],
                 preferred_element_type=jnp.float32)
    h3 = h3 + b3_ref[...] + x_main
    out_ref[0] = h3.astype(out_ref.dtype)


# ------------------------------- wrapper -------------------------------------

def _pick_tile_h(H, W, P, C2):
    """Largest divisor of H whose working set stays well inside v7x VMEM,
    while keeping a few grid steps for the software pipeline."""
    budget = 24 * 2 ** 20
    per_row = (W + 2) * 9 * P * 2                       # slab (bf16)
    per_row += W * (2 * C2 * 4 + P * 4 + C2 * 4)        # x/out blocks + temps
    t = max(1, min(H, budget // max(per_row, 1)))
    while H % t:
        t -= 1
    while t > 8 and (H // t) < 4:                       # >= ~4 H-steps
        t //= 2
        while H % t:
            t -= 1
    return t


def _vmem_limit_bytes(tile_h, W, Cin, P, C2, pad_rows, slab_rows, out_isize):
    tHW = tile_h * W
    blk_in = tHW * Cin * 4 + 2 * W * Cin * 4
    blk_out = tHW * C2 * out_isize
    weights = (Cin * P + 9 * P * P + P * C2) * 2 + (2 * P + C2) * 4
    scratch = pad_rows * P * 2 + slab_rows * 9 * P * 2
    temps = slab_rows * P * 4 + tHW * (P + C2 + Cin) * 4
    est = 2 * (blk_in + blk_out) + 2 * weights + scratch + 2 * temps
    # 32 MiB floor (v5e default scoped VMEM is only 16), 56 MiB cap (safe on
    # v7x's 64 MiB physical VMEM).
    return int(min(max(2 * est, 32 * 2 ** 20), 56 * 2 ** 20))


def bottleneck_pallas(x_nhwc, kernel_params, *, tile_h=None,
                      out_dtype=jnp.float32):
    """x_nhwc: (N, H, W, Cin) f32. Returns (N, H, W, planes*expansion)."""
    N, H, W, Cin = x_nhwc.shape
    w1, b1, w2col, b2, w3, b3 = kernel_params
    P = w1.shape[1]
    C2 = w3.shape[1]
    assert Cin == C2, "downsample=None requires inplanes == planes * expansion"
    assert w2col.shape[0] == 9 * P

    if tile_h is None:
        tile_h = _pick_tile_h(H, W, P, C2)
    assert H % tile_h == 0, "tile_h must divide H"
    n_tiles = H // tile_h
    # (8,128) layout rule: non-full second-minor block dims must be 8-aligned.
    assert (tile_h * W) % 8 == 0 and W % 8 == 0, \
        "need W and tile_h*W to be multiples of 8"

    x_flat = x_nhwc.reshape(N, H * W, Cin)

    # Row index of the one-row halo above / below each H-tile (clamped; the
    # kernel zeroes the halo at the image border so the clamped row is unused).
    top_idx = jnp.asarray(np.maximum(np.arange(n_tiles) * tile_h - 1, 0),
                          jnp.int32)
    bot_idx = jnp.asarray(
        np.minimum(np.arange(n_tiles) * tile_h + tile_h, H - 1), jnp.int32)

    def full(a):
        return pl.BlockSpec(a.shape, lambda n, j, t, b: (0,) * a.ndim)

    pad_rows = (tile_h + 2) * (W + 2) + 2
    slab_rows = tile_h * (W + 2)
    vmem_limit = _vmem_limit_bytes(tile_h, W, Cin, P, C2, pad_rows, slab_rows,
                                   jnp.dtype(out_dtype).itemsize)

    out = pl.pallas_call(
        _bottleneck_kernel,
        out_shape=jax.ShapeDtypeStruct((N, H * W, C2), out_dtype),
        grid_spec=pltpu.PrefetchScalarGridSpec(
            num_scalar_prefetch=2,
            grid=(N, n_tiles),
            in_specs=[
                pl.BlockSpec((1, tile_h * W, Cin),
                             lambda n, j, t, b: (n, j, 0)),
                pl.BlockSpec((1, W, Cin), lambda n, j, t, b: (n, t[j], 0)),
                pl.BlockSpec((1, W, Cin), lambda n, j, t, b: (n, b[j], 0)),
                full(w1), full(b1), full(w2col), full(b2), full(w3), full(b3),
            ],
            out_specs=pl.BlockSpec((1, tile_h * W, C2),
                                   lambda n, j, t, b: (n, j, 0)),
            scratch_shapes=[
                pltpu.VMEM((pad_rows, P), jnp.bfloat16),
                pltpu.VMEM((slab_rows, 9 * P), jnp.bfloat16),
            ],
        ),
        compiler_params=pltpu.CompilerParams(
            dimension_semantics=("parallel", "parallel"),
            vmem_limit_bytes=vmem_limit,
        ),
    )(top_idx, bot_idx, x_flat, x_flat, x_flat,
      w1, b1, w2col, b2, w3, b3)
    return out.reshape(N, H, W, C2)


# ----------------------------- parameter prep -------------------------------

def _fold_bn(gamma, beta, mean, var, eps=1e-5):
    scale = gamma / jnp.sqrt(var + eps)
    bias = beta - mean * scale
    return scale, bias


def make_raw_params(key, inplanes, planes, expansion=2):
    """Deterministic synthetic conv weights + BN stats."""
    keys = jax.random.split(key, 15)
    k = iter(keys)

    def w(shape):
        return 0.1 * jax.random.normal(next(k), shape, jnp.float32)

    def bn(c):
        gamma = 1.0 + 0.05 * jax.random.normal(next(k), (c,), jnp.float32)
        beta = 0.05 * jax.random.normal(next(k), (c,), jnp.float32)
        mean = 0.05 * jax.random.normal(next(k), (c,), jnp.float32)
        var = jnp.abs(1.0 + 0.05 * jax.random.normal(next(k), (c,), jnp.float32))
        return gamma, beta, mean, var

    w1 = w((inplanes, planes))               # conv1 1x1, (Cin -> P)
    bn1 = bn(planes)
    w2 = w((3, 3, planes, planes))           # conv2 3x3, HWIO
    bn2 = bn(planes)
    w3 = w((planes, planes * expansion))     # conv3 1x1, (P -> 2P)
    bn3 = bn(planes * expansion)
    return (w1, bn1, w2, bn2, w3, bn3)


def prepare_params(raw):
    """Fold BN scales into conv weights (bf16 matmul operands), keep f32 biases."""
    # TODO(synk): BatchNorm training-mode batch-statistics / momentum update is
    # not implemented; inference-mode BN is folded into the conv weights.
    w1, bn1, w2, bn2, w3, bn3 = raw
    P = w1.shape[1]
    s1, b1 = _fold_bn(*bn1)
    s2, b2 = _fold_bn(*bn2)
    s3, b3 = _fold_bn(*bn3)
    w1f = (w1 * s1[None, :]).astype(jnp.bfloat16)
    w2f = (w2 * s2[None, None, None, :]).astype(jnp.bfloat16)
    w2col = w2f.reshape(9 * P, P)            # (dy, dx, cin) -> rows
    w3f = (w3 * s3[None, :]).astype(jnp.bfloat16)
    return (w1f, b1.reshape(1, -1), w2col, b2.reshape(1, -1),
            w3f, b3.reshape(1, -1))


# ------------------------------- reference ----------------------------------

def bottleneck_ref(x_nhwc, kernel_params):
    """Pure-JAX reference using the same folded bf16 weights / f32 biases."""
    w1, b1, w2col, b2, w3, b3 = kernel_params
    P = w1.shape[1]
    w2 = w2col.reshape(3, 3, P, P)
    h = jnp.einsum("nhwc,co->nhwo", x_nhwc.astype(jnp.bfloat16), w1,
                   preferred_element_type=jnp.float32)
    h = jnp.maximum(h + b1.reshape(1, 1, 1, -1), 0.0)
    h = lax.conv_general_dilated(
        h.astype(jnp.bfloat16), w2, window_strides=(1, 1), padding="SAME",
        dimension_numbers=("NHWC", "HWIO", "NHWC"),
        preferred_element_type=jnp.float32)
    h = jnp.maximum(h + b2.reshape(1, 1, 1, -1), 0.0)
    h = jnp.einsum("nhwc,co->nhwo", h.astype(jnp.bfloat16), w3,
                   preferred_element_type=jnp.float32)
    h = h + b3.reshape(1, 1, 1, -1)
    return h + x_nhwc                        # no_relu=True


if __name__ == "__main__":
    key = jax.random.PRNGKey(0)
    k_x, k_p = jax.random.split(key)

    # Shapes matching PIDNet-M's `layer5_` Bottleneck: planes=128, expansion=2,
    # inplanes = planes*2 = 256 so the identity residual is valid.  128-wide
    # planes keep every tap store and the output store lane-dense.
    N, H, W = 2, 16, 16
    planes = 128
    expansion = 2
    inplanes = planes * expansion

    x_nchw = jax.random.normal(k_x, (N, inplanes, H, W), jnp.float32)
    x_nhwc = jnp.transpose(x_nchw, (0, 2, 3, 1))   # NCHW -> NHWC

    raw = make_raw_params(k_p, inplanes, planes, expansion)
    params = prepare_params(raw)

    out = jax.block_until_ready(bottleneck_pallas(x_nhwc, params, tile_h=8))
    ref = jax.block_until_ready(bottleneck_ref(x_nhwc, params))

    np.testing.assert_allclose(np.asarray(out), np.asarray(ref),
                               rtol=1e-2, atol=1e-2)
    print("KERNEL_OK")
</pallas_src>

<mosaic_0001>
module attributes {stable_mosaic.version = 11 : i64} {
  func.func @_bottleneck_kernel(%arg0: i32, %arg1: i32, %arg2: memref<2xi32, #tpu.memory_space<smem>>, %arg3: memref<2xi32, #tpu.memory_space<smem>>, %arg4: memref<1x128x256xf32, #tpu.memory_space<vmem>>, %arg5: memref<1x16x256xf32, #tpu.memory_space<vmem>>, %arg6: memref<1x16x256xf32, #tpu.memory_space<vmem>>, %arg7: memref<256x128xbf16, #tpu.memory_space<vmem>>, %arg8: memref<1x128xf32, #tpu.memory_space<vmem>>, %arg9: memref<1152x128xbf16, #tpu.memory_space<vmem>>, %arg10: memref<1x128xf32, #tpu.memory_space<vmem>>, %arg11: memref<128x256xbf16, #tpu.memory_space<vmem>>, %arg12: memref<1x256xf32, #tpu.memory_space<vmem>>, %arg13: memref<1x128x256xf32, #tpu.memory_space<vmem>>, %arg14: memref<182x128xbf16, #tpu.memory_space<vmem>>, %arg15: memref<144x1152xbf16, #tpu.memory_space<vmem>>) attributes {dimension_semantics = [#tpu.dimension_semantics<parallel>, #tpu.dimension_semantics<parallel>], iteration_bounds = array<i64: 2, 2>, scalar_prefetch = 2 : i64, scratch_operands = 2 : i64, tpu.core_type = #tpu.core_type<tc>, window_params = [{transform_indices = @transform_0, window_bounds = array<i64: 1, 128, 256>}, {transform_indices = @transform_1, window_bounds = array<i64: 1, 16, 256>}, {transform_indices = @transform_2, window_bounds = array<i64: 1, 16, 256>}, {pipeline_mode = #tpu.pipeline_mode<synchronous>, transform_indices = @transform_3, window_bounds = array<i64: 256, 128>}, {pipeline_mode = #tpu.pipeline_mode<synchronous>, transform_indices = @transform_4, window_bounds = array<i64: 1, 128>}, {pipeline_mode = #tpu.pipeline_mode<synchronous>, transform_indices = @transform_5, window_bounds = array<i64: 1152, 128>}, {pipeline_mode = #tpu.pipeline_mode<synchronous>, transform_indices = @transform_6, window_bounds = array<i64: 1, 128>}, {pipeline_mode = #tpu.pipeline_mode<synchronous>, transform_indices = @transform_7, window_bounds = array<i64: 128, 256>}, {pipeline_mode = #tpu.pipeline_mode<synchronous>, transform_indices = @transform_8, window_bounds = array<i64: 1, 256>}, {transform_indices = @transform_9, window_bounds = array<i64: 1, 128, 256>}]} {
    %c0 = arith.constant 0 : index
    %c0_0 = arith.constant 0 : index
    %0 = vector.load %arg7[%c0, %c0_0] : memref<256x128xbf16, #tpu.memory_space<vmem>>, vector<256x128xbf16>
    %c0_1 = arith.constant 0 : index
    %c0_2 = arith.constant 0 : index
    %1 = vector.load %arg8[%c0_1, %c0_2] : memref<1x128xf32, #tpu.memory_space<vmem>>, vector<1x128xf32>
    %c0_3 = arith.constant 0 : index
    %c0_4 = arith.constant 0 : index
    %c0_5 = arith.constant 0 : index
    %2 = vector.load %arg4[%c0_3, %c0_4, %c0_5] : memref<1x128x256xf32, #tpu.memory_space<vmem>>, vector<1x128x256xf32>
    %3 = vector.shape_cast %2 : vector<1x128x256xf32> to vector<128x256xf32>
    %4 = arith.truncf %3 : vector<128x256xf32> to vector<128x256xbf16>
    %cst = arith.constant dense<0.000000e+00> : vector<128x128xf32>
    %5 = tpu.matmul %4, %0, %cst {dimension_numbers = #tpu.dot_dimension_numbers<[1], [0], [0], [1], [0, 0, 1, 1], [], []>} : vector<128x256xbf16>, vector<256x128xbf16>, vector<128x128xf32> -> vector<128x128xf32>
    %6 = vector.broadcast %1 : vector<1x128xf32> to vector<128x128xf32>
    %7 = arith.addf %5, %6 : vector<128x128xf32>
    %cst_6 = arith.constant 0.000000e+00 : f32
    %8 = vector.broadcast %cst_6 : f32 to vector<128x128xf32>
    %9 = arith.maximumf %7, %8 : vector<128x128xf32>
    %10 = arith.truncf %9 : vector<128x128xf32> to vector<128x128xbf16>
    %c0_7 = arith.constant 0 : index
    %c0_8 = arith.constant 0 : index
    %c0_9 = arith.constant 0 : index
    %11 = vector.load %arg5[%c0_7, %c0_8, %c0_9] : memref<1x16x256xf32, #tpu.memory_space<vmem>>, vector<1x16x256xf32>
    %12 = vector.shape_cast %11 : vector<1x16x256xf32> to vector<16x256xf32>
    %13 = arith.truncf %12 : vector<16x256xf32> to vector<16x256xbf16>
    %cst_10 = arith.constant dense<0.000000e+00> : vector<16x128xf32>
    %14 = tpu.matmul %13, %0, %cst_10 {dimension_numbers = #tpu.dot_dimension_numbers<[1], [0], [0], [1], [0, 0, 1, 1], [], []>} : vector<16x256xbf16>, vector<256x128xbf16>, vector<16x128xf32> -> vector<16x128xf32>
    %15 = vector.broadcast %1 : vector<1x128xf32> to vector<16x128xf32>
    %16 = arith.addf %14, %15 : vector<16x128xf32>
    %cst_11 = arith.constant 0.000000e+00 : f32
    %17 = vector.broadcast %cst_11 : f32 to vector<16x128xf32>
    %18 = arith.maximumf %16, %17 : vector<16x128xf32>
    %19 = arith.truncf %18 : vector<16x128xf32> to vector<16x128xbf16>
    %c0_12 = arith.constant 0 : index
    %c0_13 = arith.constant 0 : index
    %c0_14 = arith.constant 0 : index
    %20 = vector.load %arg6[%c0_12, %c0_13, %c0_14] : memref<1x16x256xf32, #tpu.memory_space<vmem>>, vector<1x16x256xf32>
    %21 = vector.shape_cast %20 : vector<1x16x256xf32> to vector<16x256xf32>
    %22 = arith.truncf %21 : vector<16x256xf32> to vector<16x256xbf16>
    %cst_15 = arith.constant dense<0.000000e+00> : vector<16x128xf32>
    %23 = tpu.matmul %22, %0, %cst_15 {dimension_numbers = #tpu.dot_dimension_numbers<[1], [0], [0], [1], [0, 0, 1, 1], [], []>} : vector<16x256xbf16>, vector<256x128xbf16>, vector<16x128xf32> -> vector<16x128xf32>
    %24 = vector.broadcast %1 : vector<1x128xf32> to vector<16x128xf32>
    %25 = arith.addf %23, %24 : vector<16x128xf32>
    %cst_16 = arith.constant 0.000000e+00 : f32
    %26 = vector.broadcast %cst_16 : f32 to vector<16x128xf32>
    %27 = arith.maximumf %25, %26 : vector<16x128xf32>
    %28 = arith.truncf %27 : vector<16x128xf32> to vector<16x128xbf16>
    %cst_17 = arith.constant 0.000000e+00 : bf16
    %29 = vector.broadcast %cst_17 : bf16 to vector<1x128xbf16>
    %cst_18 = arith.constant 0.000000e+00 : bf16
    %30 = vector.broadcast %cst_18 : bf16 to vector<8x1x128xbf16>
    %31 = tpu.concatenate %29, %19, %29 in 0 : vector<1x128xbf16>, vector<16x128xbf16>, vector<1x128xbf16> -> vector<18x128xbf16>
    %c0_19 = arith.constant 0 : index
    %c0_20 = arith.constant 0 : index
    %32 = vector.load %arg14[%c0_19, %c0_20] : memref<182x128xbf16, #tpu.memory_space<vmem>>, vector<18x128xbf16>
    tpu.vector_store %arg14[%c0_19, %c0_20], %31 {strides = array<i32>} : memref<182x128xbf16, #tpu.memory_space<vmem>>, vector<18x128xbf16>,
    %33 = vector.shape_cast %10 : vector<128x128xbf16> to vector<8x16x128xbf16>
    %34 = tpu.concatenate %30, %33, %30 in 1 : vector<8x1x128xbf16>, vector<8x16x128xbf16>, vector<8x1x128xbf16> -> vector<8x18x128xbf16>
    %35 = vector.shape_cast %34 : vector<8x18x128xbf16> to vector<144x128xbf16>
    %c18 = arith.constant 18 : index
    %c0_21 = arith.constant 0 : index
    %36 = vector.load %arg14[%c18, %c0_21] : memref<182x128xbf16, #tpu.memory_space<vmem>>, vector<144x128xbf16>
    tpu.vector_store %arg14[%c18, %c0_21], %35 {strides = array<i32>} : memref<182x128xbf16, #tpu.memory_space<vmem>>, vector<144x128xbf16>,
    %37 = tpu.concatenate %29, %28, %29 in 0 : vector<1x128xbf16>, vector<16x128xbf16>, vector<1x128xbf16> -> vector<18x128xbf16>
    %c162 = arith.constant 162 : index
    %c0_22 = arith.constant 0 : index
    %38 = vector.load %arg14[%c162, %c0_22] : memref<182x128xbf16, #tpu.memory_space<vmem>>, vector<18x128xbf16>
    tpu.vector_store %arg14[%c162, %c0_22], %37 {strides = array<i32>} : memref<182x128xbf16, #tpu.memory_space<vmem>>, vector<18x128xbf16>,
    %cst_23 = arith.constant 0.000000e+00 : bf16
    %39 = vector.broadcast %cst_23 : bf16 to vector<2x128xbf16>
    %c180 = arith.constant 180 : index
    %c0_24 = arith.constant 0 : index
    %40 = vector.load %arg14[%c180, %c0_24] : memref<182x128xbf16, #tpu.memory_space<vmem>>, vector<2x128xbf16>
    tpu.vector_store %arg14[%c180, %c0_24], %39 {strides = array<i32>} : memref<182x128xbf16, #tpu.memory_space<vmem>>, vector<2x128xbf16>,
    %c0_i32 = arith.constant 0 : i32
    %41 = arith.cmpi eq, %arg1, %c0_i32 : i32
    %42 = arith.extui %41 : i1 to i32
    %c0_i32_25 = arith.constant 0 : i32
    %43 = arith.cmpi ne, %42, %c0_i32_25 : i32
    scf.if %43 {
      %cst_64 = arith.constant 0.000000e+00 : bf16
      %86 = vector.broadcast %cst_64 : bf16 to vector<18x128xbf16>
      %c0_65 = arith.constant 0 : index
      %c0_66 = arith.constant 0 : index
      %87 = vector.load %arg14[%c0_65, %c0_66] : memref<182x128xbf16, #tpu.memory_space<vmem>>, vector<18x128xbf16>
      tpu.vector_store %arg14[%c0_65, %c0_66], %86 {strides = array<i32>} : memref<182x128xbf16, #tpu.memory_space<vmem>>, vector<18x128xbf16>,
    } else {
    }
    %c1_i32 = arith.constant 1 : i32
    %44 = arith.cmpi eq, %arg1, %c1_i32 : i32
    %45 = arith.extui %44 : i1 to i32
    %c0_i32_26 = arith.constant 0 : i32
    %46 = arith.cmpi ne, %45, %c0_i32_26 : i32
    scf.if %46 {
      %cst_64 = arith.constant 0.000000e+00 : bf16
      %86 = vector.broadcast %cst_64 : bf16 to vector<18x128xbf16>
      %c162_65 = arith.constant 162 : index
      %c0_66 = arith.constant 0 : index
      %87 = vector.load %arg14[%c162_65, %c0_66] : memref<182x128xbf16, #tpu.memory_space<vmem>>, vector<18x128xbf16>
      tpu.vector_store %arg14[%c162_65, %c0_66], %86 {strides = array<i32>} : memref<182x128xbf16, #tpu.memory_space<vmem>>, vector<18x128xbf16>,
    } else {
    }
    %c0_27 = arith.constant 0 : index
    %c0_28 = arith.constant 0 : index
    %47 = vector.load %arg14[%c0_27, %c0_28] : memref<182x128xbf16, #tpu.memory_space<vmem>>, vector<144x128xbf16>
    %c0_29 = arith.constant 0 : index
    %c0_30 = arith.constant 0 : index
    %48 = vector.load %arg15[%c0_29, %c0_30] : memref<144x1152xbf16, #tpu.memory_space<vmem>>, vector<144x128xbf16>
    tpu.vector_store %arg15[%c0_29, %c0_30], %47 {strides = array<i32>} : memref<144x1152xbf16, #tpu.memory_space<vmem>>, vector<144x128xbf16>,
    %c1 = arith.constant 1 : index
    %c0_31 = arith.constant 0 : index
    %49 = vector.load %arg14[%c1, %c0_31] : memref<182x128xbf16, #tpu.memory_space<vmem>>, vector<144x128xbf16>
    %c0_32 = arith.constant 0 : index
    %c128 = arith.constant 128 : index
    %50 = vector.load %arg15[%c0_32, %c128] : memref<144x1152xbf16, #tpu.memory_space<vmem>>, vector<144x128xbf16>
    tpu.vector_store %arg15[%c0_32, %c128], %49 {strides = array<i32>} : memref<144x1152xbf16, #tpu.memory_space<vmem>>, vector<144x128xbf16>,
    %c2 = arith.constant 2 : index
    %c0_33 = arith.constant 0 : index
    %51 = vector.load %arg14[%c2, %c0_33] : memref<182x128xbf16, #tpu.memory_space<vmem>>, vector<144x128xbf16>
    %c0_34 = arith.constant 0 : index
    %c256 = arith.constant 256 : index
    %52 = vector.load %arg15[%c0_34, %c256] : memref<144x1152xbf16, #tpu.memory_space<vmem>>, vector<144x128xbf16>
    tpu.vector_store %arg15[%c0_34, %c256], %51 {strides = array<i32>} : memref<144x1152xbf16, #tpu.memory_space<vmem>>, vector<144x128xbf16>,
    %c18_35 = arith.constant 18 : index
    %c0_36 = arith.constant 0 : index
    %53 = vector.load %arg14[%c18_35, %c0_36] : memref<182x128xbf16, #tpu.memory_space<vmem>>, vector<144x128xbf16>
    %c0_37 = arith.constant 0 : index
    %c384 = arith.constant 384 : index
    %54 = vector.load %arg15[%c0_37, %c384] : memref<144x1152xbf16, #tpu.memory_space<vmem>>, vector<144x128xbf16>
    tpu.vector_store %arg15[%c0_37, %c384], %53 {strides = array<i32>} : memref<144x1152xbf16, #tpu.memory_space<vmem>>, vector<144x128xbf16>,
    %c19 = arith.constant 19 : index
    %c0_38 = arith.constant 0 : index
    %55 = vector.load %arg14[%c19, %c0_38] : memref<182x128xbf16, #tpu.memory_space<vmem>>, vector<144x128xbf16>
    %c0_39 = arith.constant 0 : index
    %c512 = arith.constant 512 : index
    %56 = vector.load %arg15[%c0_39, %c512] : memref<144x1152xbf16, #tpu.memory_space<vmem>>, vector<144x128xbf16>
    tpu.vector_store %arg15[%c0_39, %c512], %55 {strides = array<i32>} : memref<144x1152xbf16, #tpu.memory_space<vmem>>, vector<144x128xbf16>,
    %c20 = arith.constant 20 : index
    %c0_40 = arith.constant 0 : index
    %57 = vector.load %arg14[%c20, %c0_40] : memref<182x128xbf16, #tpu.memory_space<vmem>>, vector<144x128xbf16>
    %c0_41 = arith.constant 0 : index
    %c640 = arith.constant 640 : index
    %58 = vector.load %arg15[%c0_41, %c640] : memref<144x1152xbf16, #tpu.memory_space<vmem>>, vector<144x128xbf16>
    tpu.vector_store %arg15[%c0_41, %c640], %57 {strides = array<i32>} : memref<144x1152xbf16, #tpu.memory_space<vmem>>, vector<144x128xbf16>,
    %c36 = arith.constant 36 : index
    %c0_42 = arith.constant 0 : index
    %59 = vector.load %arg14[%c36, %c0_42] : memref<182x128xbf16, #tpu.memory_space<vmem>>, vector<144x128xbf16>
    %c0_43 = arith.constant 0 : index
    %c768 = arith.constant 768 : index
    %60 = vector.load %arg15[%c0_43, %c768] : memref<144x1152xbf16, #tpu.memory_space<vmem>>, vector<144x128xbf16>
    tpu.vector_store %arg15[%c0_43, %c768], %59 {strides = array<i32>} : memref<144x1152xbf16, #tpu.memory_space<vmem>>, vector<144x128xbf16>,
    %c37 = arith.constant 37 : index
    %c0_44 = arith.constant 0 : index
    %61 = vector.load %arg14[%c37, %c0_44] : memref<182x128xbf16, #tpu.memory_space<vmem>>, vector<144x128xbf16>
    %c0_45 = arith.constant 0 : index
    %c896 = arith.constant 896 : index
    %62 = vector.load %arg15[%c0_45, %c896] : memref<144x1152xbf16, #tpu.memory_space<vmem>>, vector<144x128xbf16>
    tpu.vector_store %arg15[%c0_45, %c896], %61 {strides = array<i32>} : memref<144x1152xbf16, #tpu.memory_space<vmem>>, vector<144x128xbf16>,
    %c38 = arith.constant 38 : index
    %c0_46 = arith.constant 0 : index
    %63 = vector.load %arg14[%c38, %c0_46] : memref<182x128xbf16, #tpu.memory_space<vmem>>, vector<144x128xbf16>
    %c0_47 = arith.constant 0 : index
    %c1024 = arith.constant 1024 : index
    %64 = vector.load %arg15[%c0_47, %c1024] : memref<144x1152xbf16, #tpu.memory_space<vmem>>, vector<144x128xbf16>
    tpu.vector_store %arg15[%c0_47, %c1024], %63 {strides = array<i32>} : memref<144x1152xbf16, #tpu.memory_space<vmem>>, vector<144x128xbf16>,
    %c0_48 = arith.constant 0 : index
    %c0_49 = arith.constant 0 : index
    %65 = vector.load %arg15[%c0_48, %c0_49] : memref<144x1152xbf16, #tpu.memory_space<vmem>>, vector<144x1152xbf16>
    %c0_50 = arith.constant 0 : index
    %c0_51 = arith.constant 0 : index
    %66 = vector.load %arg9[%c0_50, %c0_51] : memref<1152x128xbf16, #tpu.memory_space<vmem>>, vector<1152x128xbf16>
    %cst_52 = arith.constant dense<0.000000e+00> : vector<144x128xf32>
    %67 = tpu.matmul %65, %66, %cst_52 {dimension_numbers = #tpu.dot_dimension_numbers<[1], [0], [0], [1], [0, 0, 1, 1], [], []>} : vector<144x1152xbf16>, vector<1152x128xbf16>, vector<144x128xf32> -> vector<144x128xf32>
    %68 = vector.shape_cast %67 : vector<144x128xf32> to vector<8x18x128xf32>
    %69 = vector.extract_strided_slice %68 {offsets = [0, 0, 0], sizes = [8, 16, 128], strides = [1, 1, 1]} : vector<8x18x128xf32> to vector<8x16x128xf32>
    %70 = vector.shape_cast %69 : vector<8x16x128xf32> to vector<128x128xf32>
    %c0_53 = arith.constant 0 : index
    %c0_54 = arith.constant 0 : index
    %71 = vector.load %arg10[%c0_53, %c0_54] : memref<1x128xf32, #tpu.memory_space<vmem>>, vector<1x128xf32>
    %72 = vector.broadcast %71 : vector<1x128xf32> to vector<128x128xf32>
    %73 = arith.addf %70, %72 : vector<128x128xf32>
    %cst_55 = arith.constant 0.000000e+00 : f32
    %74 = vector.broadcast %cst_55 : f32 to vector<128x128xf32>
    %75 = arith.maximumf %73, %74 : vector<128x128xf32>
    %76 = arith.truncf %75 : vector<128x128xf32> to vector<128x128xbf16>
    %c0_56 = arith.constant 0 : index
    %c0_57 = arith.constant 0 : index
    %77 = vector.load %arg11[%c0_56, %c0_57] : memref<128x256xbf16, #tpu.memory_space<vmem>>, vector<128x256xbf16>
    %cst_58 = arith.constant dense<0.000000e+00> : vector<128x256xf32>
    %78 = tpu.matmul %76, %77, %cst_58 {dimension_numbers = #tpu.dot_dimension_numbers<[1], [0], [0], [1], [0, 0, 1, 1], [], []>} : vector<128x128xbf16>, vector<128x256xbf16>, vector<128x256xf32> -> vector<128x256xf32>
    %c0_59 = arith.constant 0 : index
    %c0_60 = arith.constant 0 : index
    %79 = vector.load %arg12[%c0_59, %c0_60] : memref<1x256xf32, #tpu.memory_space<vmem>>, vector<1x256xf32>
    %80 = vector.broadcast %79 : vector<1x256xf32> to vector<128x256xf32>
    %81 = arith.addf %78, %80 : vector<128x256xf32>
    %82 = arith.addf %81, %3 : vector<128x256xf32>
    %c0_61 = arith.constant 0 : index
    %c0_62 = arith.constant 0 : index
    %c0_63 = arith.constant 0 : index
    %83 = vector.load %arg13[%c0_61, %c0_62, %c0_63] : memref<1x128x256xf32, #tpu.memory_space<vmem>>, vector<1x128x256xf32>
    %84 = vector.shape_cast %83 : vector<1x128x256xf32> to vector<128x256xf32>
    %85 = vector.shape_cast %82 : vector<128x256xf32> to vector<1x128x256xf32>
    tpu.vector_store %arg13[%c0_61, %c0_62, %c0_63], %85 {strides = array<i32>} : memref<1x128x256xf32, #tpu.memory_space<vmem>>, vector<1x128x256xf32>,
    return
  }
  func.func @transform_0(%arg0: i32, %arg1: i32, %arg2: memref<2xi32, #tpu.memory_space<smem>>, %arg3: memref<2xi32, #tpu.memory_space<smem>>) -> (i32, i32, i32) {
    %c0_i32 = arith.constant 0 : i32
    %c0_i32_0 = arith.constant 0 : i32
    return %arg0, %arg1, %c0_i32 : i32, i32, i32
  }
  func.func @transform_1(%arg0: i32, %arg1: i32, %arg2: memref<2xi32, #tpu.memory_space<smem>>, %arg3: memref<2xi32, #tpu.memory_space<smem>>) -> (i32, i32, i32) {
    %0 = arith.index_cast %arg1 : i32 to index
    %1 = memref.load %arg2[%0] : memref<2xi32, #tpu.memory_space<smem>>
    %c0_i32 = arith.constant 0 : i32
    %c0_i32_0 = arith.constant 0 : i32
    return %arg0, %1, %c0_i32 : i32, i32, i32
  }
  func.func @transform_2(%arg0: i32, %arg1: i32, %arg2: memref<2xi32, #tpu.memory_space<smem>>, %arg3: memref<2xi32, #tpu.memory_space<smem>>) -> (i32, i32, i32) {
    %0 = arith.index_cast %arg1 : i32 to index
    %1 = memref.load %arg3[%0] : memref<2xi32, #tpu.memory_space<smem>>
    %c0_i32 = arith.constant 0 : i32
    %c0_i32_0 = arith.constant 0 : i32
    return %arg0, %1, %c0_i32 : i32, i32, i32
  }
  func.func @transform_3(%arg0: i32, %arg1: i32, %arg2: memref<2xi32, #tpu.memory_space<smem>>, %arg3: memref<2xi32, #tpu.memory_space<smem>>) -> (i32, i32) {
    %c0_i32 = arith.constant 0 : i32
    %c0_i32_0 = arith.constant 0 : i32
    %c0_i32_1 = arith.constant 0 : i32
    return %c0_i32, %c0_i32_0 : i32, i32
  }
  func.func @transform_4(%arg0: i32, %arg1: i32, %arg2: memref<2xi32, #tpu.memory_space<smem>>, %arg3: memref<2xi32, #tpu.memory_space<smem>>) -> (i32, i32) {
    %c0_i32 = arith.constant 0 : i32
    %c0_i32_0 = arith.constant 0 : i32
    %c0_i32_1 = arith.constant 0 : i32
    return %c0_i32, %c0_i32_0 : i32, i32
  }
  func.func @transform_5(%arg0: i32, %arg1: i32, %arg2: memref<2xi32, #tpu.memory_space<smem>>, %arg3: memref<2xi32, #tpu.memory_space<smem>>) -> (i32, i32) {
    %c0_i32 = arith.constant 0 : i32
    %c0_i32_0 = arith.constant 0 : i32
    %c0_i32_1 = arith.constant 0 : i32
    return %c0_i32, %c0_i32_0 : i32, i32
  }
  func.func @transform_6(%arg0: i32, %arg1: i32, %arg2: memref<2xi32, #tpu.memory_space<smem>>, %arg3: memref<2xi32, #tpu.memory_space<smem>>) -> (i32, i32) {
    %c0_i32 = arith.constant 0 : i32
    %c0_i32_0 = arith.constant 0 : i32
    %c0_i32_1 = arith.constant 0 : i32
    return %c0_i32, %c0_i32_0 : i32, i32
  }
  func.func @transform_7(%arg0: i32, %arg1: i32, %arg2: memref<2xi32, #tpu.memory_space<smem>>, %arg3: memref<2xi32, #tpu.memory_space<smem>>) -> (i32, i32) {
    %c0_i32 = arith.constant 0 : i32
    %c0_i32_0 = arith.constant 0 : i32
    %c0_i32_1 = arith.constant 0 : i32
    return %c0_i32, %c0_i32_0 : i32, i32
  }
  func.func @transform_8(%arg0: i32, %arg1: i32, %arg2: memref<2xi32, #tpu.memory_space<smem>>, %arg3: memref<2xi32, #tpu.memory_space<smem>>) -> (i32, i32) {
    %c0_i32 = arith.constant 0 : i32
    %c0_i32_0 = arith.constant 0 : i32
    %c0_i32_1 = arith.constant 0 : i32
    return %c0_i32, %c0_i32_0 : i32, i32
  }
  func.func @transform_9(%arg0: i32, %arg1: i32, %arg2: memref<2xi32, #tpu.memory_space<smem>>, %arg3: memref<2xi32, #tpu.memory_space<smem>>) -> (i32, i32, i32) {
    %c0_i32 = arith.constant 0 : i32
    %c0_i32_0 = arith.constant 0 : i32
    return %arg0, %arg1, %c0_i32 : i32, i32, i32
  }
}

</mosaic_0001>

<llo_original>
// kernel: tpu_custom_call.1
$region0: #{tpu_custom_call.1}
  #allocation0 [shape = 'u32[]', space=smem, size = 0x4, offset = 0x4, fixed_abs, tag = 'smem constant byte address 0x4 - core index']
  #allocation1 [shape = 'u32[144,128]{1,0:T(1,128)}', space=vmem, size = 0x12000, scoped, tag = 'internal scratch']
  #allocation2 [shape = 'bf16[182,128]{1,0:T(8,128)(2,1)}', space=vmem, size = 0xb800, scoped, tag = 'scratch operand']
  #allocation3 [shape = 'bf16[144,1152]{1,0:T(16,128)(2,1)}', space=vmem, size = 0x51000, scoped, tag = 'scratch operand']
  #allocation4 [shape = 's32[1]{0}', space=sflag, size = 0x4, scoped, tag = 'scoped memory for tpu_custom_call.1']
  #allocation5 [shape = 'u8[512]{0}', space=smem, size = 0x200, scoped, tag = 'prefetched SMEM operand 0']
  #allocation6 [shape = 'u8[512]{0}', space=smem, size = 0x200, scoped, tag = 'prefetched SMEM operand 1']
  %s0 = inlined_call_operand.hbm [shape: s32[2], index: 0, kind: input, shape index: {}]
  %s1 = inlined_call_operand.vmem [shape: s32[2], index: 1, kind: input, shape index: {}]
  %s2 = inlined_call_operand.hbm [shape: f32[2,256,256], index: 2, kind: input, shape index: {}]
  %s3 = inlined_call_operand.hbm [shape: f32[2,256,256], index: 3, kind: input, shape index: {}]
  %s4 = inlined_call_operand.hbm [shape: f32[2,256,256], index: 4, kind: input, shape index: {}]
  %s5 = inlined_call_operand.hbm [shape: bf16[256,128], index: 5, kind: input, shape index: {}]
  %s6 = inlined_call_operand.vmem [shape: f32[1,128], index: 6, kind: input, shape index: {}]
  %s7 = inlined_call_operand.hbm [shape: bf16[1152,128], index: 7, kind: input, shape index: {}]
  %s8 = inlined_call_operand.vmem [shape: f32[1,128], index: 8, kind: input, shape index: {}]
  %s9 = inlined_call_operand.hbm [shape: bf16[128,256], index: 9, kind: input, shape index: {}]
  %s10 = inlined_call_operand.vmem [shape: f32[1,256], index: 10, kind: input, shape index: {}]
  %s11 = inlined_call_operand.hbm [shape: f32[2,256,256], index: 11, kind: output, shape index: {}]
  %s12 = sld [smem:[#allocation0]]
  $region101: #{tpu_custom_call.1} parent=0
    _
  %s14 = ssub.s32 1, %s12
  %s15 = scalar_select 0, %s14, %s12
  %17 = dma.hbm_to_smem %s0, 16, [#allocation5], [#allocation4]
  %s18 = sshll.u32 %s1, 4
  %s19 = int_to_ptr.vmem [resolvable:$true] %s18
  %21 = dma.vmem_to_smem %s19, 16, [#allocation6], [#allocation4]
  %22 = dma.done [#allocation4], 32
  %23 = sfence
  $region1: #{tpu_custom_call.1} parent=0
    #allocation7 [shape = 'u8[262144]{0}', space=vmem, size = 0x40000, scoped, tag = 'input window, operand 2']
    #allocation8 [shape = 's32[2]{0}', space=sflag, size = 0x8, scoped, tag = 'scoped memory for tpu_custom_call.1']
    #allocation9 [shape = 's32[2]{0}', space=sflag, size = 0x8, scoped, tag = 'scoped memory for tpu_custom_call.1']
    #allocation10 [shape = 'u8[32768]{0}', space=vmem, size = 0x8000, scoped, tag = 'input window, operand 3']
    #allocation11 [shape = 's32[2]{0}', space=sflag, size = 0x8, scoped, tag = 'scoped memory for tpu_custom_call.1']
    #allocation12 [shape = 'u8[32768]{0}', space=vmem, size = 0x8000, scoped, tag = 'input window, operand 4']
    #allocation13 [shape = 'u8[65536]{0}', space=vmem, size = 0x10000, scoped, tag = 'input window, operand 5, single buffered']
    #allocation14 [shape = 's32[1]{0}', space=sflag, size = 0x4, scoped, tag = 'scoped memory for tpu_custom_call.1']
    #allocation15 [shape = 'u8[294912]{0}', space=vmem, size = 0x48000, scoped, tag = 'input window, operand 7, single buffered']
    #allocation16 [shape = 'u8[65536]{0}', space=vmem, size = 0x10000, scoped, tag = 'input window, operand 9, single buffered']
    #allocation17 [shape = 's32[1]{0}', space=sflag, size = 0x4, scoped, tag = 'scoped memory for tpu_custom_call.1']
    #allocation18 [shape = 'u8[262144]{0}', space=vmem, size = 0x40000, scoped, tag = 'output window, operand 0']
    %24 = vsyncpa [#allocation8], 0
    %s25 = scalar_lea.sflag [#allocation8], 1
    %26 = vsyncpa %s25, 0
    %27 = vsyncpa [#allocation11], 0
    %s28 = scalar_lea.sflag [#allocation11], 1
    %29 = vsyncpa %s28, 0
    %30 = vsyncpa [#allocation14], 0
    %31 = vsyncpa [#allocation17], 0
    %32 = vsyncpa [#allocation9], 0
    %s33 = scalar_lea.sflag [#allocation9], 1
    %34 = vsyncpa %s33, 0
    loop: start=0, step=1, limit=6
    $region2: #{tpu_custom_call.1} parent=1 // loop_pre_header
      _
    $region3: #{tpu_custom_call.1} parent=1 // loop_header
      %s36 = sphi 0, %s40
      %p37 = scmp.ge.s32.totalorder %s36, 6
      %s43 = sphi 0, %s55
      %s44 = sphi 0, %s51
      %s45 = sphi 0, %s43
      %s46 = sphi 0, %s44
      %s47 = sphi 0, %s45
      %s48 = sphi 0, %s46
      %s60 = sphi 0, %s62
      %s63 = sphi 0, %s60
      %s64 = sphi 0, %s63
      %s80 = sphi 0, %s64
      %s90 = sphi 0, %s92
      %s93 = sphi 0, %s90
      %s94 = sphi 0, %s93
      %s110 = sphi 0, %s94
      %s120 = sphi 0, %s122
      %s123 = sphi 0, %s120
      %s124 = sphi 0, %s123
      %s140 = sphi 0, %s124
      %s144 = sphi 0, %s144
      %s146 = sphi 0, %s144
      %s147 = sphi 0, %s146
      %s161 = sphi 0, %s147
      %s165 = sphi 0, %s165
      %s167 = sphi 0, %s165
      %s168 = sphi 0, %s167
      %s182 = sphi 0, %s168
      %s186 = sphi 0, %s186
      %s188 = sphi 0, %s186
      %s189 = sphi 0, %s188
      %s203 = sphi 0, %s189
      %s207 = sphi 0, %s207
      %s209 = sphi 0, %s207
      %s210 = sphi 0, %s209
      %s224 = sphi 0, %s210
      %s228 = sphi 0, %s228
      %s230 = sphi 0, %s228
      %s231 = sphi 0, %s230
      %s245 = sphi 0, %s231
      %s249 = sphi 0, %s249
      %s251 = sphi 0, %s249
      %s252 = sphi 0, %s251
      %s266 = sphi 0, %s252
      %s274 = sphi 0, %s276
      %s277 = sphi 0, %s274
      %s278 = sphi 0, %s277
      %s294 = sphi 0, %s278
    $region4: #{tpu_custom_call.1} parent=1 // loop_header_branch
      %39 = sbr.rel (%p37) target = $region8
    $region5: #{tpu_custom_call.1} parent=1 // loop_body
      %s41 = ssub.s32 %s36, 1
      %s42 = ssub.s32 %s36, 2
      %s49 = sadd.s32 1, %s44
      %p50 = scmp.ge.s32.totalorder %s49, 2
      %s51 = scalar_select %p50, 0, %s49
      %s52 = sadd.s32 1, %s43
      %s53 = scalar_select %p50, %s52, %s43
      %p54 = scmp.ge.s32.totalorder %s53, 2
      %s55 = scalar_select %p54, 0, %s53
      %s56 = ssub.s32 %s43, %s55
      %s57 = ssub.s32 %s44, %s51
      %s58 = sor.u32 %s56, %s57
      %p59 = scmp.eq.s32.totalorder %s58, 0
      %s61 = sadd.s32 %s60, 1
      %s62 = scalar_select %p59, %s60, %s61
      %p65 = pneg %p59
      %p66 = scmp.eq.s32.totalorder %s36, 3
      %p67 = por %p65, %p66
      %p68 = scmp.ne.s32.totalorder %s60, %s63
      %p69 = scmp.eq.s32.totalorder %s36, 0
      %p70 = por %p68, %p69
      %p71 = scmp.ne.s32.totalorder %s60, %s63
      %p72 = scmp.eq.s32.totalorder %s41, 3
      %p73 = por %p71, %p72
      %p74 = scmp.ne.s32.totalorder %s63, %s64
      %p75 = scmp.eq.s32.totalorder %s41, 0
      %p76 = por %p74, %p75
      %p77 = scmp.ne.s32.totalorder %s63, %s64
      %p78 = scmp.eq.s32.totalorder %s42, 3
      %p79 = por %p77, %p78
      %p81 = scmp.ne.s32.totalorder %s64, %s80
      %p82 = scmp.eq.s32.totalorder %s42, 0
      %p83 = por %p81, %p82
      %s84 = sld [smem:[#allocation5 + %s44]]
      %s85 = sld [smem:[#allocation5 + %s51]]
      %s86 = ssub.s32 %s43, %s55
      %s87 = ssub.s32 %s84, %s85
      %s88 = sor.u32 %s86, %s87
      %p89 = scmp.eq.s32.totalorder %s88, 0
      %s91 = sadd.s32 %s90, 1
      %s92 = scalar_select %p89, %s90, %s91
      %p95 = pneg %p89
      %p96 = scmp.eq.s32.totalorder %s36, 3
      %p97 = por %p95, %p96
      %p98 = scmp.ne.s32.totalorder %s90, %s93
      %p99 = scmp.eq.s32.totalorder %s36, 0
      %p100 = por %p98, %p99
      %p101 = scmp.ne.s32.totalorder %s90, %s93
      %p102 = scmp.eq.s32.totalorder %s41, 3
      %p103 = por %p101, %p102
      %p104 = scmp.ne.s32.totalorder %s93, %s94
      %p105 = scmp.eq.s32.totalorder %s41, 0
      %p106 = por %p104, %p105
      %p107 = scmp.ne.s32.totalorder %s93, %s94
      %p108 = scmp.eq.s32.totalorder %s42, 3
      %p109 = por %p107, %p108
      %p111 = scmp.ne.s32.totalorder %s94, %s110
      %p112 = scmp.eq.s32.totalorder %s42, 0
      %p113 = por %p111, %p112
      %s114 = sld [smem:[#allocation6 + %s44]]
      %s115 = sld [smem:[#allocation6 + %s51]]
      %s116 = ssub.s32 %s43, %s55
      %s117 = ssub.s32 %s114, %s115
      %s118 = sor.u32 %s116, %s117
      %p119 = scmp.eq.s32.totalorder %s118, 0
      %s121 = sadd.s32 %s120, 1
      %s122 = scalar_select %p119, %s120, %s121
      %p125 = pneg %p119
      %p126 = scmp.eq.s32.totalorder %s36, 3
      %p127 = por %p125, %p126
      %p128 = scmp.ne.s32.totalorder %s120, %s123
      %p129 = scmp.eq.s32.totalorder %s36, 0
      %p130 = por %p128, %p129
      %p131 = scmp.ne.s32.totalorder %s120, %s123
      %p132 = scmp.eq.s32.totalorder %s41, 3
      %p133 = por %p131, %p132
      %p134 = scmp.ne.s32.totalorder %s123, %s124
      %p135 = scmp.eq.s32.totalorder %s41, 0
      %p136 = por %p134, %p135
      %p137 = scmp.ne.s32.totalorder %s123, %s124
      %p138 = scmp.eq.s32.totalorder %s42, 3
      %p139 = por %p137, %p138
      %p141 = scmp.ne.s32.totalorder %s124, %s140
      %p142 = scmp.eq.s32.totalorder %s42, 0
      %p143 = por %p141, %p142
      %s145 = sadd.s32 %s144, 1
      %p148 = scmp.eq.s32.totalorder %s36, 3
      %p149 = scmp.ne.s32.totalorder %s144, %s146
      %p150 = scmp.eq.s32.totalorder %s36, 0
      %p151 = por %p149, %p150
      %p152 = scmp.ne.s32.totalorder %s144, %s146
      %p153 = scmp.eq.s32.totalorder %s41, 3
      %p154 = por %p152, %p153
      %p155 = scmp.ne.s32.totalorder %s146, %s147
      %p156 = scmp.eq.s32.totalorder %s41, 0
      %p157 = por %p155, %p156
      %p158 = scmp.ne.s32.totalorder %s146, %s147
      %p159 = scmp.eq.s32.totalorder %s42, 3
      %p160 = por %p158, %p159
      %p162 = scmp.ne.s32.totalorder %s147, %s161
      %p163 = scmp.eq.s32.totalorder %s42, 0
      %p164 = por %p162, %p163
      %s166 = sadd.s32 %s165, 1
      %p169 = scmp.eq.s32.totalorder %s36, 3
      %p170 = scmp.ne.s32.totalorder %s165, %s167
      %p171 = scmp.eq.s32.totalorder %s36, 0
      %p172 = por %p170, %p171
      %p173 = scmp.ne.s32.totalorder %s165, %s167
      %p174 = scmp.eq.s32.totalorder %s41, 3
      %p175 = por %p173, %p174
      %p176 = scmp.ne.s32.totalorder %s167, %s168
      %p177 = scmp.eq.s32.totalorder %s41, 0
      %p178 = por %p176, %p177
      %p179 = scmp.ne.s32.totalorder %s167, %s168
      %p180 = scmp.eq.s32.totalorder %s42, 3
      %p181 = por %p179, %p180
      %p183 = scmp.ne.s32.totalorder %s168, %s182
      %p184 = scmp.eq.s32.totalorder %s42, 0
      %p185 = por %p183, %p184
      %s187 = sadd.s32 %s186, 1
      %p190 = scmp.eq.s32.totalorder %s36, 3
      %p191 = scmp.ne.s32.totalorder %s186, %s188
      %p192 = scmp.eq.s32.totalorder %s36, 0
      %p193 = por %p191, %p192
      %p194 = scmp.ne.s32.totalorder %s186, %s188
      %p195 = scmp.eq.s32.totalorder %s41, 3
      %p196 = por %p194, %p195
      %p197 = scmp.ne.s32.totalorder %s188, %s189
      %p198 = scmp.eq.s32.totalorder %s41, 0
      %p199 = por %p197, %p198
      %p200 = scmp.ne.s32.totalorder %s188, %s189
      %p201 = scmp.eq.s32.totalorder %s42, 3
      %p202 = por %p200, %p201
      %p204 = scmp.ne.s32.totalorder %s189, %s203
      %p205 = scmp.eq.s32.totalorder %s42, 0
      %p206 = por %p204, %p205
      %s208 = sadd.s32 %s207, 1
      %p211 = scmp.eq.s32.totalorder %s36, 3
      %p212 = scmp.ne.s32.totalorder %s207, %s209
      %p213 = scmp.eq.s32.totalorder %s36, 0
      %p214 = por %p212, %p213
      %p215 = scmp.ne.s32.totalorder %s207, %s209
      %p216 = scmp.eq.s32.totalorder %s41, 3
      %p217 = por %p215, %p216
      %p218 = scmp.ne.s32.totalorder %s209, %s210
      %p219 = scmp.eq.s32.totalorder %s41, 0
      %p220 = por %p218, %p219
      %p221 = scmp.ne.s32.totalorder %s209, %s210
      %p222 = scmp.eq.s32.totalorder %s42, 3
      %p223 = por %p221, %p222
      %p225 = scmp.ne.s32.totalorder %s210, %s224
      %p226 = scmp.eq.s32.totalorder %s42, 0
      %p227 = por %p225, %p226
      %s229 = sadd.s32 %s228, 1
      %p232 = scmp.eq.s32.totalorder %s36, 3
      %p233 = scmp.ne.s32.totalorder %s228, %s230
      %p234 = scmp.eq.s32.totalorder %s36, 0
      %p235 = por %p233, %p234
      %p236 = scmp.ne.s32.totalorder %s228, %s230
      %p237 = scmp.eq.s32.totalorder %s41, 3
      %p238 = por %p236, %p237
      %p239 = scmp.ne.s32.totalorder %s230, %s231
      %p240 = scmp.eq.s32.totalorder %s41, 0
      %p241 = por %p239, %p240
      %p242 = scmp.ne.s32.totalorder %s230, %s231
      %p243 = scmp.eq.s32.totalorder %s42, 3
      %p244 = por %p242, %p243
      %p246 = scmp.ne.s32.totalorder %s231, %s245
      %p247 = scmp.eq.s32.totalorder %s42, 0
      %p248 = por %p246, %p247
      %s250 = sadd.s32 %s249, 1
      %p253 = scmp.eq.s32.totalorder %s36, 3
      %p254 = scmp.ne.s32.totalorder %s249, %s251
      %p255 = scmp.eq.s32.totalorder %s36, 0
      %p256 = por %p254, %p255
      %p257 = scmp.ne.s32.totalorder %s249, %s251
      %p258 = scmp.eq.s32.totalorder %s41, 3
      %p259 = por %p257, %p258
      %p260 = scmp.ne.s32.totalorder %s251, %s252
      %p261 = scmp.eq.s32.totalorder %s41, 0
      %p262 = por %p260, %p261
      %p263 = scmp.ne.s32.totalorder %s251, %s252
      %p264 = scmp.eq.s32.totalorder %s42, 3
      %p265 = por %p263, %p264
      %p267 = scmp.ne.s32.totalorder %s252, %s266
      %p268 = scmp.eq.s32.totalorder %s42, 0
      %p269 = por %p267, %p268
      %s270 = ssub.s32 %s43, %s55
      %s271 = ssub.s32 %s44, %s51
      %s272 = sor.u32 %s270, %s271
      %p273 = scmp.eq.s32.totalorder %s272, 0
      %s275 = sadd.s32 %s274, 1
      %s276 = scalar_select %p273, %s274, %s275
      %p279 = pneg %p273
      %p280 = scmp.eq.s32.totalorder %s36, 3
      %p281 = por %p279, %p280
      %p282 = scmp.ne.s32.totalorder %s274, %s277
      %p283 = scmp.eq.s32.totalorder %s36, 0
      %p284 = por %p282, %p283
      %p285 = scmp.ne.s32.totalorder %s274, %s277
      %p286 = scmp.eq.s32.totalorder %s41, 3
      %p287 = por %p285, %p286
      %p288 = scmp.ne.s32.totalorder %s277, %s278
      %p289 = scmp.eq.s32.totalorder %s41, 0
      %p290 = por %p288, %p289
      %p291 = scmp.ne.s32.totalorder %s277, %s278
      %p292 = scmp.eq.s32.totalorder %s42, 3
      %p293 = por %p291, %p292
      %p295 = scmp.ne.s32.totalorder %s278, %s294
      %p296 = scmp.eq.s32.totalorder %s42, 0
      %p297 = por %p295, %p296
      %p298 = scmp.le.s32.totalorder 1, %s36
      %p299 = scmp.lt.s32.totalorder %s36, 5
      %p300 = pnand %p298, %p299
      %p301 = pneg %p300
      // Predicated region
      $region9: #{tpu_custom_call.1} parent=5 // pred_check
        _
      $region10: #{tpu_custom_call.1} parent=5 // pred_check_branch
        %303 = sbr.rel (%p300) target = $region12
      $region11: #{tpu_custom_call.1} parent=5 // pred_region
        %s304 = ssub.s32 %s36, 1
        // Predicated region
        $region13: #{tpu_custom_call.1} parent=11 // pred_check
          %p305 = pneg %p157
        $region14: #{tpu_custom_call.1} parent=11 // pred_check_branch
          %307 = sbr.rel (%p305) target = $region16
        $region15: #{tpu_custom_call.1} parent=11 // pred_region
          %s309 = ssub.s32 2048, 2048
          %310 = vsyncadd [#allocation14], %s309
          %s311 = sshll.u32 [#allocation13], 4
          %s312 = int_to_ptr.vmem [resolvable:$true] %s311
          %317 = dma.hbm_to_vmem [thread:$0]  %s5, 2048, %s312, [#allocation14], 64, 64, 4
        $region16: #{tpu_custom_call.1} parent=11 // pred_fallthru
          _
        // Predicated region
        $region17: #{tpu_custom_call.1} parent=11 // pred_check
          %p318 = pneg %p178
        $region18: #{tpu_custom_call.1} parent=11 // pred_check_branch
          %320 = sbr.rel (%p318) target = $region20
        $region19: #{tpu_custom_call.1} parent=11 // pred_region
          _
        $region20: #{tpu_custom_call.1} parent=11 // pred_fallthru
          _
        // Predicated region
        $region21: #{tpu_custom_call.1} parent=11 // pred_check
          %p321 = pneg %p199
        $region22: #{tpu_custom_call.1} parent=11 // pred_check_branch
          %323 = sbr.rel (%p321) target = $region24
        $region23: #{tpu_custom_call.1} parent=11 // pred_region
          %s325 = ssub.s32 9216, 9216
          %326 = vsyncadd [#allocation14], %s325
          %s327 = sshll.u32 [#allocation15], 4
          %s328 = int_to_ptr.vmem [resolvable:$true] %s327
          %333 = dma.hbm_to_vmem [thread:$0]  %s7, 9216, %s328, [#allocation14], 64, 64, 4
        $region24: #{tpu_custom_call.1} parent=11 // pred_fallthru
          _
        // Predicated region
        $region25: #{tpu_custom_call.1} parent=11 // pred_check
          %p334 = pneg %p220
        $region26: #{tpu_custom_call.1} parent=11 // pred_check_branch
          %336 = sbr.rel (%p334) target = $region28
        $region27: #{tpu_custom_call.1} parent=11 // pred_region
          _
        $region28: #{tpu_custom_call.1} parent=11 // pred_fallthru
          _
        // Predicated region
        $region29: #{tpu_custom_call.1} parent=11 // pred_check
          %p337 = pneg %p241
        $region30: #{tpu_custom_call.1} parent=11 // pred_check_branch
          %339 = sbr.rel (%p337) target = $region32
        $region31: #{tpu_custom_call.1} parent=11 // pred_region
          %s341 = ssub.s32 2048, 2048
          %342 = vsyncadd [#allocation17], %s341
          %s343 = sshll.u32 [#allocation16], 4
          %s344 = int_to_ptr.vmem [resolvable:$true] %s343
          %349 = dma.hbm_to_vmem [thread:$0]  %s9, 2048, %s344, [#allocation17], 128, 128, 8
        $region32: #{tpu_custom_call.1} parent=11 // pred_fallthru
          _
        // Predicated region
        $region33: #{tpu_custom_call.1} parent=11 // pred_check
          %p350 = pneg %p262
        $region34: #{tpu_custom_call.1} parent=11 // pred_check_branch
          %352 = sbr.rel (%p350) target = $region36
        $region35: #{tpu_custom_call.1} parent=11 // pred_region
          _
        $region36: #{tpu_custom_call.1} parent=11 // pred_fallthru
          _
      $region12: #{tpu_custom_call.1} parent=5 // pred_fallthru
        _
      %p353 = scmp.lt.s32.totalorder %s36, 4
      // Predicated region
      $region37: #{tpu_custom_call.1} parent=5 // pred_check
        %p354 = pneg %p353
      $region38: #{tpu_custom_call.1} parent=5 // pred_check_branch
        %356 = sbr.rel (%p354) target = $region40
      $region39: #{tpu_custom_call.1} parent=5 // pred_region
        // Predicated region
        $region41: #{tpu_custom_call.1} parent=39 // pred_check
          %p357 = pneg %p70
        $region42: #{tpu_custom_call.1} parent=39 // pred_check_branch
          %359 = sbr.rel (%p357) target = $region44
        $region43: #{tpu_custom_call.1} parent=39 // pred_region
          %s360 = sand.u32 %s60, 1
          %s361 = scalar_lea.sflag [#allocation8], %s360
          %s362 = sand.u32 %s60, 1
          %s363 = smul.addr %s362, 256
          %s364 = scalar_lea.vmem [#allocation7], %s363
          %s365 = smul.u32 16, %s44
          %s367 = ssub.s32 4096, 4096
          %368 = vsyncadd %s361, %s367
          %s369 = smul.addr %s365, 2
          %s370 = smul.addr %s43, 64
          %s371 = sadd.s32 %s369, %s370
          %s372 = smul.addr %s371, 128
          %s373 = scalar_lea.hbm %s2, %s372
          %s374 = sshll.u32 %s364, 4
          %s375 = int_to_ptr.vmem [resolvable:$true] %s374
          %380 = dma.hbm_to_vmem [thread:$0]  %s373, 4096, %s375, %s361, 256, 256, 16
        $region44: #{tpu_custom_call.1} parent=39 // pred_fallthru
          _
        // Predicated region
        $region45: #{tpu_custom_call.1} parent=39 // pred_check
          %p381 = pneg %p100
        $region46: #{tpu_custom_call.1} parent=39 // pred_check_branch
          %383 = sbr.rel (%p381) target = $region48
        $region47: #{tpu_custom_call.1} parent=39 // pred_region
          %s384 = sand.u32 %s36, 1
          %s385 = scalar_lea.sflag [#allocation11], %s384
          %s386 = sand.u32 %s90, 1
          %s387 = smul.addr %s386, 32
          %s388 = scalar_lea.vmem [#allocation10], %s387
          %s389 = sld [smem:[#allocation5 + %s44]]
          %s390 = smul.u32 2, %s389
          %s392 = ssub.s32 512, 512
          %393 = vsyncadd %s385, %s392
          %s394 = smul.addr %s390, 2
          %s395 = smul.addr %s43, 64
          %s396 = sadd.s32 %s394, %s395
          %s397 = smul.addr %s396, 128
          %s398 = scalar_lea.hbm %s3, %s397
          %s399 = sshll.u32 %s388, 4
          %s400 = int_to_ptr.vmem [resolvable:$true] %s399
          %405 = dma.hbm_to_vmem [thread:$0]  %s398, 512, %s400, %s385, 256, 256, 16
        $region48: #{tpu_custom_call.1} parent=39 // pred_fallthru
          _
        // Predicated region
        $region49: #{tpu_custom_call.1} parent=39 // pred_check
          %p406 = pneg %p130
        $region50: #{tpu_custom_call.1} parent=39 // pred_check_branch
          %408 = sbr.rel (%p406) target = $region52
        $region51: #{tpu_custom_call.1} parent=39 // pred_region
          %s409 = sand.u32 %s36, 1
          %s410 = scalar_lea.sflag [#allocation11], %s409
          %s411 = sand.u32 %s120, 1
          %s412 = smul.addr %s411, 32
          %s413 = scalar_lea.vmem [#allocation12], %s412
          %s414 = sld [smem:[#allocation6 + %s44]]
          %s415 = smul.u32 2, %s414
          %s417 = ssub.s32 512, 512
          %418 = vsyncadd %s410, %s417
          %s419 = smul.addr %s415, 2
          %s420 = smul.addr %s43, 64
          %s421 = sadd.s32 %s419, %s420
          %s422 = smul.addr %s421, 128
          %s423 = scalar_lea.hbm %s4, %s422
          %s424 = sshll.u32 %s413, 4
          %s425 = int_to_ptr.vmem [resolvable:$true] %s424
          %430 = dma.hbm_to_vmem [thread:$0]  %s423, 512, %s425, %s410, 256, 256, 16
        $region52: #{tpu_custom_call.1} parent=39 // pred_fallthru
          _
      $region40: #{tpu_custom_call.1} parent=5 // pred_fallthru
        _
      %p431 = scmp.le.s32.totalorder 1, %s36
      %p432 = scmp.lt.s32.totalorder %s36, 5
      %p433 = pnand %p431, %p432
      %p434 = pneg %p433
      // Predicated region
      $region53: #{tpu_custom_call.1} parent=5 // pred_check
        _
      $region54: #{tpu_custom_call.1} parent=5 // pred_check_branch
        %436 = sbr.rel (%p433) target = $region56
      $region55: #{tpu_custom_call.1} parent=5 // pred_region
        %s437 = ssub.s32 %s36, 1
        %s438 = sand.u32 %s63, 1
        %s439 = scalar_lea.sflag [#allocation8], %s438
        %s440 = sand.u32 %s63, 1
        %s441 = smul.addr %s440, 256
        %s442 = scalar_lea.vmem [#allocation7], %s441
        // Predicated region
        $region57: #{tpu_custom_call.1} parent=55 // pred_check
          %p443 = pneg %p76
        $region58: #{tpu_custom_call.1} parent=55 // pred_check_branch
          %445 = sbr.rel (%p443) target = $region60
        $region59: #{tpu_custom_call.1} parent=55 // pred_region
          %446 = dma.done %s439, 4096
        $region60: #{tpu_custom_call.1} parent=55 // pred_fallthru
          _
        %s447 = sand.u32 %s41, 1
        %s448 = scalar_lea.sflag [#allocation11], %s447
        %s449 = sand.u32 %s93, 1
        %s450 = smul.addr %s449, 32
        %s451 = scalar_lea.vmem [#allocation10], %s450
        // Predicated region
        $region61: #{tpu_custom_call.1} parent=55 // pred_check
          %p452 = pneg %p106
        $region62: #{tpu_custom_call.1} parent=55 // pred_check_branch
          %454 = sbr.rel (%p452) target = $region64
        $region63: #{tpu_custom_call.1} parent=55 // pred_region
          %455 = dma.done %s448, 512
        $region64: #{tpu_custom_call.1} parent=55 // pred_fallthru
          _
        %s456 = sand.u32 %s41, 1
        %s457 = scalar_lea.sflag [#allocation11], %s456
        %s458 = sand.u32 %s123, 1
        %s459 = smul.addr %s458, 32
        %s460 = scalar_lea.vmem [#allocation12], %s459
        // Predicated region
        $region65: #{tpu_custom_call.1} parent=55 // pred_check
          %p461 = pneg %p136
        $region66: #{tpu_custom_call.1} parent=55 // pred_check_branch
          %463 = sbr.rel (%p461) target = $region68
        $region67: #{tpu_custom_call.1} parent=55 // pred_region
          %464 = dma.done %s457, 512
        $region68: #{tpu_custom_call.1} parent=55 // pred_fallthru
          _
        // Predicated region
        $region69: #{tpu_custom_call.1} parent=55 // pred_check
          %p465 = pneg %p157
        $region70: #{tpu_custom_call.1} parent=55 // pred_check_branch
          %467 = sbr.rel (%p465) target = $region72
        $region71: #{tpu_custom_call.1} parent=55 // pred_region
          %468 = dma.done [#allocation14], 2048
        $region72: #{tpu_custom_call.1} parent=55 // pred_fallthru
          _
        // Predicated region
        $region73: #{tpu_custom_call.1} parent=55 // pred_check
          %p469 = pneg %p199
        $region74: #{tpu_custom_call.1} parent=55 // pred_check_branch
          %471 = sbr.rel (%p469) target = $region76
        $region75: #{tpu_custom_call.1} parent=55 // pred_region
          %472 = dma.done [#allocation14], 9216
        $region76: #{tpu_custom_call.1} parent=55 // pred_fallthru
          _
        // Predicated region
        $region77: #{tpu_custom_call.1} parent=55 // pred_check
          %p473 = pneg %p241
        $region78: #{tpu_custom_call.1} parent=55 // pred_check_branch
          %475 = sbr.rel (%p473) target = $region80
        $region79: #{tpu_custom_call.1} parent=55 // pred_region
          %476 = dma.done [#allocation17], 2048
        $region80: #{tpu_custom_call.1} parent=55 // pred_fallthru
          _
        %s477 = sand.u32 %s63, 1
        %s478 = scalar_lea.sflag [#allocation8], %s477
        %s479 = sand.u32 %s63, 1
        %s480 = smul.addr %s479, 256
        %s481 = scalar_lea.vmem [#allocation7], %s480
        %p482 = pneg %p76
        %p483 = pneg %p73
        %s484 = sand.u32 %s41, 1
        %s485 = scalar_lea.sflag [#allocation11], %s484
        %s486 = sand.u32 %s93, 1
        %s487 = smul.addr %s486, 32
        %s488 = scalar_lea.vmem [#allocation10], %s487
        %p489 = pneg %p106
        %p490 = pneg %p103
        %s491 = sand.u32 %s41, 1
        %s492 = scalar_lea.sflag [#allocation11], %s491
        %s493 = sand.u32 %s123, 1
        %s494 = smul.addr %s493, 32
        %s495 = scalar_lea.vmem [#allocation12], %s494
        %p496 = pneg %p136
        %p497 = pneg %p133
        %p498 = pneg %p157
        %p499 = pneg %p154
        %p500 = pneg %p178
        %p501 = pneg %p175
        %p502 = pneg %p199
        %p503 = pneg %p196
        %p504 = pneg %p220
        %p505 = pneg %p217
        %p506 = pneg %p241
        %p507 = pneg %p238
        %p508 = pneg %p262
        %p509 = pneg %p259
        %p510 = pneg %p290
        %p511 = pneg %p287
        %s512 = sand.u32 %s277, 1
        %s513 = scalar_lea.sflag [#allocation9], %s512
        %s514 = sand.u32 %s277, 1
        %s515 = smul.addr %s514, 256
        %s516 = scalar_lea.vmem [#allocation18], %s515
        %s517 = smul.u32 16, %s46
        %s518 = sld [smem:[#allocation5 + %s46]]
        %s519 = smul.u32 2, %s518
        %s520 = sld [smem:[#allocation6 + %s46]]
        %s521 = smul.u32 2, %s520
        %s522 = smul.u32 16, %s46
        %v524 = vld [vmem:[#allocation13] sm:$0xf]
        %v525 = vld [vmem:[#allocation13 + $0x4] sm:$0xf]
        %v526 = vld [vmem:[#allocation13 + $0x8] sm:$0xf]
        %v527 = vld [vmem:[#allocation13 + $0xc] sm:$0xf]
        %v528 = vld [vmem:[#allocation13 + $0x10] sm:$0xf]
        %v529 = vld [vmem:[#allocation13 + $0x14] sm:$0xf]
        %v530 = vld [vmem:[#allocation13 + $0x18] sm:$0xf]
        %v531 = vld [vmem:[#allocation13 + $0x1c] sm:$0xf]
        %v532 = vld [vmem:[#allocation13 + $0x20] sm:$0xf]
        %v533 = vld [vmem:[#allocation13 + $0x24] sm:$0xf]
        %v534 = vld [vmem:[#allocation13 + $0x28] sm:$0xf]
        %v535 = vld [vmem:[#allocation13 + $0x2c] sm:$0xf]
        %v536 = vld [vmem:[#allocation13 + $0x30] sm:$0xf]
        %v537 = vld [vmem:[#allocation13 + $0x34] sm:$0xf]
        %v538 = vld [vmem:[#allocation13 + $0x38] sm:$0xf]
        %v539 = vld [vmem:[#allocation13 + $0x3c] sm:$0xf]
        %v540 = vld [vmem:[#allocation13 + $0x40] sm:$0xf]
        %v541 = vld [vmem:[#allocation13 + $0x44] sm:$0xf]
        %v542 = vld [vmem:[#allocation13 + $0x48] sm:$0xf]
        %v543 = vld [vmem:[#allocation13 + $0x4c] sm:$0xf]
        %v544 = vld [vmem:[#allocation13 + $0x50] sm:$0xf]
        %v545 = vld [vmem:[#allocation13 + $0x54] sm:$0xf]
        %v546 = vld [vmem:[#allocation13 + $0x58] sm:$0xf]
        %v547 = vld [vmem:[#allocation13 + $0x5c] sm:$0xf]
        %v548 = vld [vmem:[#allocation13 + $0x60] sm:$0xf]
        %v549 = vld [vmem:[#allocation13 + $0x64] sm:$0xf]
        %v550 = vld [vmem:[#allocation13 + $0x68] sm:$0xf]
        %v551 = vld [vmem:[#allocation13 + $0x6c] sm:$0xf]
        %v552 = vld [vmem:[#allocation13 + $0x70] sm:$0xf]
        %v553 = vld [vmem:[#allocation13 + $0x74] sm:$0xf]
        %v554 = vld [vmem:[#allocation13 + $0x78] sm:$0xf]
        %v555 = vld [vmem:[#allocation13 + $0x7c] sm:$0xf]
        %v556 = vld [vmem:[%s6] sm:$0x1]
        %v557 = vld [vmem:[%s442] sm:$0xff]
        %v558 = vld [vmem:[%s442 + $0x8] sm:$0xff]
        %v559 = vld [vmem:[%s442 + $0x10] sm:$0xff]
        %v560 = vld [vmem:[%s442 + $0x18] sm:$0xff]
        %v561 = vld [vmem:[%s442 + $0x20] sm:$0xff]
        %v562 = vld [vmem:[%s442 + $0x28] sm:$0xff]
        %v563 = vld [vmem:[%s442 + $0x30] sm:$0xff]
        %v564 = vld [vmem:[%s442 + $0x38] sm:$0xff]
        %v565 = vld [vmem:[%s442 + $0x40] sm:$0xff]
        %v566 = vld [vmem:[%s442 + $0x48] sm:$0xff]
        %v567 = vld [vmem:[%s442 + $0x50] sm:$0xff]
        %v568 = vld [vmem:[%s442 + $0x58] sm:$0xff]
        %v569 = vld [vmem:[%s442 + $0x60] sm:$0xff]
        %v570 = vld [vmem:[%s442 + $0x68] sm:$0xff]
        %v571 = vld [vmem:[%s442 + $0x70] sm:$0xff]
        %v572 = vld [vmem:[%s442 + $0x78] sm:$0xff]
        %v573 = vld [vmem:[%s442 + $0x80] sm:$0xff]
        %v574 = vld [vmem:[%s442 + $0x88] sm:$0xff]
        %v575 = vld [vmem:[%s442 + $0x90] sm:$0xff]
        %v576 = vld [vmem:[%s442 + $0x98] sm:$0xff]
        %v577 = vld [vmem:[%s442 + $0xa0] sm:$0xff]
        %v578 = vld [vmem:[%s442 + $0xa8] sm:$0xff]
        %v579 = vld [vmem:[%s442 + $0xb0] sm:$0xff]
        %v580 = vld [vmem:[%s442 + $0xb8] sm:$0xff]
        %v581 = vld [vmem:[%s442 + $0xc0] sm:$0xff]
        %v582 = vld [vmem:[%s442 + $0xc8] sm:$0xff]
        %v583 = vld [vmem:[%s442 + $0xd0] sm:$0xff]
        %v584 = vld [vmem:[%s442 + $0xd8] sm:$0xff]
        %v585 = vld [vmem:[%s442 + $0xe0] sm:$0xff]
        %v586 = vld [vmem:[%s442 + $0xe8] sm:$0xff]
        %v587 = vld [vmem:[%s442 + $0xf0] sm:$0xff]
        %v588 = vld [vmem:[%s442 + $0xf8] sm:$0xff]
        %v589 = vpack.c.bf16 %v559, %v557
        %v590 = vpack.c.bf16 %v560, %v558
        %v591 = vpack.c.bf16 %v563, %v561
        %v592 = vpack.c.bf16 %v564, %v562
        %v593 = vpack.c.bf16 %v567, %v565
        %v594 = vpack.c.bf16 %v568, %v566
        %v595 = vpack.c.bf16 %v571, %v569
        %v596 = vpack.c.bf16 %v572, %v570
        %v597 = vpack.c.bf16 %v575, %v573
        %v598 = vpack.c.bf16 %v576, %v574
        %v599 = vpack.c.bf16 %v579, %v577
        %v600 = vpack.c.bf16 %v580, %v578
        %v601 = vpack.c.bf16 %v583, %v581
        %v602 = vpack.c.bf16 %v584, %v582
        %v603 = vpack.c.bf16 %v587, %v585
        %v604 = vpack.c.bf16 %v588, %v586
        %v606 = vlaneseq
        %v607 = vshrl.u32 %v606, 7
        %v608 = vsub.s32 0, %v607
        %v609 = vrot.slane %v556, %v608
        %v643 = vunpack.c.l.b16 %v524
        %v644 = vunpack.c.l.b16 %v525
        %v645 = vunpack.c.l.b16 %v526
        %v646 = vunpack.c.l.b16 %v527
        %v647 = vunpack.c.l.b16 %v528
        %v648 = vunpack.c.l.b16 %v529
        %v649 = vunpack.c.l.b16 %v530
        %v650 = vunpack.c.l.b16 %v531
        %v651 = vunpack.c.l.b16 %v532
        %v652 = vunpack.c.l.b16 %v533
        %v653 = vunpack.c.l.b16 %v534
        %v654 = vunpack.c.l.b16 %v535
        %v655 = vunpack.c.l.b16 %v536
        %v656 = vunpack.c.l.b16 %v537
        %v657 = vunpack.c.l.b16 %v538
        %v658 = vunpack.c.l.b16 %v539
        %v659 = vunpack.c.l.b16 %v540
        %v660 = vunpack.c.l.b16 %v541
        %v661 = vunpack.c.l.b16 %v542
        %v662 = vunpack.c.l.b16 %v543
        %v663 = vunpack.c.l.b16 %v544
        %v664 = vunpack.c.l.b16 %v545
        %v665 = vunpack.c.l.b16 %v546
        %v666 = vunpack.c.l.b16 %v547
        %v667 = vunpack.c.l.b16 %v548
        %v668 = vunpack.c.l.b16 %v549
        %v669 = vunpack.c.l.b16 %v550
        %v670 = vunpack.c.l.b16 %v551
        %v671 = vunpack.c.l.b16 %v552
        %v672 = vunpack.c.l.b16 %v553
        %v673 = vunpack.c.l.b16 %v554
        %v674 = vunpack.c.l.b16 %v555
        %v675 = vpack.c.b16 %v644, %v643
        %v676 = vpack.c.b16 %v646, %v645
        %v677 = vpack.c.b16 %v648, %v647
        %v678 = vpack.c.b16 %v650, %v649
        %v679 = vpack.c.b16 %v652, %v651
        %v680 = vpack.c.b16 %v654, %v653
        %v681 = vpack.c.b16 %v656, %v655
        %v682 = vpack.c.b16 %v658, %v657
        %v683 = vpack.c.b16 %v660, %v659
        %v684 = vpack.c.b16 %v662, %v661
        %v685 = vpack.c.b16 %v664, %v663
        %v686 = vpack.c.b16 %v666, %v665
        %v687 = vpack.c.b16 %v668, %v667
        %v688 = vpack.c.b16 %v670, %v669
        %v689 = vpack.c.b16 %v672, %v671
        %v690 = vpack.c.b16 %v674, %v673
        %707 = vmatprep.subr.bf16.mxu0 0
        %708 = vmatpush1.bf16.msra.mxu0 %v675
        %709 = vmatprep.subr.bf16.mxu0 0
        %710 = vmatpush1.bf16.msra.mxu0 %v676
        %711 = vmatprep.subr.bf16.mxu0 0
        %712 = vmatpush1.bf16.msra.mxu0 %v677
        %713 = vmatprep.subr.bf16.mxu0 0
        %714 = vmatpush1.bf16.msra.mxu0 %v678
        %715 = vmatprep.subr.bf16.mxu0 0
        %716 = vmatpush1.bf16.msra.mxu0 %v679
        %717 = vmatprep.subr.bf16.mxu0 0
        %718 = vmatpush1.bf16.msra.mxu0 %v680
        %719 = vmatprep.subr.bf16.mxu0 0
        %720 = vmatpush1.bf16.msra.mxu0 %v681
        %721 = vmatprep.subr.bf16.mxu0 0
        %722 = vmatpush1.bf16.msra.mxu0 %v682
        %723 = vmatprep.subr.bf16.mxu0 0
        %724 = vmatpush1.bf16.msra.mxu0 %v683
        %725 = vmatprep.subr.bf16.mxu0 0
        %726 = vmatpush1.bf16.msra.mxu0 %v684
        %727 = vmatprep.subr.bf16.mxu0 0
        %728 = vmatpush1.bf16.msra.mxu0 %v685
        %729 = vmatprep.subr.bf16.mxu0 0
        %730 = vmatpush1.bf16.msra.mxu0 %v686
        %731 = vmatprep.subr.bf16.mxu0 0
        %732 = vmatpush1.bf16.msra.mxu0 %v687
        %733 = vmatprep.subr.bf16.mxu0 0
        %734 = vmatpush1.bf16.msra.mxu0 %v688
        %735 = vmatprep.subr.bf16.mxu0 0
        %736 = vmatpush1.bf16.msra.mxu0 %v689
        %737 = vmatprep.subr.bf16.mxu0 0
        %738 = vmatpush1.bf16.msra.mxu0 %v690
        %739 = vmatprep.mubr.bf16.mxu0 %v590
        %740 = vmatmul.mubr.bf16.gmra.mrb[0].mxu0 %v589
        %v741 = vpop.f32.mrb[0].mxu0
        %v742 = vadd.f32 %v609, %v741
        %v743 = vpop.f32.mrb[0].mxu0
        %v744 = vpop.f32.mrb[0].mxu0
        %v745 = vadd.f32 %v609, %v744
        %v746 = vpop.f32.mrb[0].mxu0
        %747 = vmatprep.mubr.bf16.mxu0 %v592
        %748 = vmatmul.mubr.bf16.gmra.mrb[0].mxu0 %v591
        %v749 = vpop.f32.mrb[0].mxu0
        %v750 = vadd.f32 %v609, %v749
        %v751 = vpop.f32.mrb[0].mxu0
        %v752 = vpop.f32.mrb[0].mxu0
        %v753 = vadd.f32 %v609, %v752
        %v754 = vpop.f32.mrb[0].mxu0
        %755 = vmatprep.mubr.bf16.mxu0 %v594
        %756 = vmatmul.mubr.bf16.gmra.mrb[0].mxu0 %v593
        %v757 = vpop.f32.mrb[0].mxu0
        %v758 = vadd.f32 %v609, %v757
        %v759 = vpop.f32.mrb[0].mxu0
        %v760 = vpop.f32.mrb[0].mxu0
        %v761 = vadd.f32 %v609, %v760
        %v762 = vpop.f32.mrb[0].mxu0
        %763 = vmatprep.mubr.bf16.mxu0 %v596
        %764 = vmatmul.mubr.bf16.gmra.mrb[0].mxu0 %v595
        %v765 = vpop.f32.mrb[0].mxu0
        %v766 = vadd.f32 %v609, %v765
        %v767 = vpop.f32.mrb[0].mxu0
        %v768 = vpop.f32.mrb[0].mxu0
        %v769 = vadd.f32 %v609, %v768
        %v770 = vpop.f32.mrb[0].mxu0
        %771 = vmatprep.mubr.bf16.mxu0 %v598
        %772 = vmatmul.mubr.bf16.gmra.mrb[0].mxu0 %v597
        %v773 = vpop.f32.mrb[0].mxu0
        %v774 = vadd.f32 %v609, %v773
        %v775 = vpop.f32.mrb[0].mxu0
        %v776 = vpop.f32.mrb[0].mxu0
        %v777 = vadd.f32 %v609, %v776
        %v778 = vpop.f32.mrb[0].mxu0
        %779 = vmatprep.mubr.bf16.mxu0 %v600
        %780 = vmatmul.mubr.bf16.gmra.mrb[0].mxu0 %v599
        %v781 = vpop.f32.mrb[0].mxu0
        %v782 = vadd.f32 %v609, %v781
        %v783 = vpop.f32.mrb[0].mxu0
        %v784 = vpop.f32.mrb[0].mxu0
        %v785 = vadd.f32 %v609, %v784
        %v786 = vpop.f32.mrb[0].mxu0
        %787 = vmatprep.mubr.bf16.mxu0 %v602
        %788 = vmatmul.mubr.bf16.gmra.mrb[0].mxu0 %v601
        %v789 = vpop.f32.mrb[0].mxu0
        %v790 = vadd.f32 %v609, %v789
        %v791 = vpop.f32.mrb[0].mxu0
        %v792 = vpop.f32.mrb[0].mxu0
        %v793 = vadd.f32 %v609, %v792
        %v794 = vpop.f32.mrb[0].mxu0
        %795 = vmatprep.mubr.bf16.mxu0 %v604
        %796 = vmatmul.mubr.bf16.gmra.mrb[0].mxu0 %v603
        %v797 = vpop.f32.mrb[0].mxu0
        %v798 = vadd.f32 %v609, %v797
        %v799 = vpop.f32.mrb[0].mxu0
        %v800 = vpop.f32.mrb[0].mxu0
        %v801 = vadd.f32 %v609, %v800
        %v802 = vpop.f32.mrb[0].mxu0
        %803 = vdwg.mxu0
        %v804 = vmax.f32 %v742, 0.0
        %v805 = vmax.f32 %v745, 0.0
        %v806 = vmax.f32 %v750, 0.0
        %v807 = vmax.f32 %v753, 0.0
        %v808 = vmax.f32 %v758, 0.0
        %v809 = vmax.f32 %v761, 0.0
        %v810 = vmax.f32 %v766, 0.0
        %v811 = vmax.f32 %v769, 0.0
        %v812 = vmax.f32 %v774, 0.0
        %v813 = vmax.f32 %v777, 0.0
        %v814 = vmax.f32 %v782, 0.0
        %v815 = vmax.f32 %v785, 0.0
        %v816 = vmax.f32 %v790, 0.0
        %v817 = vmax.f32 %v793, 0.0
        %v818 = vmax.f32 %v798, 0.0
        %v819 = vmax.f32 %v801, 0.0
        %v820 = vpack.c.bf16 %v805, %v804
        %v821 = vpack.c.bf16 %v807, %v806
        %v822 = vpack.c.bf16 %v809, %v808
        %v823 = vpack.c.bf16 %v811, %v810
        %v824 = vpack.c.bf16 %v813, %v812
        %v825 = vpack.c.bf16 %v815, %v814
        %v826 = vpack.c.bf16 %v817, %v816
        %v827 = vpack.c.bf16 %v819, %v818
        %v828 = vld [vmem:[%s451] sm:$0xff]
        %v829 = vld [vmem:[%s451 + $0x8] sm:$0xff]
        %v830 = vld [vmem:[%s451 + $0x10] sm:$0xff]
        %v831 = vld [vmem:[%s451 + $0x18] sm:$0xff]
        %v832 = vpack.c.bf16 %v830, %v828
        %v833 = vpack.c.bf16 %v831, %v829
        %834 = vmatprep.subr.bf16.mxu0 0
        %835 = vmatpush1.bf16.msra.mxu0 %v675
        %836 = vmatprep.subr.bf16.mxu0 0
        %837 = vmatpush1.bf16.msra.mxu0 %v676
        %838 = vmatprep.subr.bf16.mxu0 0
        %839 = vmatpush1.bf16.msra.mxu0 %v677
        %840 = vmatprep.subr.bf16.mxu0 0
        %841 = vmatpush1.bf16.msra.mxu0 %v678
        %842 = vmatprep.subr.bf16.mxu0 0
        %843 = vmatpush1.bf16.msra.mxu0 %v679
        %844 = vmatprep.subr.bf16.mxu0 0
        %845 = vmatpush1.bf16.msra.mxu0 %v680
        %846 = vmatprep.subr.bf16.mxu0 0
        %847 = vmatpush1.bf16.msra.mxu0 %v681
        %848 = vmatprep.subr.bf16.mxu0 0
        %849 = vmatpush1.bf16.msra.mxu0 %v682
        %850 = vmatprep.subr.bf16.mxu0 0
        %851 = vmatpush1.bf16.msra.mxu0 %v683
        %852 = vmatprep.subr.bf16.mxu0 0
        %853 = vmatpush1.bf16.msra.mxu0 %v684
        %854 = vmatprep.subr.bf16.mxu0 0
        %855 = vmatpush1.bf16.msra.mxu0 %v685
        %856 = vmatprep.subr.bf16.mxu0 0
        %857 = vmatpush1.bf16.msra.mxu0 %v686
        %858 = vmatprep.subr.bf16.mxu0 0
        %859 = vmatpush1.bf16.msra.mxu0 %v687
        %860 = vmatprep.subr.bf16.mxu0 0
        %861 = vmatpush1.bf16.msra.mxu0 %v688
        %862 = vmatprep.subr.bf16.mxu0 0
        %863 = vmatpush1.bf16.msra.mxu0 %v689
        %864 = vmatprep.subr.bf16.mxu0 0
        %865 = vmatpush1.bf16.msra.mxu0 %v690
        %866 = vmatprep.mubr.bf16.mxu0 %v833
        %867 = vmatmul.mubr.bf16.gmra.mrb[0].mxu0 %v832
        %v868 = vpop.f32.mrb[0].mxu0
        %v869 = vadd.f32 %v609, %v868
        %v870 = vpop.f32.mrb[0].mxu0
        %v871 = vpop.f32.mrb[0].mxu0
        %v872 = vadd.f32 %v609, %v871
        %v873 = vpop.f32.mrb[0].mxu0
        %874 = vdwg.mxu0
        %v875 = vmax.f32 %v869, 0.0
        %v876 = vmax.f32 %v872, 0.0
        %v877 = vpack.c.bf16 %v876, %v875
        %v878 = vld [vmem:[%s460] sm:$0xff]
        %v879 = vld [vmem:[%s460 + $0x8] sm:$0xff]
        %v880 = vld [vmem:[%s460 + $0x10] sm:$0xff]
        %v881 = vld [vmem:[%s460 + $0x18] sm:$0xff]
        %v882 = vpack.c.bf16 %v880, %v878
        %v883 = vpack.c.bf16 %v881, %v879
        %884 = vmatprep.subr.bf16.mxu0 0
        %885 = vmatpush1.bf16.msra.mxu0 %v675
        %886 = vmatprep.subr.bf16.mxu0 0
        %887 = vmatpush1.bf16.msra.mxu0 %v676
        %888 = vmatprep.subr.bf16.mxu0 0
        %889 = vmatpush1.bf16.msra.mxu0 %v677
        %890 = vmatprep.subr.bf16.mxu0 0
        %891 = vmatpush1.bf16.msra.mxu0 %v678
        %892 = vmatprep.subr.bf16.mxu0 0
        %893 = vmatpush1.bf16.msra.mxu0 %v679
        %894 = vmatprep.subr.bf16.mxu0 0
        %895 = vmatpush1.bf16.msra.mxu0 %v680
        %896 = vmatprep.subr.bf16.mxu0 0
        %897 = vmatpush1.bf16.msra.mxu0 %v681
        %898 = vmatprep.subr.bf16.mxu0 0
        %899 = vmatpush1.bf16.msra.mxu0 %v682
        %900 = vmatprep.subr.bf16.mxu0 0
        %901 = vmatpush1.bf16.msra.mxu0 %v683
        %902 = vmatprep.subr.bf16.mxu0 0
        %903 = vmatpush1.bf16.msra.mxu0 %v684
        %904 = vmatprep.subr.bf16.mxu0 0
        %905 = vmatpush1.bf16.msra.mxu0 %v685
        %906 = vmatprep.subr.bf16.mxu0 0
        %907 = vmatpush1.bf16.msra.mxu0 %v686
        %908 = vmatprep.subr.bf16.mxu0 0
        %909 = vmatpush1.bf16.msra.mxu0 %v687
        %910 = vmatprep.subr.bf16.mxu0 0
        %911 = vmatpush1.bf16.msra.mxu0 %v688
        %912 = vmatprep.subr.bf16.mxu0 0
        %913 = vmatpush1.bf16.msra.mxu0 %v689
        %914 = vmatprep.subr.bf16.mxu0 0
        %915 = vmatpush1.bf16.msra.mxu0 %v690
        %916 = vmatprep.mubr.bf16.mxu0 %v883
        %917 = vmatmul.mubr.bf16.gmra.mrb[0].mxu0 %v882
        %v918 = vpop.f32.mrb[0].mxu0
        %v919 = vadd.f32 %v609, %v918
        %v920 = vpop.f32.mrb[0].mxu0
        %v921 = vpop.f32.mrb[0].mxu0
        %v922 = vadd.f32 %v609, %v921
        %v923 = vpop.f32.mrb[0].mxu0
        %924 = vdwg.mxu0
        %v925 = vmax.f32 %v919, 0.0
        %v926 = vmax.f32 %v922, 0.0
        %v927 = vpack.c.bf16 %v926, %v925
        %v929 = vshrl.u32 %v877, 16
        %v931 = vrot.slane %v929, 7
        %v932 = vshll.u32 %v877, 16
        %v934 = vor.u32 %v931, %v932
        %vm937 = vcmask 1040384
        %vm938 = vsmask.f32 256
        %vm939 = vmand %vm937, %vm938
        %v940 = vsel %vm939, 0, %v934
        %v941 = vsel %vm939, %v931, 0
        %v944 = vunpack.c.l.b16 %v940
        %v945 = vunpack.c.h.b16 %v940
        %v946 = vunpack.c.l.b16 %v941
        %v947 = vpack.c.b16 %v944, %v944
        %v948 = vpack.c.b16 %v945, %v945
        %v949 = vpack.c.b16 %v946, %v946
        %953 = vst [vmem:[#allocation2] sm:$0xf] %v947
        %954 = vst [vmem:[#allocation2 + $0x4] sm:$0xf] %v948
        %955 = vst [vmem:[#allocation2 + $0x8] sm:$0x1] %v949
        %v957 = vshrl.u32 %v820, 16
        %v959 = vrot.slane %v957, 7
        %v960 = vshll.u32 %v820, 16
        %v962 = vor.u32 %v959, %v960
        %v964 = vshrl.u32 %v821, 16
        %v966 = vrot.slane %v964, 7
        %v967 = vshll.u32 %v821, 16
        %v969 = vor.u32 %v966, %v967
        %v971 = vshrl.u32 %v822, 16
        %v973 = vrot.slane %v971, 7
        %v974 = vshll.u32 %v822, 16
        %v976 = vor.u32 %v973, %v974
        %v978 = vshrl.u32 %v823, 16
        %v980 = vrot.slane %v978, 7
        %v981 = vshll.u32 %v823, 16
        %v983 = vor.u32 %v980, %v981
        %v985 = vshrl.u32 %v824, 16
        %v987 = vrot.slane %v985, 7
        %v988 = vshll.u32 %v824, 16
        %v990 = vor.u32 %v987, %v988
        %v992 = vshrl.u32 %v825, 16
        %v994 = vrot.slane %v992, 7
        %v995 = vshll.u32 %v825, 16
        %v997 = vor.u32 %v994, %v995
        %v999 = vshrl.u32 %v826, 16
        %v1001 = vrot.slane %v999, 7
        %v1002 = vshll.u32 %v826, 16
        %v1004 = vor.u32 %v1001, %v1002
        %v1006 = vshrl.u32 %v827, 16
        %v1008 = vrot.slane %v1006, 7
        %v1009 = vshll.u32 %v827, 16
        %v1011 = vor.u32 %v1008, %v1009
        %v1028 = vsel %vm939, 0, %v962
        %v1029 = vsel %vm939, 0, %v969
        %v1030 = vsel %vm939, 0, %v976
        %v1031 = vsel %vm939, 0, %v983
        %v1032 = vsel %vm939, 0, %v990
        %v1033 = vsel %vm939, 0, %v997
        %v1034 = vsel %vm939, 0, %v1004
        %v1035 = vsel %vm939, 0, %v1011
        %v1036 = vsel %vm939, %v959, 0
        %v1037 = vsel %vm939, %v966, 0
        %v1038 = vsel %vm939, %v973, 0
        %v1039 = vsel %vm939, %v980, 0
        %v1040 = vsel %vm939, %v987, 0
        %v1041 = vsel %vm939, %v994, 0
        %v1042 = vsel %vm939, %v1001, 0
        %v1043 = vsel %vm939, %v1008, 0
        %v1060 = vcombine.high %v1028, %v1028
        %v1062 = vunpack.c.l.s4 1966171168
        %v1063 = vunpack.c.0.s8 %v1062
        %v1064 = vlaneseq
        %v1065 = vshrl.u32 %v1064, 7
        %v1066 = vsub.s32 %v1063, %v1065
        %v1067 = vrot.slane %v1028, %v1066
        %v1069 = vunpack.c.l.s4 1966171168
        %v1070 = vunpack.c.0.s8 %v1069
        %v1071 = vlaneseq
        %v1072 = vshrl.u32 %v1071, 7
        %v1073 = vsub.s32 %v1070, %v1072
        %v1074 = vrot.slane %v1060, %v1073
        %v1075 = vcombine.high %v1067, %v1067
        %v1076 = vcombine.high %v1074, %v1074
        %v1078 = vunpack.c.l.s4 1966171168
        %v1079 = vunpack.c.0.s8 %v1078
        %v1080 = vlaneseq
        %v1081 = vshrl.u32 %v1080, 7
        %v1082 = vsub.s32 %v1079, %v1081
        %v1083 = vrot.slane %v1067, %v1082
        %v1085 = vunpack.c.l.s4 1966171168
        %v1086 = vunpack.c.0.s8 %v1085
        %v1087 = vlaneseq
        %v1088 = vshrl.u32 %v1087, 7
        %v1089 = vsub.s32 %v1086, %v1088
        %v1090 = vrot.slane %v1074, %v1089
        %v1092 = vunpack.c.l.s4 1966171168
        %v1093 = vunpack.c.0.s8 %v1092
        %v1094 = vlaneseq
        %v1095 = vshrl.u32 %v1094, 7
        %v1096 = vsub.s32 %v1093, %v1095
        %v1097 = vrot.slane %v1075, %v1096
        %v1099 = vunpack.c.l.s4 1966171168
        %v1100 = vunpack.c.0.s8 %v1099
        %v1101 = vlaneseq
        %v1102 = vshrl.u32 %v1101, 7
        %v1103 = vsub.s32 %v1100, %v1102
        %v1104 = vrot.slane %v1076, %v1103
        %v1105 = vcombine.high %v1083, %v1083
        %v1106 = vcombine.high %v1090, %v1090
        %v1107 = vcombine.high %v1097, %v1097
        %v1108 = vcombine.high %v1104, %v1104
        %v1110 = vunpack.c.l.s4 1966171168
        %v1111 = vunpack.c.0.s8 %v1110
        %v1112 = vlaneseq
        %v1113 = vshrl.u32 %v1112, 7
        %v1114 = vsub.s32 %v1111, %v1113
        %v1115 = vrot.slane %v1036, %v1114
        %v1117 = vunpack.c.l.s4 1966171168
        %v1118 = vunpack.c.0.s8 %v1117
        %v1119 = vlaneseq
        %v1120 = vshrl.u32 %v1119, 7
        %v1121 = vsub.s32 %v1118, %v1120
        %v1122 = vrot.slane %v1115, %v1121
        %v1123 = vcombine.high %v1029, %v1029
        %v1125 = vunpack.c.l.s4 1966171168
        %v1126 = vunpack.c.0.s8 %v1125
        %v1127 = vlaneseq
        %v1128 = vshrl.u32 %v1127, 7
        %v1129 = vsub.s32 %v1126, %v1128
        %v1130 = vrot.slane %v1029, %v1129
        %v1132 = vunpack.c.l.s4 1966171168
        %v1133 = vunpack.c.0.s8 %v1132
        %v1134 = vlaneseq
        %v1135 = vshrl.u32 %v1134, 7
        %v1136 = vsub.s32 %v1133, %v1135
        %v1137 = vrot.slane %v1123, %v1136
        %v1138 = vcombine.high %v1130, %v1130
        %v1139 = vcombine.high %v1137, %v1137
        %v1141 = vunpack.c.l.s4 1966171168
        %v1142 = vunpack.c.0.s8 %v1141
        %v1143 = vlaneseq
        %v1144 = vshrl.u32 %v1143, 7
        %v1145 = vsub.s32 %v1142, %v1144
        %v1146 = vrot.slane %v1130, %v1145
        %v1148 = vunpack.c.l.s4 1966171168
        %v1149 = vunpack.c.0.s8 %v1148
        %v1150 = vlaneseq
        %v1151 = vshrl.u32 %v1150, 7
        %v1152 = vsub.s32 %v1149, %v1151
        %v1153 = vrot.slane %v1137, %v1152
        %v1155 = vunpack.c.l.s4 1966171168
        %v1156 = vunpack.c.0.s8 %v1155
        %v1157 = vlaneseq
        %v1158 = vshrl.u32 %v1157, 7
        %v1159 = vsub.s32 %v1156, %v1158
        %v1160 = vrot.slane %v1138, %v1159
        %v1162 = vunpack.c.l.s4 1966171168
        %v1163 = vunpack.c.0.s8 %v1162
        %v1164 = vlaneseq
        %v1165 = vshrl.u32 %v1164, 7
        %v1166 = vsub.s32 %v1163, %v1165
        %v1167 = vrot.slane %v1139, %v1166
        %v1168 = vcombine.high %v1146, %v1146
        %v1169 = vcombine.high %v1153, %v1153
        %v1170 = vcombine.high %v1160, %v1160
        %v1171 = vcombine.high %v1167, %v1167
        %v1173 = vunpack.c.l.s4 1966171168
        %v1174 = vunpack.c.0.s8 %v1173
        %v1175 = vlaneseq
        %v1176 = vshrl.u32 %v1175, 7
        %v1177 = vsub.s32 %v1174, %v1176
        %v1178 = vrot.slane %v1037, %v1177
        %v1180 = vunpack.c.l.s4 1966171168
        %v1181 = vunpack.c.0.s8 %v1180
        %v1182 = vlaneseq
        %v1183 = vshrl.u32 %v1182, 7
        %v1184 = vsub.s32 %v1181, %v1183
        %v1185 = vrot.slane %v1178, %v1184
        %v1186 = vcombine.high %v1030, %v1030
        %v1188 = vunpack.c.l.s4 1966171168
        %v1189 = vunpack.c.0.s8 %v1188
        %v1190 = vlaneseq
        %v1191 = vshrl.u32 %v1190, 7
        %v1192 = vsub.s32 %v1189, %v1191
        %v1193 = vrot.slane %v1030, %v1192
        %v1195 = vunpack.c.l.s4 1966171168
        %v1196 = vunpack.c.0.s8 %v1195
        %v1197 = vlaneseq
        %v1198 = vshrl.u32 %v1197, 7
        %v1199 = vsub.s32 %v1196, %v1198
        %v1200 = vrot.slane %v1186, %v1199
        %v1201 = vcombine.high %v1193, %v1193
        %v1202 = vcombine.high %v1200, %v1200
        %v1204 = vunpack.c.l.s4 1966171168
        %v1205 = vunpack.c.0.s8 %v1204
        %v1206 = vlaneseq
        %v1207 = vshrl.u32 %v1206, 7
        %v1208 = vsub.s32 %v1205, %v1207
        %v1209 = vrot.slane %v1193, %v1208
        %v1211 = vunpack.c.l.s4 1966171168
        %v1212 = vunpack.c.0.s8 %v1211
        %v1213 = vlaneseq
        %v1214 = vshrl.u32 %v1213, 7
        %v1215 = vsub.s32 %v1212, %v1214
        %v1216 = vrot.slane %v1200, %v1215
        %v1218 = vunpack.c.l.s4 1966171168
        %v1219 = vunpack.c.0.s8 %v1218
        %v1220 = vlaneseq
        %v1221 = vshrl.u32 %v1220, 7
        %v1222 = vsub.s32 %v1219, %v1221
        %v1223 = vrot.slane %v1201, %v1222
        %v1225 = vunpack.c.l.s4 1966171168
        %v1226 = vunpack.c.0.s8 %v1225
        %v1227 = vlaneseq
        %v1228 = vshrl.u32 %v1227, 7
        %v1229 = vsub.s32 %v1226, %v1228
        %v1230 = vrot.slane %v1202, %v1229
        %v1231 = vcombine.high %v1209, %v1209
        %v1232 = vcombine.high %v1216, %v1216
        %v1233 = vcombine.high %v1223, %v1223
        %v1234 = vcombine.high %v1230, %v1230
        %v1236 = vunpack.c.l.s4 1966171168
        %v1237 = vunpack.c.0.s8 %v1236
        %v1238 = vlaneseq
        %v1239 = vshrl.u32 %v1238, 7
        %v1240 = vsub.s32 %v1237, %v1239
        %v1241 = vrot.slane %v1038, %v1240
        %v1243 = vunpack.c.l.s4 1966171168
        %v1244 = vunpack.c.0.s8 %v1243
        %v1245 = vlaneseq
        %v1246 = vshrl.u32 %v1245, 7
        %v1247 = vsub.s32 %v1244, %v1246
        %v1248 = vrot.slane %v1241, %v1247
        %v1249 = vcombine.high %v1031, %v1031
        %v1251 = vunpack.c.l.s4 1966171168
        %v1252 = vunpack.c.0.s8 %v1251
        %v1253 = vlaneseq
        %v1254 = vshrl.u32 %v1253, 7
        %v1255 = vsub.s32 %v1252, %v1254
        %v1256 = vrot.slane %v1031, %v1255
        %v1258 = vunpack.c.l.s4 1966171168
        %v1259 = vunpack.c.0.s8 %v1258
        %v1260 = vlaneseq
        %v1261 = vshrl.u32 %v1260, 7
        %v1262 = vsub.s32 %v1259, %v1261
        %v1263 = vrot.slane %v1249, %v1262
        %v1264 = vcombine.high %v1256, %v1256
        %v1265 = vcombine.high %v1263, %v1263
        %v1267 = vunpack.c.l.s4 1966171168
        %v1268 = vunpack.c.0.s8 %v1267
        %v1269 = vlaneseq
        %v1270 = vshrl.u32 %v1269, 7
        %v1271 = vsub.s32 %v1268, %v1270
        %v1272 = vrot.slane %v1256, %v1271
        %v1274 = vunpack.c.l.s4 1966171168
        %v1275 = vunpack.c.0.s8 %v1274
        %v1276 = vlaneseq
        %v1277 = vshrl.u32 %v1276, 7
        %v1278 = vsub.s32 %v1275, %v1277
        %v1279 = vrot.slane %v1263, %v1278
        %v1281 = vunpack.c.l.s4 1966171168
        %v1282 = vunpack.c.0.s8 %v1281
        %v1283 = vlaneseq
        %v1284 = vshrl.u32 %v1283, 7
        %v1285 = vsub.s32 %v1282, %v1284
        %v1286 = vrot.slane %v1264, %v1285
        %v1288 = vunpack.c.l.s4 1966171168
        %v1289 = vunpack.c.0.s8 %v1288
        %v1290 = vlaneseq
        %v1291 = vshrl.u32 %v1290, 7
        %v1292 = vsub.s32 %v1289, %v1291
        %v1293 = vrot.slane %v1265, %v1292
        %v1294 = vcombine.high %v1272, %v1272
        %v1295 = vcombine.high %v1279, %v1279
        %v1296 = vcombine.high %v1286, %v1286
        %v1297 = vcombine.high %v1293, %v1293
        %v1299 = vunpack.c.l.s4 1966171168
        %v1300 = vunpack.c.0.s8 %v1299
        %v1301 = vlaneseq
        %v1302 = vshrl.u32 %v1301, 7
        %v1303 = vsub.s32 %v1300, %v1302
        %v1304 = vrot.slane %v1039, %v1303
        %v1306 = vunpack.c.l.s4 1966171168
        %v1307 = vunpack.c.0.s8 %v1306
        %v1308 = vlaneseq
        %v1309 = vshrl.u32 %v1308, 7
        %v1310 = vsub.s32 %v1307, %v1309
        %v1311 = vrot.slane %v1304, %v1310
        %v1312 = vcombine.high %v1032, %v1032
        %v1314 = vunpack.c.l.s4 1966171168
        %v1315 = vunpack.c.0.s8 %v1314
        %v1316 = vlaneseq
        %v1317 = vshrl.u32 %v1316, 7
        %v1318 = vsub.s32 %v1315, %v1317
        %v1319 = vrot.slane %v1032, %v1318
        %v1321 = vunpack.c.l.s4 1966171168
        %v1322 = vunpack.c.0.s8 %v1321
        %v1323 = vlaneseq
        %v1324 = vshrl.u32 %v1323, 7
        %v1325 = vsub.s32 %v1322, %v1324
        %v1326 = vrot.slane %v1312, %v1325
        %v1327 = vcombine.high %v1319, %v1319
        %v1328 = vcombine.high %v1326, %v1326
        %v1330 = vunpack.c.l.s4 1966171168
        %v1331 = vunpack.c.0.s8 %v1330
        %v1332 = vlaneseq
        %v1333 = vshrl.u32 %v1332, 7
        %v1334 = vsub.s32 %v1331, %v1333
        %v1335 = vrot.slane %v1319, %v1334
        %v1337 = vunpack.c.l.s4 1966171168
        %v1338 = vunpack.c.0.s8 %v1337
        %v1339 = vlaneseq
        %v1340 = vshrl.u32 %v1339, 7
        %v1341 = vsub.s32 %v1338, %v1340
        %v1342 = vrot.slane %v1326, %v1341
        %v1344 = vunpack.c.l.s4 1966171168
        %v1345 = vunpack.c.0.s8 %v1344
        %v1346 = vlaneseq
        %v1347 = vshrl.u32 %v1346, 7
        %v1348 = vsub.s32 %v1345, %v1347
        %v1349 = vrot.slane %v1327, %v1348
        %v1351 = vunpack.c.l.s4 1966171168
        %v1352 = vunpack.c.0.s8 %v1351
        %v1353 = vlaneseq
        %v1354 = vshrl.u32 %v1353, 7
        %v1355 = vsub.s32 %v1352, %v1354
        %v1356 = vrot.slane %v1328, %v1355
        %v1357 = vcombine.high %v1335, %v1335
        %v1358 = vcombine.high %v1342, %v1342
        %v1359 = vcombine.high %v1349, %v1349
        %v1360 = vcombine.high %v1356, %v1356
        %v1362 = vunpack.c.l.s4 1966171168
        %v1363 = vunpack.c.0.s8 %v1362
        %v1364 = vlaneseq
        %v1365 = vshrl.u32 %v1364, 7
        %v1366 = vsub.s32 %v1363, %v1365
        %v1367 = vrot.slane %v1040, %v1366
        %v1369 = vunpack.c.l.s4 1966171168
        %v1370 = vunpack.c.0.s8 %v1369
        %v1371 = vlaneseq
        %v1372 = vshrl.u32 %v1371, 7
        %v1373 = vsub.s32 %v1370, %v1372
        %v1374 = vrot.slane %v1367, %v1373
        %v1375 = vcombine.high %v1033, %v1033
        %v1377 = vunpack.c.l.s4 1966171168
        %v1378 = vunpack.c.0.s8 %v1377
        %v1379 = vlaneseq
        %v1380 = vshrl.u32 %v1379, 7
        %v1381 = vsub.s32 %v1378, %v1380
        %v1382 = vrot.slane %v1033, %v1381
        %v1384 = vunpack.c.l.s4 1966171168
        %v1385 = vunpack.c.0.s8 %v1384
        %v1386 = vlaneseq
        %v1387 = vshrl.u32 %v1386, 7
        %v1388 = vsub.s32 %v1385, %v1387
        %v1389 = vrot.slane %v1375, %v1388
        %v1390 = vcombine.high %v1382, %v1382
        %v1391 = vcombine.high %v1389, %v1389
        %v1393 = vunpack.c.l.s4 1966171168
        %v1394 = vunpack.c.0.s8 %v1393
        %v1395 = vlaneseq
        %v1396 = vshrl.u32 %v1395, 7
        %v1397 = vsub.s32 %v1394, %v1396
        %v1398 = vrot.slane %v1382, %v1397
        %v1400 = vunpack.c.l.s4 1966171168
        %v1401 = vunpack.c.0.s8 %v1400
        %v1402 = vlaneseq
        %v1403 = vshrl.u32 %v1402, 7
        %v1404 = vsub.s32 %v1401, %v1403
        %v1405 = vrot.slane %v1389, %v1404
        %v1407 = vunpack.c.l.s4 1966171168
        %v1408 = vunpack.c.0.s8 %v1407
        %v1409 = vlaneseq
        %v1410 = vshrl.u32 %v1409, 7
        %v1411 = vsub.s32 %v1408, %v1410
        %v1412 = vrot.slane %v1390, %v1411
        %v1414 = vunpack.c.l.s4 1966171168
        %v1415 = vunpack.c.0.s8 %v1414
        %v1416 = vlaneseq
        %v1417 = vshrl.u32 %v1416, 7
        %v1418 = vsub.s32 %v1415, %v1417
        %v1419 = vrot.slane %v1391, %v1418
        %v1420 = vcombine.high %v1398, %v1398
        %v1421 = vcombine.high %v1405, %v1405
        %v1422 = vcombine.high %v1412, %v1412
        %v1423 = vcombine.high %v1419, %v1419
        %v1425 = vunpack.c.l.s4 1966171168
        %v1426 = vunpack.c.0.s8 %v1425
        %v1427 = vlaneseq
        %v1428 = vshrl.u32 %v1427, 7
        %v1429 = vsub.s32 %v1426, %v1428
        %v1430 = vrot.slane %v1041, %v1429
        %v1432 = vunpack.c.l.s4 1966171168
        %v1433 = vunpack.c.0.s8 %v1432
        %v1434 = vlaneseq
        %v1435 = vshrl.u32 %v1434, 7
        %v1436 = vsub.s32 %v1433, %v1435
        %v1437 = vrot.slane %v1430, %v1436
        %v1438 = vcombine.high %v1034, %v1034
        %v1440 = vunpack.c.l.s4 1966171168
        %v1441 = vunpack.c.0.s8 %v1440
        %v1442 = vlaneseq
        %v1443 = vshrl.u32 %v1442, 7
        %v1444 = vsub.s32 %v1441, %v1443
        %v1445 = vrot.slane %v1034, %v1444
        %v1447 = vunpack.c.l.s4 1966171168
        %v1448 = vunpack.c.0.s8 %v1447
        %v1449 = vlaneseq
        %v1450 = vshrl.u32 %v1449, 7
        %v1451 = vsub.s32 %v1448, %v1450
        %v1452 = vrot.slane %v1438, %v1451
        %v1453 = vcombine.high %v1445, %v1445
        %v1454 = vcombine.high %v1452, %v1452
        %v1456 = vunpack.c.l.s4 1966171168
        %v1457 = vunpack.c.0.s8 %v1456
        %v1458 = vlaneseq
        %v1459 = vshrl.u32 %v1458, 7
        %v1460 = vsub.s32 %v1457, %v1459
        %v1461 = vrot.slane %v1445, %v1460
        %v1463 = vunpack.c.l.s4 1966171168
        %v1464 = vunpack.c.0.s8 %v1463
        %v1465 = vlaneseq
        %v1466 = vshrl.u32 %v1465, 7
        %v1467 = vsub.s32 %v1464, %v1466
        %v1468 = vrot.slane %v1452, %v1467
        %v1470 = vunpack.c.l.s4 1966171168
        %v1471 = vunpack.c.0.s8 %v1470
        %v1472 = vlaneseq
        %v1473 = vshrl.u32 %v1472, 7
        %v1474 = vsub.s32 %v1471, %v1473
        %v1475 = vrot.slane %v1453, %v1474
        %v1477 = vunpack.c.l.s4 1966171168
        %v1478 = vunpack.c.0.s8 %v1477
        %v1479 = vlaneseq
        %v1480 = vshrl.u32 %v1479, 7
        %v1481 = vsub.s32 %v1478, %v1480
        %v1482 = vrot.slane %v1454, %v1481
        %v1483 = vcombine.high %v1461, %v1461
        %v1484 = vcombine.high %v1468, %v1468
        %v1485 = vcombine.high %v1475, %v1475
        %v1486 = vcombine.high %v1482, %v1482
        %v1488 = vunpack.c.l.s4 1966171168
        %v1489 = vunpack.c.0.s8 %v1488
        %v1490 = vlaneseq
        %v1491 = vshrl.u32 %v1490, 7
        %v1492 = vsub.s32 %v1489, %v1491
        %v1493 = vrot.slane %v1042, %v1492
        %v1495 = vunpack.c.l.s4 1966171168
        %v1496 = vunpack.c.0.s8 %v1495
        %v1497 = vlaneseq
        %v1498 = vshrl.u32 %v1497, 7
        %v1499 = vsub.s32 %v1496, %v1498
        %v1500 = vrot.slane %v1493, %v1499
        %v1501 = vcombine.high %v1035, %v1035
        %v1503 = vunpack.c.l.s4 1966171168
        %v1504 = vunpack.c.0.s8 %v1503
        %v1505 = vlaneseq
        %v1506 = vshrl.u32 %v1505, 7
        %v1507 = vsub.s32 %v1504, %v1506
        %v1508 = vrot.slane %v1035, %v1507
        %v1510 = vunpack.c.l.s4 1966171168
        %v1511 = vunpack.c.0.s8 %v1510
        %v1512 = vlaneseq
        %v1513 = vshrl.u32 %v1512, 7
        %v1514 = vsub.s32 %v1511, %v1513
        %v1515 = vrot.slane %v1501, %v1514
        %v1516 = vcombine.high %v1508, %v1508
        %v1517 = vcombine.high %v1515, %v1515
        %v1519 = vunpack.c.l.s4 1966171168
        %v1520 = vunpack.c.0.s8 %v1519
        %v1521 = vlaneseq
        %v1522 = vshrl.u32 %v1521, 7
        %v1523 = vsub.s32 %v1520, %v1522
        %v1524 = vrot.slane %v1508, %v1523
        %v1526 = vunpack.c.l.s4 1966171168
        %v1527 = vunpack.c.0.s8 %v1526
        %v1528 = vlaneseq
        %v1529 = vshrl.u32 %v1528, 7
        %v1530 = vsub.s32 %v1527, %v1529
        %v1531 = vrot.slane %v1515, %v1530
        %v1533 = vunpack.c.l.s4 1966171168
        %v1534 = vunpack.c.0.s8 %v1533
        %v1535 = vlaneseq
        %v1536 = vshrl.u32 %v1535, 7
        %v1537 = vsub.s32 %v1534, %v1536
        %v1538 = vrot.slane %v1516, %v1537
        %v1540 = vunpack.c.l.s4 1966171168
        %v1541 = vunpack.c.0.s8 %v1540
        %v1542 = vlaneseq
        %v1543 = vshrl.u32 %v1542, 7
        %v1544 = vsub.s32 %v1541, %v1543
        %v1545 = vrot.slane %v1517, %v1544
        %v1546 = vcombine.high %v1524, %v1524
        %v1547 = vcombine.high %v1531, %v1531
        %v1548 = vcombine.high %v1538, %v1538
        %v1549 = vcombine.high %v1545, %v1545
        %v1551 = vunpack.c.l.s4 1966171168
        %v1552 = vunpack.c.0.s8 %v1551
        %v1553 = vlaneseq
        %v1554 = vshrl.u32 %v1553, 7
        %v1555 = vsub.s32 %v1552, %v1554
        %v1556 = vrot.slane %v1043, %v1555
        %v1558 = vunpack.c.l.s4 1966171168
        %v1559 = vunpack.c.0.s8 %v1558
        %v1560 = vlaneseq
        %v1561 = vshrl.u32 %v1560, 7
        %v1562 = vsub.s32 %v1559, %v1561
        %v1563 = vrot.slane %v1556, %v1562
        %v1564 = vcombine.low %v1097, %v1097
        %v1565 = vcombine.low %v1083, %v1105
        %v1567 = vunpack.c.l.s4 1935823168
        %v1568 = vunpack.c.0.s8 %v1567
        %v1569 = vlaneseq
        %v1570 = vshrl.u32 %v1569, 7
        %v1571 = vsub.s32 %v1568, %v1570
        %v1572 = vrot.slane %v1564, %v1571
        %v1574 = vunpack.c.l.s4 1935823168
        %v1575 = vunpack.c.0.s8 %v1574
        %v1576 = vlaneseq
        %v1577 = vshrl.u32 %v1576, 7
        %v1578 = vsub.s32 %v1575, %v1577
        %v1579 = vrot.slane %v1565, %v1578
        %v1580 = vcombine.low %v1572, %v1579
        %v1582 = vunpack.c.l.s4 1935823168
        %v1583 = vunpack.c.0.s8 %v1582
        %v1584 = vlaneseq
        %v1585 = vshrl.u32 %v1584, 7
        %v1586 = vsub.s32 %v1583, %v1585
        %v1587 = vrot.slane %v1580, %v1586
        %v1588 = vcombine.low %v1107, %v1104
        %v1589 = vcombine.low %v1090, %v1106
        %v1591 = vunpack.c.l.s4 1935823168
        %v1592 = vunpack.c.0.s8 %v1591
        %v1593 = vlaneseq
        %v1594 = vshrl.u32 %v1593, 7
        %v1595 = vsub.s32 %v1592, %v1594
        %v1596 = vrot.slane %v1588, %v1595
        %v1598 = vunpack.c.l.s4 1935823168
        %v1599 = vunpack.c.0.s8 %v1598
        %v1600 = vlaneseq
        %v1601 = vshrl.u32 %v1600, 7
        %v1602 = vsub.s32 %v1599, %v1601
        %v1603 = vrot.slane %v1589, %v1602
        %v1604 = vcombine.low %v1596, %v1603
        %v1606 = vunpack.c.l.s4 1935823168
        %v1607 = vunpack.c.0.s8 %v1606
        %v1608 = vlaneseq
        %v1609 = vshrl.u32 %v1608, 7
        %v1610 = vsub.s32 %v1607, %v1609
        %v1611 = vrot.slane %v1604, %v1610
        %v1612 = vcombine.low %v1108, %v1146
        %v1613 = vcombine.low %v1122, %v1160
        %v1615 = vunpack.c.l.s4 1935823168
        %v1616 = vunpack.c.0.s8 %v1615
        %v1617 = vlaneseq
        %v1618 = vshrl.u32 %v1617, 7
        %v1619 = vsub.s32 %v1616, %v1618
        %v1620 = vrot.slane %v1612, %v1619
        %v1622 = vunpack.c.l.s4 1935823168
        %v1623 = vunpack.c.0.s8 %v1622
        %v1624 = vlaneseq
        %v1625 = vshrl.u32 %v1624, 7
        %v1626 = vsub.s32 %v1623, %v1625
        %v1627 = vrot.slane %v1613, %v1626
        %v1628 = vcombine.low %v1620, %v1627
        %v1630 = vunpack.c.l.s4 1935823168
        %v1631 = vunpack.c.0.s8 %v1630
        %v1632 = vlaneseq
        %v1633 = vshrl.u32 %v1632, 7
        %v1634 = vsub.s32 %v1631, %v1633
        %v1635 = vrot.slane %v1628, %v1634
        %v1636 = vcombine.low %v1168, %v1153
        %v1637 = vcombine.low %v1170, %v1167
        %v1639 = vunpack.c.l.s4 1935823168
        %v1640 = vunpack.c.0.s8 %v1639
        %v1641 = vlaneseq
        %v1642 = vshrl.u32 %v1641, 7
        %v1643 = vsub.s32 %v1640, %v1642
        %v1644 = vrot.slane %v1636, %v1643
        %v1646 = vunpack.c.l.s4 1935823168
        %v1647 = vunpack.c.0.s8 %v1646
        %v1648 = vlaneseq
        %v1649 = vshrl.u32 %v1648, 7
        %v1650 = vsub.s32 %v1647, %v1649
        %v1651 = vrot.slane %v1637, %v1650
        %v1652 = vcombine.low %v1644, %v1651
        %v1654 = vunpack.c.l.s4 1935823168
        %v1655 = vunpack.c.0.s8 %v1654
        %v1656 = vlaneseq
        %v1657 = vshrl.u32 %v1656, 7
        %v1658 = vsub.s32 %v1655, %v1657
        %v1659 = vrot.slane %v1652, %v1658
        %v1660 = vcombine.low %v1169, %v1185
        %v1661 = vcombine.low %v1171, %v1209
        %v1663 = vunpack.c.l.s4 1935823168
        %v1664 = vunpack.c.0.s8 %v1663
        %v1665 = vlaneseq
        %v1666 = vshrl.u32 %v1665, 7
        %v1667 = vsub.s32 %v1664, %v1666
        %v1668 = vrot.slane %v1660, %v1667
        %v1670 = vunpack.c.l.s4 1935823168
        %v1671 = vunpack.c.0.s8 %v1670
        %v1672 = vlaneseq
        %v1673 = vshrl.u32 %v1672, 7
        %v1674 = vsub.s32 %v1671, %v1673
        %v1675 = vrot.slane %v1661, %v1674
        %v1676 = vcombine.low %v1668, %v1675
        %v1678 = vunpack.c.l.s4 1935823168
        %v1679 = vunpack.c.0.s8 %v1678
        %v1680 = vlaneseq
        %v1681 = vshrl.u32 %v1680, 7
        %v1682 = vsub.s32 %v1679, %v1681
        %v1683 = vrot.slane %v1676, %v1682
        %v1684 = vcombine.low %v1223, %v1233
        %v1685 = vcombine.low %v1231, %v1216
        %v1687 = vunpack.c.l.s4 1935823168
        %v1688 = vunpack.c.0.s8 %v1687
        %v1689 = vlaneseq
        %v1690 = vshrl.u32 %v1689, 7
        %v1691 = vsub.s32 %v1688, %v1690
        %v1692 = vrot.slane %v1684, %v1691
        %v1694 = vunpack.c.l.s4 1935823168
        %v1695 = vunpack.c.0.s8 %v1694
        %v1696 = vlaneseq
        %v1697 = vshrl.u32 %v1696, 7
        %v1698 = vsub.s32 %v1695, %v1697
        %v1699 = vrot.slane %v1685, %v1698
        %v1700 = vcombine.low %v1692, %v1699
        %v1702 = vunpack.c.l.s4 1935823168
        %v1703 = vunpack.c.0.s8 %v1702
        %v1704 = vlaneseq
        %v1705 = vshrl.u32 %v1704, 7
        %v1706 = vsub.s32 %v1703, %v1705
        %v1707 = vrot.slane %v1700, %v1706
        %v1708 = vcombine.low %v1230, %v1234
        %v1709 = vcombine.low %v1232, %v1248
        %v1711 = vunpack.c.l.s4 1935823168
        %v1712 = vunpack.c.0.s8 %v1711
        %v1713 = vlaneseq
        %v1714 = vshrl.u32 %v1713, 7
        %v1715 = vsub.s32 %v1712, %v1714
        %v1716 = vrot.slane %v1708, %v1715
        %v1718 = vunpack.c.l.s4 1935823168
        %v1719 = vunpack.c.0.s8 %v1718
        %v1720 = vlaneseq
        %v1721 = vshrl.u32 %v1720, 7
        %v1722 = vsub.s32 %v1719, %v1721
        %v1723 = vrot.slane %v1709, %v1722
        %v1724 = vcombine.low %v1716, %v1723
        %v1726 = vunpack.c.l.s4 1935823168
        %v1727 = vunpack.c.0.s8 %v1726
        %v1728 = vlaneseq
        %v1729 = vshrl.u32 %v1728, 7
        %v1730 = vsub.s32 %v1727, %v1729
        %v1731 = vrot.slane %v1724, %v1730
        %v1732 = vcombine.low %v1272, %v1294
        %v1733 = vcombine.low %v1286, %v1296
        %v1735 = vunpack.c.l.s4 1935823168
        %v1736 = vunpack.c.0.s8 %v1735
        %v1737 = vlaneseq
        %v1738 = vshrl.u32 %v1737, 7
        %v1739 = vsub.s32 %v1736, %v1738
        %v1740 = vrot.slane %v1732, %v1739
        %v1742 = vunpack.c.l.s4 1935823168
        %v1743 = vunpack.c.0.s8 %v1742
        %v1744 = vlaneseq
        %v1745 = vshrl.u32 %v1744, 7
        %v1746 = vsub.s32 %v1743, %v1745
        %v1747 = vrot.slane %v1733, %v1746
        %v1748 = vcombine.low %v1740, %v1747
        %v1750 = vunpack.c.l.s4 1935823168
        %v1751 = vunpack.c.0.s8 %v1750
        %v1752 = vlaneseq
        %v1753 = vshrl.u32 %v1752, 7
        %v1754 = vsub.s32 %v1751, %v1753
        %v1755 = vrot.slane %v1748, %v1754
        %v1756 = vcombine.low %v1279, %v1295
        %v1757 = vcombine.low %v1293, %v1297
        %v1759 = vunpack.c.l.s4 1935823168
        %v1760 = vunpack.c.0.s8 %v1759
        %v1761 = vlaneseq
        %v1762 = vshrl.u32 %v1761, 7
        %v1763 = vsub.s32 %v1760, %v1762
        %v1764 = vrot.slane %v1756, %v1763
        %v1766 = vunpack.c.l.s4 1935823168
        %v1767 = vunpack.c.0.s8 %v1766
        %v1768 = vlaneseq
        %v1769 = vshrl.u32 %v1768, 7
        %v1770 = vsub.s32 %v1767, %v1769
        %v1771 = vrot.slane %v1757, %v1770
        %v1772 = vcombine.low %v1764, %v1771
        %v1774 = vunpack.c.l.s4 1935823168
        %v1775 = vunpack.c.0.s8 %v1774
        %v1776 = vlaneseq
        %v1777 = vshrl.u32 %v1776, 7
        %v1778 = vsub.s32 %v1775, %v1777
        %v1779 = vrot.slane %v1772, %v1778
        %v1780 = vcombine.low %v1311, %v1349
        %v1781 = vcombine.low %v1335, %v1357
        %v1783 = vunpack.c.l.s4 1935823168
        %v1784 = vunpack.c.0.s8 %v1783
        %v1785 = vlaneseq
        %v1786 = vshrl.u32 %v1785, 7
        %v1787 = vsub.s32 %v1784, %v1786
        %v1788 = vrot.slane %v1780, %v1787
        %v1790 = vunpack.c.l.s4 1935823168
        %v1791 = vunpack.c.0.s8 %v1790
        %v1792 = vlaneseq
        %v1793 = vshrl.u32 %v1792, 7
        %v1794 = vsub.s32 %v1791, %v1793
        %v1795 = vrot.slane %v1781, %v1794
        %v1796 = vcombine.low %v1788, %v1795
        %v1798 = vunpack.c.l.s4 1935823168
        %v1799 = vunpack.c.0.s8 %v1798
        %v1800 = vlaneseq
        %v1801 = vshrl.u32 %v1800, 7
        %v1802 = vsub.s32 %v1799, %v1801
        %v1803 = vrot.slane %v1796, %v1802
        %v1804 = vcombine.low %v1359, %v1356
        %v1805 = vcombine.low %v1342, %v1358
        %v1807 = vunpack.c.l.s4 1935823168
        %v1808 = vunpack.c.0.s8 %v1807
        %v1809 = vlaneseq
        %v1810 = vshrl.u32 %v1809, 7
        %v1811 = vsub.s32 %v1808, %v1810
        %v1812 = vrot.slane %v1804, %v1811
        %v1814 = vunpack.c.l.s4 1935823168
        %v1815 = vunpack.c.0.s8 %v1814
        %v1816 = vlaneseq
        %v1817 = vshrl.u32 %v1816, 7
        %v1818 = vsub.s32 %v1815, %v1817
        %v1819 = vrot.slane %v1805, %v1818
        %v1820 = vcombine.low %v1812, %v1819
        %v1822 = vunpack.c.l.s4 1935823168
        %v1823 = vunpack.c.0.s8 %v1822
        %v1824 = vlaneseq
        %v1825 = vshrl.u32 %v1824, 7
        %v1826 = vsub.s32 %v1823, %v1825
        %v1827 = vrot.slane %v1820, %v1826
        %v1828 = vcombine.low %v1360, %v1398
        %v1829 = vcombine.low %v1374, %v1412
        %v1831 = vunpack.c.l.s4 1935823168
        %v1832 = vunpack.c.0.s8 %v1831
        %v1833 = vlaneseq
        %v1834 = vshrl.u32 %v1833, 7
        %v1835 = vsub.s32 %v1832, %v1834
        %v1836 = vrot.slane %v1828, %v1835
        %v1838 = vunpack.c.l.s4 1935823168
        %v1839 = vunpack.c.0.s8 %v1838
        %v1840 = vlaneseq
        %v1841 = vshrl.u32 %v1840, 7
        %v1842 = vsub.s32 %v1839, %v1841
        %v1843 = vrot.slane %v1829, %v1842
        %v1844 = vcombine.low %v1836, %v1843
        %v1846 = vunpack.c.l.s4 1935823168
        %v1847 = vunpack.c.0.s8 %v1846
        %v1848 = vlaneseq
        %v1849 = vshrl.u32 %v1848, 7
        %v1850 = vsub.s32 %v1847, %v1849
        %v1851 = vrot.slane %v1844, %v1850
        %v1852 = vcombine.low %v1420, %v1405
        %v1853 = vcombine.low %v1422, %v1419
        %v1855 = vunpack.c.l.s4 1935823168
        %v1856 = vunpack.c.0.s8 %v1855
        %v1857 = vlaneseq
        %v1858 = vshrl.u32 %v1857, 7
        %v1859 = vsub.s32 %v1856, %v1858
        %v1860 = vrot.slane %v1852, %v1859
        %v1862 = vunpack.c.l.s4 1935823168
        %v1863 = vunpack.c.0.s8 %v1862
        %v1864 = vlaneseq
        %v1865 = vshrl.u32 %v1864, 7
        %v1866 = vsub.s32 %v1863, %v1865
        %v1867 = vrot.slane %v1853, %v1866
        %v1868 = vcombine.low %v1860, %v1867
        %v1870 = vunpack.c.l.s4 1935823168
        %v1871 = vunpack.c.0.s8 %v1870
        %v1872 = vlaneseq
        %v1873 = vshrl.u32 %v1872, 7
        %v1874 = vsub.s32 %v1871, %v1873
        %v1875 = vrot.slane %v1868, %v1874
        %v1876 = vcombine.low %v1421, %v1437
        %v1877 = vcombine.low %v1423, %v1461
        %v1879 = vunpack.c.l.s4 1935823168
        %v1880 = vunpack.c.0.s8 %v1879
        %v1881 = vlaneseq
        %v1882 = vshrl.u32 %v1881, 7
        %v1883 = vsub.s32 %v1880, %v1882
        %v1884 = vrot.slane %v1876, %v1883
        %v1886 = vunpack.c.l.s4 1935823168
        %v1887 = vunpack.c.0.s8 %v1886
        %v1888 = vlaneseq
        %v1889 = vshrl.u32 %v1888, 7
        %v1890 = vsub.s32 %v1887, %v1889
        %v1891 = vrot.slane %v1877, %v1890
        %v1892 = vcombine.low %v1884, %v1891
        %v1894 = vunpack.c.l.s4 1935823168
        %v1895 = vunpack.c.0.s8 %v1894
        %v1896 = vlaneseq
        %v1897 = vshrl.u32 %v1896, 7
        %v1898 = vsub.s32 %v1895, %v1897
        %v1899 = vrot.slane %v1892, %v1898
        %v1900 = vcombine.low %v1475, %v1485
        %v1901 = vcombine.low %v1483, %v1468
        %v1903 = vunpack.c.l.s4 1935823168
        %v1904 = vunpack.c.0.s8 %v1903
        %v1905 = vlaneseq
        %v1906 = vshrl.u32 %v1905, 7
        %v1907 = vsub.s32 %v1904, %v1906
        %v1908 = vrot.slane %v1900, %v1907
        %v1910 = vunpack.c.l.s4 1935823168
        %v1911 = vunpack.c.0.s8 %v1910
        %v1912 = vlaneseq
        %v1913 = vshrl.u32 %v1912, 7
        %v1914 = vsub.s32 %v1911, %v1913
        %v1915 = vrot.slane %v1901, %v1914
        %v1916 = vcombine.low %v1908, %v1915
        %v1918 = vunpack.c.l.s4 1935823168
        %v1919 = vunpack.c.0.s8 %v1918
        %v1920 = vlaneseq
        %v1921 = vshrl.u32 %v1920, 7
        %v1922 = vsub.s32 %v1919, %v1921
        %v1923 = vrot.slane %v1916, %v1922
        %v1924 = vcombine.low %v1482, %v1486
        %v1925 = vcombine.low %v1484, %v1500
        %v1927 = vunpack.c.l.s4 1935823168
        %v1928 = vunpack.c.0.s8 %v1927
        %v1929 = vlaneseq
        %v1930 = vshrl.u32 %v1929, 7
        %v1931 = vsub.s32 %v1928, %v1930
        %v1932 = vrot.slane %v1924, %v1931
        %v1934 = vunpack.c.l.s4 1935823168
        %v1935 = vunpack.c.0.s8 %v1934
        %v1936 = vlaneseq
        %v1937 = vshrl.u32 %v1936, 7
        %v1938 = vsub.s32 %v1935, %v1937
        %v1939 = vrot.slane %v1925, %v1938
        %v1940 = vcombine.low %v1932, %v1939
        %v1942 = vunpack.c.l.s4 1935823168
        %v1943 = vunpack.c.0.s8 %v1942
        %v1944 = vlaneseq
        %v1945 = vshrl.u32 %v1944, 7
        %v1946 = vsub.s32 %v1943, %v1945
        %v1947 = vrot.slane %v1940, %v1946
        %v1948 = vcombine.low %v1524, %v1546
        %v1949 = vcombine.low %v1538, %v1548
        %v1951 = vunpack.c.l.s4 1935823168
        %v1952 = vunpack.c.0.s8 %v1951
        %v1953 = vlaneseq
        %v1954 = vshrl.u32 %v1953, 7
        %v1955 = vsub.s32 %v1952, %v1954
        %v1956 = vrot.slane %v1948, %v1955
        %v1958 = vunpack.c.l.s4 1935823168
        %v1959 = vunpack.c.0.s8 %v1958
        %v1960 = vlaneseq
        %v1961 = vshrl.u32 %v1960, 7
        %v1962 = vsub.s32 %v1959, %v1961
        %v1963 = vrot.slane %v1949, %v1962
        %v1964 = vcombine.low %v1956, %v1963
        %v1966 = vunpack.c.l.s4 1935823168
        %v1967 = vunpack.c.0.s8 %v1966
        %v1968 = vlaneseq
        %v1969 = vshrl.u32 %v1968, 7
        %v1970 = vsub.s32 %v1967, %v1969
        %v1971 = vrot.slane %v1964, %v1970
        %v1972 = vcombine.low %v1531, %v1547
        %v1973 = vcombine.low %v1545, %v1549
        %v1975 = vunpack.c.l.s4 1935823168
        %v1976 = vunpack.c.0.s8 %v1975
        %v1977 = vlaneseq
        %v1978 = vshrl.u32 %v1977, 7
        %v1979 = vsub.s32 %v1976, %v1978
        %v1980 = vrot.slane %v1972, %v1979
        %v1982 = vunpack.c.l.s4 1935823168
        %v1983 = vunpack.c.0.s8 %v1982
        %v1984 = vlaneseq
        %v1985 = vshrl.u32 %v1984, 7
        %v1986 = vsub.s32 %v1983, %v1985
        %v1987 = vrot.slane %v1973, %v1986
        %v1988 = vcombine.low %v1980, %v1987
        %v1990 = vunpack.c.l.s4 1935823168
        %v1991 = vunpack.c.0.s8 %v1990
        %v1992 = vlaneseq
        %v1993 = vshrl.u32 %v1992, 7
        %v1994 = vsub.s32 %v1991, %v1993
        %v1995 = vrot.slane %v1988, %v1994
        %v1997 = vunpack.c.l.s4 1935823168
        %v1998 = vunpack.c.0.s8 %v1997
        %v1999 = vlaneseq
        %v2000 = vshrl.u32 %v1999, 7
        %v2001 = vsub.s32 %v1998, %v2000
        %v2002 = vrot.slane %v1563, %v2001
        %v2004 = vunpack.c.l.s4 1935823168
        %v2005 = vunpack.c.0.s8 %v2004
        %v2006 = vlaneseq
        %v2007 = vshrl.u32 %v2006, 7
        %v2008 = vsub.s32 %v2005, %v2007
        %v2009 = vrot.slane %v2002, %v2008
        %2029 = vst [vmem:[#allocation2 + $0x8] sm:$0xe] %v1587
        %2030 = vst [vmem:[#allocation2 + $0xc] sm:$0xf] %v1611
        %2031 = vst [vmem:[#allocation2 + $0x10] sm:$0xf] %v1635
        %2032 = vst [vmem:[#allocation2 + $0x14] sm:$0xf] %v1659
        %2033 = vst [vmem:[#allocation2 + $0x18] sm:$0xf] %v1683
        %2034 = vst [vmem:[#allocation2 + $0x1c] sm:$0xf] %v1707
        %2035 = vst [vmem:[#allocation2 + $0x20] sm:$0xf] %v1731
        %2036 = vst [vmem:[#allocation2 + $0x24] sm:$0xf] %v1755
        %2037 = vst [vmem:[#allocation2 + $0x28] sm:$0xf] %v1779
        %2038 = vst [vmem:[#allocation2 + $0x2c] sm:$0xf] %v1803
        %2039 = vst [vmem:[#allocation2 + $0x30] sm:$0xf] %v1827
        %2040 = vst [vmem:[#allocation2 + $0x34] sm:$0xf] %v1851
        %2041 = vst [vmem:[#allocation2 + $0x38] sm:$0xf] %v1875
        %2042 = vst [vmem:[#allocation2 + $0x3c] sm:$0xf] %v1899
        %2043 = vst [vmem:[#allocation2 + $0x40] sm:$0xf] %v1923
        %2044 = vst [vmem:[#allocation2 + $0x44] sm:$0xf] %v1947
        %2045 = vst [vmem:[#allocation2 + $0x48] sm:$0xf] %v1971
        %2046 = vst [vmem:[#allocation2 + $0x4c] sm:$0xf] %v1995
        %2047 = vst [vmem:[#allocation2 + $0x50] sm:$0x1] %v2009
        %v2049 = vshrl.u32 %v927, 16
        %v2051 = vrot.slane %v2049, 7
        %v2052 = vshll.u32 %v927, 16
        %v2054 = vor.u32 %v2051, %v2052
        %v2057 = vsel %vm939, 0, %v2054
        %v2058 = vsel %vm939, %v2051, 0
        %v2061 = vunpack.c.l.b16 %v2057
        %v2062 = vunpack.c.h.b16 %v2057
        %v2063 = vunpack.c.l.b16 %v2058
        %v2064 = vpack.c.b16 %v2061, %v2061
        %v2065 = vpack.c.b16 %v2062, %v2062
        %v2066 = vpack.c.b16 %v2063, %v2063
        %vm2067 = vcmask 1044484
        %vm2068 = vmor %vm937, %vm2067
        %v2069 = vrot.slane %v2064, 7
        %v2070 = vrot.slane %v2069, 4
        %v2071 = vrot.slane %v2065, 7
        %v2072 = vsel %vm2068, %v2070, %v2071
        %v2073 = vrot.slane %v2071, 4
        %v2074 = vrot.slane %v2066, 7
        %v2075 = vsel %vm2068, %v2073, %v2074
        %2079 = vst [vmem:[#allocation2 + $0x50] sm:$0xe] %v2069
        %2080 = vst [vmem:[#allocation2 + $0x54] sm:$0xf] %v2072
        %2081 = vst [vmem:[#allocation2 + $0x58] sm:$0x3] %v2075
        %2082 = vst [vmem:[#allocation2 + $0x58] sm:$0x4] 0
        %p2083 = scmp.eq.s32.totalorder %s46, 0
        // Predicated region
        $region81: #{tpu_custom_call.1} parent=55 // pred_check
          %p2084 = pneg %p2083
        $region82: #{tpu_custom_call.1} parent=55 // pred_check_branch
          %2086 = sbr.rel (%p2084) target = $region84
        $region83: #{tpu_custom_call.1} parent=55 // pred_region
          %2087 = vst [vmem:[#allocation2] sm:$0xf] 0
          %2088 = vst [vmem:[#allocation2 + $0x4] sm:$0xf] 0
          %2089 = vst [vmem:[#allocation2 + $0x8] sm:$0x1] 0
        $region84: #{tpu_custom_call.1} parent=55 // pred_fallthru
          _
        %p2090 = scmp.eq.s32.totalorder %s46, 1
        // Predicated region
        $region85: #{tpu_custom_call.1} parent=55 // pred_check
          %p2091 = pneg %p2090
        $region86: #{tpu_custom_call.1} parent=55 // pred_check_branch
          %2093 = sbr.rel (%p2091) target = $region88
        $region87: #{tpu_custom_call.1} parent=55 // pred_region
          %2094 = vst [vmem:[#allocation2 + $0x50] sm:$0xe] 0
          %2095 = vst [vmem:[#allocation2 + $0x54] sm:$0xf] 0
          %2096 = vst [vmem:[#allocation2 + $0x58] sm:$0x3] 0
        $region88: #{tpu_custom_call.1} parent=55 // pred_fallthru
          _
        %v2097 = vld [vmem:[#allocation2] sm:$0xf]
        %v2098 = vld [vmem:[#allocation2 + $0x4] sm:$0xf]
        %v2099 = vld [vmem:[#allocation2 + $0x8] sm:$0xf]
        %v2100 = vld [vmem:[#allocation2 + $0xc] sm:$0xf]
        %v2101 = vld [vmem:[#allocation2 + $0x10] sm:$0xf]
        %v2102 = vld [vmem:[#allocation2 + $0x14] sm:$0xf]
        %v2103 = vld [vmem:[#allocation2 + $0x18] sm:$0xf]
        %v2104 = vld [vmem:[#allocation2 + $0x1c] sm:$0xf]
        %v2105 = vld [vmem:[#allocation2 + $0x20] sm:$0xf]
        %v2106 = vld [vmem:[#allocation2 + $0x24] sm:$0xf]
        %v2107 = vld [vmem:[#allocation2 + $0x28] sm:$0xf]
        %v2108 = vld [vmem:[#allocation2 + $0x2c] sm:$0xf]
        %v2109 = vld [vmem:[#allocation2 + $0x30] sm:$0xf]
        %v2110 = vld [vmem:[#allocation2 + $0x34] sm:$0xf]
        %v2111 = vld [vmem:[#allocation2 + $0x38] sm:$0xf]
        %v2112 = vld [vmem:[#allocation2 + $0x3c] sm:$0xf]
        %v2113 = vld [vmem:[#allocation2 + $0x40] sm:$0xf]
        %v2114 = vld [vmem:[#allocation2 + $0x44] sm:$0xf]
        %v2133 = vunpack.c.l.b16 %v2097
        %v2134 = vunpack.c.l.b16 %v2098
        %v2135 = vunpack.c.l.b16 %v2099
        %v2136 = vunpack.c.l.b16 %v2100
        %v2137 = vunpack.c.l.b16 %v2101
        %v2138 = vunpack.c.l.b16 %v2102
        %v2139 = vunpack.c.l.b16 %v2103
        %v2140 = vunpack.c.l.b16 %v2104
        %v2141 = vunpack.c.l.b16 %v2105
        %v2142 = vunpack.c.l.b16 %v2106
        %v2143 = vunpack.c.l.b16 %v2107
        %v2144 = vunpack.c.l.b16 %v2108
        %v2145 = vunpack.c.l.b16 %v2109
        %v2146 = vunpack.c.l.b16 %v2110
        %v2147 = vunpack.c.l.b16 %v2111
        %v2148 = vunpack.c.l.b16 %v2112
        %v2149 = vunpack.c.l.b16 %v2113
        %v2150 = vunpack.c.l.b16 %v2114
        %v2151 = vpack.c.b16 %v2134, %v2133
        %v2152 = vpack.c.b16 %v2136, %v2135
        %v2153 = vpack.c.b16 %v2138, %v2137
        %v2154 = vpack.c.b16 %v2140, %v2139
        %v2155 = vpack.c.b16 %v2142, %v2141
        %v2156 = vpack.c.b16 %v2144, %v2143
        %v2157 = vpack.c.b16 %v2146, %v2145
        %v2158 = vpack.c.b16 %v2148, %v2147
        %v2159 = vpack.c.b16 %v2150, %v2149
        %2169 = vst [vmem:[#allocation3] sm:$0xff] %v2151
        %2170 = vst [vmem:[#allocation3 + $0x48] sm:$0xff] %v2152
        %2171 = vst [vmem:[#allocation3 + $0x90] sm:$0xff] %v2153
        %2172 = vst [vmem:[#allocation3 + $0xd8] sm:$0xff] %v2154
        %2173 = vst [vmem:[#allocation3 + $0x120] sm:$0xff] %v2155
        %2174 = vst [vmem:[#allocation3 + $0x168] sm:$0xff] %v2156
        %2175 = vst [vmem:[#allocation3 + $0x1b0] sm:$0xff] %v2157
        %2176 = vst [vmem:[#allocation3 + $0x1f8] sm:$0xff] %v2158
        %2177 = vst [vmem:[#allocation3 + $0x240] sm:$0xff] %v2159
        %v2178 = vld [vmem:[#allocation2] sm:$0xf]
        %v2179 = vld [vmem:[#allocation2 + $0x4] sm:$0xf]
        %v2180 = vld [vmem:[#allocation2 + $0x8] sm:$0xf]
        %v2181 = vld [vmem:[#allocation2 + $0xc] sm:$0xf]
        %v2182 = vld [vmem:[#allocation2 + $0x10] sm:$0xf]
        %v2183 = vld [vmem:[#allocation2 + $0x14] sm:$0xf]
        %v2184 = vld [vmem:[#allocation2 + $0x18] sm:$0xf]
        %v2185 = vld [vmem:[#allocation2 + $0x1c] sm:$0xf]
        %v2186 = vld [vmem:[#allocation2 + $0x20] sm:$0xf]
        %v2187 = vld [vmem:[#allocation2 + $0x24] sm:$0xf]
        %v2188 = vld [vmem:[#allocation2 + $0x28] sm:$0xf]
        %v2189 = vld [vmem:[#allocation2 + $0x2c] sm:$0xf]
        %v2190 = vld [vmem:[#allocation2 + $0x30] sm:$0xf]
        %v2191 = vld [vmem:[#allocation2 + $0x34] sm:$0xf]
        %v2192 = vld [vmem:[#allocation2 + $0x38] sm:$0xf]
        %v2193 = vld [vmem:[#allocation2 + $0x3c] sm:$0xf]
        %v2194 = vld [vmem:[#allocation2 + $0x40] sm:$0xf]
        %v2195 = vld [vmem:[#allocation2 + $0x44] sm:$0xf]
        %v2196 = vld [vmem:[#allocation2 + $0x48] sm:$0x1]
        %v2216 = vunpack.c.l.b16 %v2178
        %v2217 = vunpack.c.l.b16 %v2179
        %v2218 = vunpack.c.l.b16 %v2180
        %v2219 = vunpack.c.l.b16 %v2181
        %v2220 = vunpack.c.l.b16 %v2182
        %v2221 = vunpack.c.l.b16 %v2183
        %v2222 = vunpack.c.l.b16 %v2184
        %v2223 = vunpack.c.l.b16 %v2185
        %v2224 = vunpack.c.l.b16 %v2186
        %v2225 = vunpack.c.l.b16 %v2187
        %v2226 = vunpack.c.l.b16 %v2188
        %v2227 = vunpack.c.l.b16 %v2189
        %v2228 = vunpack.c.l.b16 %v2190
        %v2229 = vunpack.c.l.b16 %v2191
        %v2230 = vunpack.c.l.b16 %v2192
        %v2231 = vunpack.c.l.b16 %v2193
        %v2232 = vunpack.c.l.b16 %v2194
        %v2233 = vunpack.c.l.b16 %v2195
        %v2234 = vunpack.c.l.b16 %v2196
        %v2235 = vpack.c.b16 %v2217, %v2216
        %v2236 = vpack.c.b16 %v2219, %v2218
        %v2237 = vpack.c.b16 %v2221, %v2220
        %v2238 = vpack.c.b16 %v2223, %v2222
        %v2239 = vpack.c.b16 %v2225, %v2224
        %v2240 = vpack.c.b16 %v2227, %v2226
        %v2241 = vpack.c.b16 %v2229, %v2228
        %v2242 = vpack.c.b16 %v2231, %v2230
        %v2243 = vpack.c.b16 %v2233, %v2232
        %v2244 = vpack.c.b16 %v2234, %v2234
        %vm2245 = vsmask.f32 7424
        %v2247 = vshrl.u32 %v2235, 16
        %v2249 = vshll.u32 %v2235, 16
        %v2251 = vrot.slane %v2249, 1
        %v2252 = vor.u32 %v2247, %v2251
        %v2254 = vshll.u32 %v2236, 16
        %v2256 = vrot.slane %v2254, 1
        %v2257 = vsel %vm2245, %v2252, %v2256
        %v2258 = vshrl.u32 %v2236, 16
        %v2260 = vor.u32 %v2258, %v2256
        %v2262 = vshll.u32 %v2237, 16
        %v2264 = vrot.slane %v2262, 1
        %v2265 = vsel %vm2245, %v2260, %v2264
        %v2266 = vshrl.u32 %v2237, 16
        %v2268 = vor.u32 %v2266, %v2264
        %v2270 = vshll.u32 %v2238, 16
        %v2272 = vrot.slane %v2270, 1
        %v2273 = vsel %vm2245, %v2268, %v2272
        %v2274 = vshrl.u32 %v2238, 16
        %v2276 = vor.u32 %v2274, %v2272
        %v2278 = vshll.u32 %v2239, 16
        %v2280 = vrot.slane %v2278, 1
        %v2281 = vsel %vm2245, %v2276, %v2280
        %v2282 = vshrl.u32 %v2239, 16
        %v2284 = vor.u32 %v2282, %v2280
        %v2286 = vshll.u32 %v2240, 16
        %v2288 = vrot.slane %v2286, 1
        %v2289 = vsel %vm2245, %v2284, %v2288
        %v2290 = vshrl.u32 %v2240, 16
        %v2292 = vor.u32 %v2290, %v2288
        %v2294 = vshll.u32 %v2241, 16
        %v2296 = vrot.slane %v2294, 1
        %v2297 = vsel %vm2245, %v2292, %v2296
        %v2298 = vshrl.u32 %v2241, 16
        %v2300 = vor.u32 %v2298, %v2296
        %v2302 = vshll.u32 %v2242, 16
        %v2304 = vrot.slane %v2302, 1
        %v2305 = vsel %vm2245, %v2300, %v2304
        %v2306 = vshrl.u32 %v2242, 16
        %v2308 = vor.u32 %v2306, %v2304
        %v2310 = vshll.u32 %v2243, 16
        %v2312 = vrot.slane %v2310, 1
        %v2313 = vsel %vm2245, %v2308, %v2312
        %v2314 = vshrl.u32 %v2243, 16
        %v2316 = vor.u32 %v2314, %v2312
        %v2318 = vshll.u32 %v2244, 16
        %v2320 = vrot.slane %v2318, 1
        %v2321 = vsel %vm2245, %v2316, %v2320
        %2331 = vst [vmem:[#allocation3 + $0x8] sm:$0xff] %v2257
        %2332 = vst [vmem:[#allocation3 + $0x50] sm:$0xff] %v2265
        %2333 = vst [vmem:[#allocation3 + $0x98] sm:$0xff] %v2273
        %2334 = vst [vmem:[#allocation3 + $0xe0] sm:$0xff] %v2281
        %2335 = vst [vmem:[#allocation3 + $0x128] sm:$0xff] %v2289
        %2336 = vst [vmem:[#allocation3 + $0x170] sm:$0xff] %v2297
        %2337 = vst [vmem:[#allocation3 + $0x1b8] sm:$0xff] %v2305
        %2338 = vst [vmem:[#allocation3 + $0x200] sm:$0xff] %v2313
        %2339 = vst [vmem:[#allocation3 + $0x248] sm:$0xff] %v2321
        %v2340 = vld [vmem:[#allocation2] sm:$0xe]
        %v2341 = vld [vmem:[#allocation2 + $0x4] sm:$0xf]
        %v2342 = vld [vmem:[#allocation2 + $0x8] sm:$0xf]
        %v2343 = vld [vmem:[#allocation2 + $0xc] sm:$0xf]
        %v2344 = vld [vmem:[#allocation2 + $0x10] sm:$0xf]
        %v2345 = vld [vmem:[#allocation2 + $0x14] sm:$0xf]
        %v2346 = vld [vmem:[#allocation2 + $0x18] sm:$0xf]
        %v2347 = vld [vmem:[#allocation2 + $0x1c] sm:$0xf]
        %v2348 = vld [vmem:[#allocation2 + $0x20] sm:$0xf]
        %v2349 = vld [vmem:[#allocation2 + $0x24] sm:$0xf]
        %v2350 = vld [vmem:[#allocation2 + $0x28] sm:$0xf]
        %v2351 = vld [vmem:[#allocation2 + $0x2c] sm:$0xf]
        %v2352 = vld [vmem:[#allocation2 + $0x30] sm:$0xf]
        %v2353 = vld [vmem:[#allocation2 + $0x34] sm:$0xf]
        %v2354 = vld [vmem:[#allocation2 + $0x38] sm:$0xf]
        %v2355 = vld [vmem:[#allocation2 + $0x3c] sm:$0xf]
        %v2356 = vld [vmem:[#allocation2 + $0x40] sm:$0xf]
        %v2357 = vld [vmem:[#allocation2 + $0x44] sm:$0xf]
        %v2358 = vld [vmem:[#allocation2 + $0x48] sm:$0x1]
        %v2378 = vunpack.c.l.b16 %v2340
        %v2379 = vunpack.c.l.b16 %v2341
        %v2380 = vunpack.c.l.b16 %v2342
        %v2381 = vunpack.c.l.b16 %v2343
        %v2382 = vunpack.c.l.b16 %v2344
        %v2383 = vunpack.c.l.b16 %v2345
        %v2384 = vunpack.c.l.b16 %v2346
        %v2385 = vunpack.c.l.b16 %v2347
        %v2386 = vunpack.c.l.b16 %v2348
        %v2387 = vunpack.c.l.b16 %v2349
        %v2388 = vunpack.c.l.b16 %v2350
        %v2389 = vunpack.c.l.b16 %v2351
        %v2390 = vunpack.c.l.b16 %v2352
        %v2391 = vunpack.c.l.b16 %v2353
        %v2392 = vunpack.c.l.b16 %v2354
        %v2393 = vunpack.c.l.b16 %v2355
        %v2394 = vunpack.c.l.b16 %v2356
        %v2395 = vunpack.c.l.b16 %v2357
        %v2396 = vunpack.c.l.b16 %v2358
        %v2397 = vpack.c.b16 %v2379, %v2378
        %v2398 = vpack.c.b16 %v2381, %v2380
        %v2399 = vpack.c.b16 %v2383, %v2382
        %v2400 = vpack.c.b16 %v2385, %v2384
        %v2401 = vpack.c.b16 %v2387, %v2386
        %v2402 = vpack.c.b16 %v2389, %v2388
        %v2403 = vpack.c.b16 %v2391, %v2390
        %v2404 = vpack.c.b16 %v2393, %v2392
        %v2405 = vpack.c.b16 %v2395, %v2394
        %v2406 = vpack.c.b16 %v2396, %v2396
        %vm2407 = vcmask 1046528
        %v2408 = vrot.slane %v2397, 1
        %v2409 = vrot.slane %v2398, 1
        %v2410 = vsel %vm2407, %v2408, %v2409
        %v2411 = vrot.slane %v2399, 1
        %v2412 = vsel %vm2407, %v2409, %v2411
        %v2413 = vrot.slane %v2400, 1
        %v2414 = vsel %vm2407, %v2411, %v2413
        %v2415 = vrot.slane %v2401, 1
        %v2416 = vsel %vm2407, %v2413, %v2415
        %v2417 = vrot.slane %v2402, 1
        %v2418 = vsel %vm2407, %v2415, %v2417
        %v2419 = vrot.slane %v2403, 1
        %v2420 = vsel %vm2407, %v2417, %v2419
        %v2421 = vrot.slane %v2404, 1
        %v2422 = vsel %vm2407, %v2419, %v2421
        %v2423 = vrot.slane %v2405, 1
        %v2424 = vsel %vm2407, %v2421, %v2423
        %v2425 = vrot.slane %v2406, 1
        %v2426 = vsel %vm2407, %v2423, %v2425
        %2436 = vst [vmem:[#allocation3 + $0x10] sm:$0xff] %v2410
        %2437 = vst [vmem:[#allocation3 + $0x58] sm:$0xff] %v2412
        %2438 = vst [vmem:[#allocation3 + $0xa0] sm:$0xff] %v2414
        %2439 = vst [vmem:[#allocation3 + $0xe8] sm:$0xff] %v2416
        %2440 = vst [vmem:[#allocation3 + $0x130] sm:$0xff] %v2418
        %2441 = vst [vmem:[#allocation3 + $0x178] sm:$0xff] %v2420
        %2442 = vst [vmem:[#allocation3 + $0x1c0] sm:$0xff] %v2422
        %2443 = vst [vmem:[#allocation3 + $0x208] sm:$0xff] %v2424
        %2444 = vst [vmem:[#allocation3 + $0x250] sm:$0xff] %v2426
        %v2445 = vld [vmem:[#allocation2 + $0x8] sm:$0xe]
        %v2446 = vld [vmem:[#allocation2 + $0xc] sm:$0xf]
        %v2447 = vld [vmem:[#allocation2 + $0x10] sm:$0xf]
        %v2448 = vld [vmem:[#allocation2 + $0x14] sm:$0xf]
        %v2449 = vld [vmem:[#allocation2 + $0x18] sm:$0xf]
        %v2450 = vld [vmem:[#allocation2 + $0x1c] sm:$0xf]
        %v2451 = vld [vmem:[#allocation2 + $0x20] sm:$0xf]
        %v2452 = vld [vmem:[#allocation2 + $0x24] sm:$0xf]
        %v2453 = vld [vmem:[#allocation2 + $0x28] sm:$0xf]
        %v2454 = vld [vmem:[#allocation2 + $0x2c] sm:$0xf]
        %v2455 = vld [vmem:[#allocation2 + $0x30] sm:$0xf]
        %v2456 = vld [vmem:[#allocation2 + $0x34] sm:$0xf]
        %v2457 = vld [vmem:[#allocation2 + $0x38] sm:$0xf]
        %v2458 = vld [vmem:[#allocation2 + $0x3c] sm:$0xf]
        %v2459 = vld [vmem:[#allocation2 + $0x40] sm:$0xf]
        %v2460 = vld [vmem:[#allocation2 + $0x44] sm:$0xf]
        %v2461 = vld [vmem:[#allocation2 + $0x48] sm:$0xf]
        %v2462 = vld [vmem:[#allocation2 + $0x4c] sm:$0xf]
        %v2463 = vld [vmem:[#allocation2 + $0x50] sm:$0x1]
        %v2483 = vunpack.c.l.b16 %v2445
        %v2484 = vunpack.c.l.b16 %v2446
        %v2485 = vunpack.c.l.b16 %v2447
        %v2486 = vunpack.c.l.b16 %v2448
        %v2487 = vunpack.c.l.b16 %v2449
        %v2488 = vunpack.c.l.b16 %v2450
        %v2489 = vunpack.c.l.b16 %v2451
        %v2490 = vunpack.c.l.b16 %v2452
        %v2491 = vunpack.c.l.b16 %v2453
        %v2492 = vunpack.c.l.b16 %v2454
        %v2493 = vunpack.c.l.b16 %v2455
        %v2494 = vunpack.c.l.b16 %v2456
        %v2495 = vunpack.c.l.b16 %v2457
        %v2496 = vunpack.c.l.b16 %v2458
        %v2497 = vunpack.c.l.b16 %v2459
        %v2498 = vunpack.c.l.b16 %v2460
        %v2499 = vunpack.c.l.b16 %v2461
        %v2500 = vunpack.c.l.b16 %v2462
        %v2501 = vunpack.c.l.b16 %v2463
        %v2502 = vpack.c.b16 %v2484, %v2483
        %v2503 = vpack.c.b16 %v2486, %v2485
        %v2504 = vpack.c.b16 %v2488, %v2487
        %v2505 = vpack.c.b16 %v2490, %v2489
        %v2506 = vpack.c.b16 %v2492, %v2491
        %v2507 = vpack.c.b16 %v2494, %v2493
        %v2508 = vpack.c.b16 %v2496, %v2495
        %v2509 = vpack.c.b16 %v2498, %v2497
        %v2510 = vpack.c.b16 %v2500, %v2499
        %v2511 = vpack.c.b16 %v2501, %v2501
        %v2512 = vrot.slane %v2502, 1
        %v2513 = vrot.slane %v2503, 1
        %v2514 = vsel %vm2407, %v2512, %v2513
        %v2515 = vrot.slane %v2504, 1
        %v2516 = vsel %vm2407, %v2513, %v2515
        %v2517 = vrot.slane %v2505, 1
        %v2518 = vsel %vm2407, %v2515, %v2517
        %v2519 = vrot.slane %v2506, 1
        %v2520 = vsel %vm2407, %v2517, %v2519
        %v2521 = vrot.slane %v2507, 1
        %v2522 = vsel %vm2407, %v2519, %v2521
        %v2523 = vrot.slane %v2508, 1
        %v2524 = vsel %vm2407, %v2521, %v2523
        %v2525 = vrot.slane %v2509, 1
        %v2526 = vsel %vm2407, %v2523, %v2525
        %v2527 = vrot.slane %v2510, 1
        %v2528 = vsel %vm2407, %v2525, %v2527
        %v2529 = vrot.slane %v2511, 1
        %v2530 = vsel %vm2407, %v2527, %v2529
        %2540 = vst [vmem:[#allocation3 + $0x18] sm:$0xff] %v2514
        %2541 = vst [vmem:[#allocation3 + $0x60] sm:$0xff] %v2516
        %2542 = vst [vmem:[#allocation3 + $0xa8] sm:$0xff] %v2518
        %2543 = vst [vmem:[#allocation3 + $0xf0] sm:$0xff] %v2520
        %2544 = vst [vmem:[#allocation3 + $0x138] sm:$0xff] %v2522
        %2545 = vst [vmem:[#allocation3 + $0x180] sm:$0xff] %v2524
        %2546 = vst [vmem:[#allocation3 + $0x1c8] sm:$0xff] %v2526
        %2547 = vst [vmem:[#allocation3 + $0x210] sm:$0xff] %v2528
        %2548 = vst [vmem:[#allocation3 + $0x258] sm:$0xff] %v2530
        %v2549 = vld [vmem:[#allocation2 + $0x8] sm:$0xe]
        %v2550 = vld [vmem:[#allocation2 + $0xc] sm:$0xf]
        %v2551 = vld [vmem:[#allocation2 + $0x10] sm:$0xf]
        %v2552 = vld [vmem:[#allocation2 + $0x14] sm:$0xf]
        %v2553 = vld [vmem:[#allocation2 + $0x18] sm:$0xf]
        %v2554 = vld [vmem:[#allocation2 + $0x1c] sm:$0xf]
        %v2555 = vld [vmem:[#allocation2 + $0x20] sm:$0xf]
        %v2556 = vld [vmem:[#allocation2 + $0x24] sm:$0xf]
        %v2557 = vld [vmem:[#allocation2 + $0x28] sm:$0xf]
        %v2558 = vld [vmem:[#allocation2 + $0x2c] sm:$0xf]
        %v2559 = vld [vmem:[#allocation2 + $0x30] sm:$0xf]
        %v2560 = vld [vmem:[#allocation2 + $0x34] sm:$0xf]
        %v2561 = vld [vmem:[#allocation2 + $0x38] sm:$0xf]
        %v2562 = vld [vmem:[#allocation2 + $0x3c] sm:$0xf]
        %v2563 = vld [vmem:[#allocation2 + $0x40] sm:$0xf]
        %v2564 = vld [vmem:[#allocation2 + $0x44] sm:$0xf]
        %v2565 = vld [vmem:[#allocation2 + $0x48] sm:$0xf]
        %v2566 = vld [vmem:[#allocation2 + $0x4c] sm:$0xf]
        %v2567 = vld [vmem:[#allocation2 + $0x50] sm:$0x3]
        %v2587 = vunpack.c.l.b16 %v2549
        %v2588 = vunpack.c.l.b16 %v2550
        %v2589 = vunpack.c.l.b16 %v2551
        %v2590 = vunpack.c.l.b16 %v2552
        %v2591 = vunpack.c.l.b16 %v2553
        %v2592 = vunpack.c.l.b16 %v2554
        %v2593 = vunpack.c.l.b16 %v2555
        %v2594 = vunpack.c.l.b16 %v2556
        %v2595 = vunpack.c.l.b16 %v2557
        %v2596 = vunpack.c.l.b16 %v2558
        %v2597 = vunpack.c.l.b16 %v2559
        %v2598 = vunpack.c.l.b16 %v2560
        %v2599 = vunpack.c.l.b16 %v2561
        %v2600 = vunpack.c.l.b16 %v2562
        %v2601 = vunpack.c.l.b16 %v2563
        %v2602 = vunpack.c.l.b16 %v2564
        %v2603 = vunpack.c.l.b16 %v2565
        %v2604 = vunpack.c.l.b16 %v2566
        %v2605 = vunpack.c.l.b16 %v2567
        %v2606 = vpack.c.b16 %v2588, %v2587
        %v2607 = vpack.c.b16 %v2590, %v2589
        %v2608 = vpack.c.b16 %v2592, %v2591
        %v2609 = vpack.c.b16 %v2594, %v2593
        %v2610 = vpack.c.b16 %v2596, %v2595
        %v2611 = vpack.c.b16 %v2598, %v2597
        %v2612 = vpack.c.b16 %v2600, %v2599
        %v2613 = vpack.c.b16 %v2602, %v2601
        %v2614 = vpack.c.b16 %v2604, %v2603
        %v2615 = vpack.c.b16 %v2605, %v2605
        %vm2616 = vsmask.f32 6400
        %v2618 = vshrl.u32 %v2606, 16
        %v2620 = vrot.slane %v2618, 1
        %v2621 = vshll.u32 %v2606, 16
        %v2623 = vrot.slane %v2621, 2
        %v2624 = vor.u32 %v2620, %v2623
        %v2626 = vshrl.u32 %v2607, 16
        %v2628 = vrot.slane %v2626, 1
        %v2629 = vshll.u32 %v2607, 16
        %v2631 = vrot.slane %v2629, 2
        %v2632 = vor.u32 %v2628, %v2631
        %v2633 = vsel %vm2616, %v2624, %v2632
        %v2635 = vshrl.u32 %v2608, 16
        %v2637 = vrot.slane %v2635, 1
        %v2638 = vshll.u32 %v2608, 16
        %v2640 = vrot.slane %v2638, 2
        %v2641 = vor.u32 %v2637, %v2640
        %v2642 = vsel %vm2616, %v2632, %v2641
        %v2644 = vshrl.u32 %v2609, 16
        %v2646 = vrot.slane %v2644, 1
        %v2647 = vshll.u32 %v2609, 16
        %v2649 = vrot.slane %v2647, 2
        %v2650 = vor.u32 %v2646, %v2649
        %v2651 = vsel %vm2616, %v2641, %v2650
        %v2653 = vshrl.u32 %v2610, 16
        %v2655 = vrot.slane %v2653, 1
        %v2656 = vshll.u32 %v2610, 16
        %v2658 = vrot.slane %v2656, 2
        %v2659 = vor.u32 %v2655, %v2658
        %v2660 = vsel %vm2616, %v2650, %v2659
        %v2662 = vshrl.u32 %v2611, 16
        %v2664 = vrot.slane %v2662, 1
        %v2665 = vshll.u32 %v2611, 16
        %v2667 = vrot.slane %v2665, 2
        %v2668 = vor.u32 %v2664, %v2667
        %v2669 = vsel %vm2616, %v2659, %v2668
        %v2671 = vshrl.u32 %v2612, 16
        %v2673 = vrot.slane %v2671, 1
        %v2674 = vshll.u32 %v2612, 16
        %v2676 = vrot.slane %v2674, 2
        %v2677 = vor.u32 %v2673, %v2676
        %v2678 = vsel %vm2616, %v2668, %v2677
        %v2680 = vshrl.u32 %v2613, 16
        %v2682 = vrot.slane %v2680, 1
        %v2683 = vshll.u32 %v2613, 16
        %v2685 = vrot.slane %v2683, 2
        %v2686 = vor.u32 %v2682, %v2685
        %v2687 = vsel %vm2616, %v2677, %v2686
        %v2689 = vshrl.u32 %v2614, 16
        %v2691 = vrot.slane %v2689, 1
        %v2692 = vshll.u32 %v2614, 16
        %v2694 = vrot.slane %v2692, 2
        %v2695 = vor.u32 %v2691, %v2694
        %v2696 = vsel %vm2616, %v2686, %v2695
        %v2698 = vshrl.u32 %v2615, 16
        %v2700 = vrot.slane %v2698, 1
        %v2701 = vshll.u32 %v2615, 16
        %v2703 = vrot.slane %v2701, 2
        %v2704 = vor.u32 %v2700, %v2703
        %v2705 = vsel %vm2616, %v2695, %v2704
        %2715 = vst [vmem:[#allocation3 + $0x20] sm:$0xff] %v2633
        %2716 = vst [vmem:[#allocation3 + $0x68] sm:$0xff] %v2642
        %2717 = vst [vmem:[#allocation3 + $0xb0] sm:$0xff] %v2651
        %2718 = vst [vmem:[#allocation3 + $0xf8] sm:$0xff] %v2660
        %2719 = vst [vmem:[#allocation3 + $0x140] sm:$0xff] %v2669
        %2720 = vst [vmem:[#allocation3 + $0x188] sm:$0xff] %v2678
        %2721 = vst [vmem:[#allocation3 + $0x1d0] sm:$0xff] %v2687
        %2722 = vst [vmem:[#allocation3 + $0x218] sm:$0xff] %v2696
        %2723 = vst [vmem:[#allocation3 + $0x260] sm:$0xff] %v2705
        %v2724 = vld [vmem:[#allocation2 + $0x8] sm:$0xc]
        %v2725 = vld [vmem:[#allocation2 + $0xc] sm:$0xf]
        %v2726 = vld [vmem:[#allocation2 + $0x10] sm:$0xf]
        %v2727 = vld [vmem:[#allocation2 + $0x14] sm:$0xf]
        %v2728 = vld [vmem:[#allocation2 + $0x18] sm:$0xf]
        %v2729 = vld [vmem:[#allocation2 + $0x1c] sm:$0xf]
        %v2730 = vld [vmem:[#allocation2 + $0x20] sm:$0xf]
        %v2731 = vld [vmem:[#allocation2 + $0x24] sm:$0xf]
        %v2732 = vld [vmem:[#allocation2 + $0x28] sm:$0xf]
        %v2733 = vld [vmem:[#allocation2 + $0x2c] sm:$0xf]
        %v2734 = vld [vmem:[#allocation2 + $0x30] sm:$0xf]
        %v2735 = vld [vmem:[#allocation2 + $0x34] sm:$0xf]
        %v2736 = vld [vmem:[#allocation2 + $0x38] sm:$0xf]
        %v2737 = vld [vmem:[#allocation2 + $0x3c] sm:$0xf]
        %v2738 = vld [vmem:[#allocation2 + $0x40] sm:$0xf]
        %v2739 = vld [vmem:[#allocation2 + $0x44] sm:$0xf]
        %v2740 = vld [vmem:[#allocation2 + $0x48] sm:$0xf]
        %v2741 = vld [vmem:[#allocation2 + $0x4c] sm:$0xf]
        %v2742 = vld [vmem:[#allocation2 + $0x50] sm:$0x3]
        %v2762 = vunpack.c.l.b16 %v2724
        %v2763 = vunpack.c.l.b16 %v2725
        %v2764 = vunpack.c.l.b16 %v2726
        %v2765 = vunpack.c.l.b16 %v2727
        %v2766 = vunpack.c.l.b16 %v2728
        %v2767 = vunpack.c.l.b16 %v2729
        %v2768 = vunpack.c.l.b16 %v2730
        %v2769 = vunpack.c.l.b16 %v2731
        %v2770 = vunpack.c.l.b16 %v2732
        %v2771 = vunpack.c.l.b16 %v2733
        %v2772 = vunpack.c.l.b16 %v2734
        %v2773 = vunpack.c.l.b16 %v2735
        %v2774 = vunpack.c.l.b16 %v2736
        %v2775 = vunpack.c.l.b16 %v2737
        %v2776 = vunpack.c.l.b16 %v2738
        %v2777 = vunpack.c.l.b16 %v2739
        %v2778 = vunpack.c.l.b16 %v2740
        %v2779 = vunpack.c.l.b16 %v2741
        %v2780 = vunpack.c.l.b16 %v2742
        %v2781 = vpack.c.b16 %v2763, %v2762
        %v2782 = vpack.c.b16 %v2765, %v2764
        %v2783 = vpack.c.b16 %v2767, %v2766
        %v2784 = vpack.c.b16 %v2769, %v2768
        %v2785 = vpack.c.b16 %v2771, %v2770
        %v2786 = vpack.c.b16 %v2773, %v2772
        %v2787 = vpack.c.b16 %v2775, %v2774
        %v2788 = vpack.c.b16 %v2777, %v2776
        %v2789 = vpack.c.b16 %v2779, %v2778
        %v2790 = vpack.c.b16 %v2780, %v2780
        %vm2791 = vcmask 1045504
        %v2792 = vrot.slane %v2781, 2
        %v2793 = vrot.slane %v2782, 2
        %v2794 = vsel %vm2791, %v2792, %v2793
        %v2795 = vrot.slane %v2783, 2
        %v2796 = vsel %vm2791, %v2793, %v2795
        %v2797 = vrot.slane %v2784, 2
        %v2798 = vsel %vm2791, %v2795, %v2797
        %v2799 = vrot.slane %v2785, 2
        %v2800 = vsel %vm2791, %v2797, %v2799
        %v2801 = vrot.slane %v2786, 2
        %v2802 = vsel %vm2791, %v2799, %v2801
        %v2803 = vrot.slane %v2787, 2
        %v2804 = vsel %vm2791, %v2801, %v2803
        %v2805 = vrot.slane %v2788, 2
        %v2806 = vsel %vm2791, %v2803, %v2805
        %v2807 = vrot.slane %v2789, 2
        %v2808 = vsel %vm2791, %v2805, %v2807
        %v2809 = vrot.slane %v2790, 2
        %v2810 = vsel %vm2791, %v2807, %v2809
        %2820 = vst [vmem:[#allocation3 + $0x28] sm:$0xff] %v2794
        %2821 = vst [vmem:[#allocation3 + $0x70] sm:$0xff] %v2796
        %2822 = vst [vmem:[#allocation3 + $0xb8] sm:$0xff] %v2798
        %2823 = vst [vmem:[#allocation3 + $0x100] sm:$0xff] %v2800
        %2824 = vst [vmem:[#allocation3 + $0x148] sm:$0xff] %v2802
        %2825 = vst [vmem:[#allocation3 + $0x190] sm:$0xff] %v2804
        %2826 = vst [vmem:[#allocation3 + $0x1d8] sm:$0xff] %v2806
        %2827 = vst [vmem:[#allocation3 + $0x220] sm:$0xff] %v2808
        %2828 = vst [vmem:[#allocation3 + $0x268] sm:$0xff] %v2810
        %v2829 = vld [vmem:[#allocation2 + $0x10] sm:$0xc]
        %v2830 = vld [vmem:[#allocation2 + $0x14] sm:$0xf]
        %v2831 = vld [vmem:[#allocation2 + $0x18] sm:$0xf]
        %v2832 = vld [vmem:[#allocation2 + $0x1c] sm:$0xf]
        %v2833 = vld [vmem:[#allocation2 + $0x20] sm:$0xf]
        %v2834 = vld [vmem:[#allocation2 + $0x24] sm:$0xf]
        %v2835 = vld [vmem:[#allocation2 + $0x28] sm:$0xf]
        %v2836 = vld [vmem:[#allocation2 + $0x2c] sm:$0xf]
        %v2837 = vld [vmem:[#allocation2 + $0x30] sm:$0xf]
        %v2838 = vld [vmem:[#allocation2 + $0x34] sm:$0xf]
        %v2839 = vld [vmem:[#allocation2 + $0x38] sm:$0xf]
        %v2840 = vld [vmem:[#allocation2 + $0x3c] sm:$0xf]
        %v2841 = vld [vmem:[#allocation2 + $0x40] sm:$0xf]
        %v2842 = vld [vmem:[#allocation2 + $0x44] sm:$0xf]
        %v2843 = vld [vmem:[#allocation2 + $0x48] sm:$0xf]
        %v2844 = vld [vmem:[#allocation2 + $0x4c] sm:$0xf]
        %v2845 = vld [vmem:[#allocation2 + $0x50] sm:$0xf]
        %v2846 = vld [vmem:[#allocation2 + $0x54] sm:$0xf]
        %v2847 = vld [vmem:[#allocation2 + $0x58] sm:$0x3]
        %v2867 = vunpack.c.l.b16 %v2829
        %v2868 = vunpack.c.l.b16 %v2830
        %v2869 = vunpack.c.l.b16 %v2831
        %v2870 = vunpack.c.l.b16 %v2832
        %v2871 = vunpack.c.l.b16 %v2833
        %v2872 = vunpack.c.l.b16 %v2834
        %v2873 = vunpack.c.l.b16 %v2835
        %v2874 = vunpack.c.l.b16 %v2836
        %v2875 = vunpack.c.l.b16 %v2837
        %v2876 = vunpack.c.l.b16 %v2838
        %v2877 = vunpack.c.l.b16 %v2839
        %v2878 = vunpack.c.l.b16 %v2840
        %v2879 = vunpack.c.l.b16 %v2841
        %v2880 = vunpack.c.l.b16 %v2842
        %v2881 = vunpack.c.l.b16 %v2843
        %v2882 = vunpack.c.l.b16 %v2844
        %v2883 = vunpack.c.l.b16 %v2845
        %v2884 = vunpack.c.l.b16 %v2846
        %v2885 = vunpack.c.l.b16 %v2847
        %v2886 = vpack.c.b16 %v2868, %v2867
        %v2887 = vpack.c.b16 %v2870, %v2869
        %v2888 = vpack.c.b16 %v2872, %v2871
        %v2889 = vpack.c.b16 %v2874, %v2873
        %v2890 = vpack.c.b16 %v2876, %v2875
        %v2891 = vpack.c.b16 %v2878, %v2877
        %v2892 = vpack.c.b16 %v2880, %v2879
        %v2893 = vpack.c.b16 %v2882, %v2881
        %v2894 = vpack.c.b16 %v2884, %v2883
        %v2895 = vpack.c.b16 %v2885, %v2885
        %v2896 = vrot.slane %v2886, 2
        %v2897 = vrot.slane %v2887, 2
        %v2898 = vsel %vm2791, %v2896, %v2897
        %v2899 = vrot.slane %v2888, 2
        %v2900 = vsel %vm2791, %v2897, %v2899
        %v2901 = vrot.slane %v2889, 2
        %v2902 = vsel %vm2791, %v2899, %v2901
        %v2903 = vrot.slane %v2890, 2
        %v2904 = vsel %vm2791, %v2901, %v2903
        %v2905 = vrot.slane %v2891, 2
        %v2906 = vsel %vm2791, %v2903, %v2905
        %v2907 = vrot.slane %v2892, 2
        %v2908 = vsel %vm2791, %v2905, %v2907
        %v2909 = vrot.slane %v2893, 2
        %v2910 = vsel %vm2791, %v2907, %v2909
        %v2911 = vrot.slane %v2894, 2
        %v2912 = vsel %vm2791, %v2909, %v2911
        %v2913 = vrot.slane %v2895, 2
        %v2914 = vsel %vm2791, %v2911, %v2913
        %2924 = vst [vmem:[#allocation3 + $0x30] sm:$0xff] %v2898
        %2925 = vst [vmem:[#allocation3 + $0x78] sm:$0xff] %v2900
        %2926 = vst [vmem:[#allocation3 + $0xc0] sm:$0xff] %v2902
        %2927 = vst [vmem:[#allocation3 + $0x108] sm:$0xff] %v2904
        %2928 = vst [vmem:[#allocation3 + $0x150] sm:$0xff] %v2906
        %2929 = vst [vmem:[#allocation3 + $0x198] sm:$0xff] %v2908
        %2930 = vst [vmem:[#allocation3 + $0x1e0] sm:$0xff] %v2910
        %2931 = vst [vmem:[#allocation3 + $0x228] sm:$0xff] %v2912
        %2932 = vst [vmem:[#allocation3 + $0x270] sm:$0xff] %v2914
        %v2933 = vld [vmem:[#allocation2 + $0x10] sm:$0xc]
        %v2934 = vld [vmem:[#allocation2 + $0x14] sm:$0xf]
        %v2935 = vld [vmem:[#allocation2 + $0x18] sm:$0xf]
        %v2936 = vld [vmem:[#allocation2 + $0x1c] sm:$0xf]
        %v2937 = vld [vmem:[#allocation2 + $0x20] sm:$0xf]
        %v2938 = vld [vmem:[#allocation2 + $0x24] sm:$0xf]
        %v2939 = vld [vmem:[#allocation2 + $0x28] sm:$0xf]
        %v2940 = vld [vmem:[#allocation2 + $0x2c] sm:$0xf]
        %v2941 = vld [vmem:[#allocation2 + $0x30] sm:$0xf]
        %v2942 = vld [vmem:[#allocation2 + $0x34] sm:$0xf]
        %v2943 = vld [vmem:[#allocation2 + $0x38] sm:$0xf]
        %v2944 = vld [vmem:[#allocation2 + $0x3c] sm:$0xf]
        %v2945 = vld [vmem:[#allocation2 + $0x40] sm:$0xf]
        %v2946 = vld [vmem:[#allocation2 + $0x44] sm:$0xf]
        %v2947 = vld [vmem:[#allocation2 + $0x48] sm:$0xf]
        %v2948 = vld [vmem:[#allocation2 + $0x4c] sm:$0xf]
        %v2949 = vld [vmem:[#allocation2 + $0x50] sm:$0xf]
        %v2950 = vld [vmem:[#allocation2 + $0x54] sm:$0xf]
        %v2951 = vld [vmem:[#allocation2 + $0x58] sm:$0x7]
        %v2971 = vunpack.c.l.b16 %v2933
        %v2972 = vunpack.c.l.b16 %v2934
        %v2973 = vunpack.c.l.b16 %v2935
        %v2974 = vunpack.c.l.b16 %v2936
        %v2975 = vunpack.c.l.b16 %v2937
        %v2976 = vunpack.c.l.b16 %v2938
        %v2977 = vunpack.c.l.b16 %v2939
        %v2978 = vunpack.c.l.b16 %v2940
        %v2979 = vunpack.c.l.b16 %v2941
        %v2980 = vunpack.c.l.b16 %v2942
        %v2981 = vunpack.c.l.b16 %v2943
        %v2982 = vunpack.c.l.b16 %v2944
        %v2983 = vunpack.c.l.b16 %v2945
        %v2984 = vunpack.c.l.b16 %v2946
        %v2985 = vunpack.c.l.b16 %v2947
        %v2986 = vunpack.c.l.b16 %v2948
        %v2987 = vunpack.c.l.b16 %v2949
        %v2988 = vunpack.c.l.b16 %v2950
        %v2989 = vunpack.c.l.b16 %v2951
        %v2990 = vpack.c.b16 %v2972, %v2971
        %v2991 = vpack.c.b16 %v2974, %v2973
        %v2992 = vpack.c.b16 %v2976, %v2975
        %v2993 = vpack.c.b16 %v2978, %v2977
        %v2994 = vpack.c.b16 %v2980, %v2979
        %v2995 = vpack.c.b16 %v2982, %v2981
        %v2996 = vpack.c.b16 %v2984, %v2983
        %v2997 = vpack.c.b16 %v2986, %v2985
        %v2998 = vpack.c.b16 %v2988, %v2987
        %v2999 = vpack.c.b16 %v2989, %v2989
        %vm3000 = vsmask.f32 5376
        %v3002 = vshrl.u32 %v2990, 16
        %v3004 = vrot.slane %v3002, 2
        %v3005 = vshll.u32 %v2990, 16
        %v3007 = vrot.slane %v3005, 3
        %v3008 = vor.u32 %v3004, %v3007
        %v3010 = vshrl.u32 %v2991, 16
        %v3012 = vrot.slane %v3010, 2
        %v3013 = vshll.u32 %v2991, 16
        %v3015 = vrot.slane %v3013, 3
        %v3016 = vor.u32 %v3012, %v3015
        %v3017 = vsel %vm3000, %v3008, %v3016
        %v3019 = vshrl.u32 %v2992, 16
        %v3021 = vrot.slane %v3019, 2
        %v3022 = vshll.u32 %v2992, 16
        %v3024 = vrot.slane %v3022, 3
        %v3025 = vor.u32 %v3021, %v3024
        %v3026 = vsel %vm3000, %v3016, %v3025
        %v3028 = vshrl.u32 %v2993, 16
        %v3030 = vrot.slane %v3028, 2
        %v3031 = vshll.u32 %v2993, 16
        %v3033 = vrot.slane %v3031, 3
        %v3034 = vor.u32 %v3030, %v3033
        %v3035 = vsel %vm3000, %v3025, %v3034
        %v3037 = vshrl.u32 %v2994, 16
        %v3039 = vrot.slane %v3037, 2
        %v3040 = vshll.u32 %v2994, 16
        %v3042 = vrot.slane %v3040, 3
        %v3043 = vor.u32 %v3039, %v3042
        %v3044 = vsel %vm3000, %v3034, %v3043
        %v3046 = vshrl.u32 %v2995, 16
        %v3048 = vrot.slane %v3046, 2
        %v3049 = vshll.u32 %v2995, 16
        %v3051 = vrot.slane %v3049, 3
        %v3052 = vor.u32 %v3048, %v3051
        %v3053 = vsel %vm3000, %v3043, %v3052
        %v3055 = vshrl.u32 %v2996, 16
        %v3057 = vrot.slane %v3055, 2
        %v3058 = vshll.u32 %v2996, 16
        %v3060 = vrot.slane %v3058, 3
        %v3061 = vor.u32 %v3057, %v3060
        %v3062 = vsel %vm3000, %v3052, %v3061
        %v3064 = vshrl.u32 %v2997, 16
        %v3066 = vrot.slane %v3064, 2
        %v3067 = vshll.u32 %v2997, 16
        %v3069 = vrot.slane %v3067, 3
        %v3070 = vor.u32 %v3066, %v3069
        %v3071 = vsel %vm3000, %v3061, %v3070
        %v3073 = vshrl.u32 %v2998, 16
        %v3075 = vrot.slane %v3073, 2
        %v3076 = vshll.u32 %v2998, 16
        %v3078 = vrot.slane %v3076, 3
        %v3079 = vor.u32 %v3075, %v3078
        %v3080 = vsel %vm3000, %v3070, %v3079
        %v3082 = vshrl.u32 %v2999, 16
        %v3084 = vrot.slane %v3082, 2
        %v3085 = vshll.u32 %v2999, 16
        %v3087 = vrot.slane %v3085, 3
        %v3088 = vor.u32 %v3084, %v3087
        %v3089 = vsel %vm3000, %v3079, %v3088
        %3099 = vst [vmem:[#allocation3 + $0x38] sm:$0xff] %v3017
        %3100 = vst [vmem:[#allocation3 + $0x80] sm:$0xff] %v3026
        %3101 = vst [vmem:[#allocation3 + $0xc8] sm:$0xff] %v3035
        %3102 = vst [vmem:[#allocation3 + $0x110] sm:$0xff] %v3044
        %3103 = vst [vmem:[#allocation3 + $0x158] sm:$0xff] %v3053
        %3104 = vst [vmem:[#allocation3 + $0x1a0] sm:$0xff] %v3062
        %3105 = vst [vmem:[#allocation3 + $0x1e8] sm:$0xff] %v3071
        %3106 = vst [vmem:[#allocation3 + $0x230] sm:$0xff] %v3080
        %3107 = vst [vmem:[#allocation3 + $0x278] sm:$0xff] %v3089
        %v3108 = vld [vmem:[#allocation2 + $0x10] sm:$0x8]
        %v3109 = vld [vmem:[#allocation2 + $0x14] sm:$0xf]
        %v3110 = vld [vmem:[#allocation2 + $0x18] sm:$0xf]
        %v3111 = vld [vmem:[#allocation2 + $0x1c] sm:$0xf]
        %v3112 = vld [vmem:[#allocation2 + $0x20] sm:$0xf]
        %v3113 = vld [vmem:[#allocation2 + $0x24] sm:$0xf]
        %v3114 = vld [vmem:[#allocation2 + $0x28] sm:$0xf]
        %v3115 = vld [vmem:[#allocation2 + $0x2c] sm:$0xf]
        %v3116 = vld [vmem:[#allocation2 + $0x30] sm:$0xf]
        %v3117 = vld [vmem:[#allocation2 + $0x34] sm:$0xf]
        %v3118 = vld [vmem:[#allocation2 + $0x38] sm:$0xf]
        %v3119 = vld [vmem:[#allocation2 + $0x3c] sm:$0xf]
        %v3120 = vld [vmem:[#allocation2 + $0x40] sm:$0xf]
        %v3121 = vld [vmem:[#allocation2 + $0x44] sm:$0xf]
        %v3122 = vld [vmem:[#allocation2 + $0x48] sm:$0xf]
        %v3123 = vld [vmem:[#allocation2 + $0x4c] sm:$0xf]
        %v3124 = vld [vmem:[#allocation2 + $0x50] sm:$0xf]
        %v3125 = vld [vmem:[#allocation2 + $0x54] sm:$0xf]
        %v3126 = vld [vmem:[#allocation2 + $0x58] sm:$0x7]
        %v3146 = vunpack.c.l.b16 %v3108
        %v3147 = vunpack.c.l.b16 %v3109
        %v3148 = vunpack.c.l.b16 %v3110
        %v3149 = vunpack.c.l.b16 %v3111
        %v3150 = vunpack.c.l.b16 %v3112
        %v3151 = vunpack.c.l.b16 %v3113
        %v3152 = vunpack.c.l.b16 %v3114
        %v3153 = vunpack.c.l.b16 %v3115
        %v3154 = vunpack.c.l.b16 %v3116
        %v3155 = vunpack.c.l.b16 %v3117
        %v3156 = vunpack.c.l.b16 %v3118
        %v3157 = vunpack.c.l.b16 %v3119
        %v3158 = vunpack.c.l.b16 %v3120
        %v3159 = vunpack.c.l.b16 %v3121
        %v3160 = vunpack.c.l.b16 %v3122
        %v3161 = vunpack.c.l.b16 %v3123
        %v3162 = vunpack.c.l.b16 %v3124
        %v3163 = vunpack.c.l.b16 %v3125
        %v3164 = vunpack.c.l.b16 %v3126
        %v3165 = vpack.c.b16 %v3147, %v3146
        %v3166 = vpack.c.b16 %v3149, %v3148
        %v3167 = vpack.c.b16 %v3151, %v3150
        %v3168 = vpack.c.b16 %v3153, %v3152
        %v3169 = vpack.c.b16 %v3155, %v3154
        %v3170 = vpack.c.b16 %v3157, %v3156
        %v3171 = vpack.c.b16 %v3159, %v3158
        %v3172 = vpack.c.b16 %v3161, %v3160
        %v3173 = vpack.c.b16 %v3163, %v3162
        %v3174 = vpack.c.b16 %v3164, %v3164
        %vm3175 = vcmask 1044480
        %v3176 = vrot.slane %v3165, 3
        %v3177 = vrot.slane %v3166, 3
        %v3178 = vsel %vm3175, %v3176, %v3177
        %v3179 = vrot.slane %v3167, 3
        %v3180 = vsel %vm3175, %v3177, %v3179
        %v3181 = vrot.slane %v3168, 3
        %v3182 = vsel %vm3175, %v3179, %v3181
        %v3183 = vrot.slane %v3169, 3
        %v3184 = vsel %vm3175, %v3181, %v3183
        %v3185 = vrot.slane %v3170, 3
        %v3186 = vsel %vm3175, %v3183, %v3185
        %v3187 = vrot.slane %v3171, 3
        %v3188 = vsel %vm3175, %v3185, %v3187
        %v3189 = vrot.slane %v3172, 3
        %v3190 = vsel %vm3175, %v3187, %v3189
        %v3191 = vrot.slane %v3173, 3
        %v3192 = vsel %vm3175, %v3189, %v3191
        %v3193 = vrot.slane %v3174, 3
        %v3194 = vsel %vm3175, %v3191, %v3193
        %3204 = vst [vmem:[#allocation3 + $0x40] sm:$0xff] %v3178
        %3205 = vst [vmem:[#allocation3 + $0x88] sm:$0xff] %v3180
        %3206 = vst [vmem:[#allocation3 + $0xd0] sm:$0xff] %v3182
        %3207 = vst [vmem:[#allocation3 + $0x118] sm:$0xff] %v3184
        %3208 = vst [vmem:[#allocation3 + $0x160] sm:$0xff] %v3186
        %3209 = vst [vmem:[#allocation3 + $0x1a8] sm:$0xff] %v3188
        %3210 = vst [vmem:[#allocation3 + $0x1f0] sm:$0xff] %v3190
        %3211 = vst [vmem:[#allocation3 + $0x238] sm:$0xff] %v3192
        %3212 = vst [vmem:[#allocation3 + $0x280] sm:$0xff] %v3194
        %v3213 = vld [vmem:[#allocation3] sm:$0xff]
        %v3214 = vld [vmem:[#allocation3 + $0x8] sm:$0xff]
        %v3215 = vld [vmem:[#allocation3 + $0x10] sm:$0xff]
        %v3216 = vld [vmem:[#allocation3 + $0x18] sm:$0xff]
        %v3217 = vld [vmem:[#allocation3 + $0x20] sm:$0xff]
        %v3218 = vld [vmem:[#allocation3 + $0x28] sm:$0xff]
        %v3219 = vld [vmem:[#allocation3 + $0x30] sm:$0xff]
        %v3220 = vld [vmem:[#allocation3 + $0x38] sm:$0xff]
        %v3221 = vld [vmem:[#allocation3 + $0x40] sm:$0xff]
        %v3222 = vld [vmem:[#allocation3 + $0x48] sm:$0xff]
        %v3223 = vld [vmem:[#allocation3 + $0x50] sm:$0xff]
        %v3224 = vld [vmem:[#allocation3 + $0x58] sm:$0xff]
        %v3225 = vld [vmem:[#allocation3 + $0x60] sm:$0xff]
        %v3226 = vld [vmem:[#allocation3 + $0x68] sm:$0xff]
        %v3227 = vld [vmem:[#allocation3 + $0x70] sm:$0xff]
        %v3228 = vld [vmem:[#allocation3 + $0x78] sm:$0xff]
        %v3229 = vld [vmem:[#allocation3 + $0x80] sm:$0xff]
        %v3230 = vld [vmem:[#allocation3 + $0x88] sm:$0xff]
        %v3231 = vld [vmem:[#allocation3 + $0x90] sm:$0xff]
        %v3232 = vld [vmem:[#allocation3 + $0x98] sm:$0xff]
        %v3233 = vld [vmem:[#allocation3 + $0xa0] sm:$0xff]
        %v3234 = vld [vmem:[#allocation3 + $0xa8] sm:$0xff]
        %v3235 = vld [vmem:[#allocation3 + $0xb0] sm:$0xff]
        %v3236 = vld [vmem:[#allocation3 + $0xb8] sm:$0xff]
        %v3237 = vld [vmem:[#allocation3 + $0xc0] sm:$0xff]
        %v3238 = vld [vmem:[#allocation3 + $0xc8] sm:$0xff]
        %v3239 = vld [vmem:[#allocation3 + $0xd0] sm:$0xff]
        %v3240 = vld [vmem:[#allocation3 + $0xd8] sm:$0xff]
        %v3241 = vld [vmem:[#allocation3 + $0xe0] sm:$0xff]
        %v3242 = vld [vmem:[#allocation3 + $0xe8] sm:$0xff]
        %v3243 = vld [vmem:[#allocation3 + $0xf0] sm:$0xff]
        %v3244 = vld [vmem:[#allocation3 + $0xf8] sm:$0xff]
        %v3245 = vld [vmem:[#allocation3 + $0x100] sm:$0xff]
        %v3246 = vld [vmem:[#allocation3 + $0x108] sm:$0xff]
        %v3247 = vld [vmem:[#allocation3 + $0x110] sm:$0xff]
        %v3248 = vld [vmem:[#allocation3 + $0x118] sm:$0xff]
        %v3249 = vld [vmem:[#allocation3 + $0x120] sm:$0xff]
        %v3250 = vld [vmem:[#allocation3 + $0x128] sm:$0xff]
        %v3251 = vld [vmem:[#allocation3 + $0x130] sm:$0xff]
        %v3252 = vld [vmem:[#allocation3 + $0x138] sm:$0xff]
        %v3253 = vld [vmem:[#allocation3 + $0x140] sm:$0xff]
        %v3254 = vld [vmem:[#allocation3 + $0x148] sm:$0xff]
        %v3255 = vld [vmem:[#allocation3 + $0x150] sm:$0xff]
        %v3256 = vld [vmem:[#allocation3 + $0x158] sm:$0xff]
        %v3257 = vld [vmem:[#allocation3 + $0x160] sm:$0xff]
        %v3258 = vld [vmem:[#allocation3 + $0x168] sm:$0xff]
        %v3259 = vld [vmem:[#allocation3 + $0x170] sm:$0xff]
        %v3260 = vld [vmem:[#allocation3 + $0x178] sm:$0xff]
        %v3261 = vld [vmem:[#allocation3 + $0x180] sm:$0xff]
        %v3262 = vld [vmem:[#allocation3 + $0x188] sm:$0xff]
        %v3263 = vld [vmem:[#allocation3 + $0x190] sm:$0xff]
        %v3264 = vld [vmem:[#allocation3 + $0x198] sm:$0xff]
        %v3265 = vld [vmem:[#allocation3 + $0x1a0] sm:$0xff]
        %v3266 = vld [vmem:[#allocation3 + $0x1a8] sm:$0xff]
        %v3267 = vld [vmem:[#allocation3 + $0x1b0] sm:$0xff]
        %v3268 = vld [vmem:[#allocation3 + $0x1b8] sm:$0xff]
        %v3269 = vld [vmem:[#allocation3 + $0x1c0] sm:$0xff]
        %v3270 = vld [vmem:[#allocation3 + $0x1c8] sm:$0xff]
        %v3271 = vld [vmem:[#allocation3 + $0x1d0] sm:$0xff]
        %v3272 = vld [vmem:[#allocation3 + $0x1d8] sm:$0xff]
        %v3273 = vld [vmem:[#allocation3 + $0x1e0] sm:$0xff]
        %v3274 = vld [vmem:[#allocation3 + $0x1e8] sm:$0xff]
        %v3275 = vld [vmem:[#allocation3 + $0x1f0] sm:$0xff]
        %v3276 = vld [vmem:[#allocation3 + $0x1f8] sm:$0xff]
        %v3277 = vld [vmem:[#allocation3 + $0x200] sm:$0xff]
        %v3278 = vld [vmem:[#allocation3 + $0x208] sm:$0xff]
        %v3279 = vld [vmem:[#allocation3 + $0x210] sm:$0xff]
        %v3280 = vld [vmem:[#allocation3 + $0x218] sm:$0xff]
        %v3281 = vld [vmem:[#allocation3 + $0x220] sm:$0xff]
        %v3282 = vld [vmem:[#allocation3 + $0x228] sm:$0xff]
        %v3283 = vld [vmem:[#allocation3 + $0x230] sm:$0xff]
        %v3284 = vld [vmem:[#allocation3 + $0x238] sm:$0xff]
        %v3285 = vld [vmem:[#allocation3 + $0x240] sm:$0xff]
        %v3286 = vld [vmem:[#allocation3 + $0x248] sm:$0xff]
        %v3287 = vld [vmem:[#allocation3 + $0x250] sm:$0xff]
        %v3288 = vld [vmem:[#allocation3 + $0x258] sm:$0xff]
        %v3289 = vld [vmem:[#allocation3 + $0x260] sm:$0xff]
        %v3290 = vld [vmem:[#allocation3 + $0x268] sm:$0xff]
        %v3291 = vld [vmem:[#allocation3 + $0x270] sm:$0xff]
        %v3292 = vld [vmem:[#allocation3 + $0x278] sm:$0xff]
        %v3293 = vld [vmem:[#allocation3 + $0x280] sm:$0xff]
        %v3294 = vld [vmem:[#allocation15] sm:$0xf]
        %v3295 = vld [vmem:[#allocation15 + $0x4] sm:$0xf]
        %v3296 = vld [vmem:[#allocation15 + $0x8] sm:$0xf]
        %v3297 = vld [vmem:[#allocation15 + $0xc] sm:$0xf]
        %v3298 = vld [vmem:[#allocation15 + $0x10] sm:$0xf]
        %v3299 = vld [vmem:[#allocation15 + $0x14] sm:$0xf]
        %v3300 = vld [vmem:[#allocation15 + $0x18] sm:$0xf]
        %v3301 = vld [vmem:[#allocation15 + $0x1c] sm:$0xf]
        %v3302 = vld [vmem:[#allocation15 + $0x20] sm:$0xf]
        %v3303 = vld [vmem:[#allocation15 + $0x24] sm:$0xf]
        %v3304 = vld [vmem:[#allocation15 + $0x28] sm:$0xf]
        %v3305 = vld [vmem:[#allocation15 + $0x2c] sm:$0xf]
        %v3306 = vld [vmem:[#allocation15 + $0x30] sm:$0xf]
        %v3307 = vld [vmem:[#allocation15 + $0x34] sm:$0xf]
        %v3308 = vld [vmem:[#allocation15 + $0x38] sm:$0xf]
        %v3309 = vld [vmem:[#allocation15 + $0x3c] sm:$0xf]
        %v3310 = vld [vmem:[#allocation15 + $0x40] sm:$0xf]
        %v3311 = vld [vmem:[#allocation15 + $0x44] sm:$0xf]
        %v3312 = vld [vmem:[#allocation15 + $0x48] sm:$0xf]
        %v3313 = vld [vmem:[#allocation15 + $0x4c] sm:$0xf]
        %v3314 = vld [vmem:[#allocation15 + $0x50] sm:$0xf]
        %v3315 = vld [vmem:[#allocation15 + $0x54] sm:$0xf]
        %v3316 = vld [vmem:[#allocation15 + $0x58] sm:$0xf]
        %v3317 = vld [vmem:[#allocation15 + $0x5c] sm:$0xf]
        %v3318 = vld [vmem:[#allocation15 + $0x60] sm:$0xf]
        %v3319 = vld [vmem:[#allocation15 + $0x64] sm:$0xf]
        %v3320 = vld [vmem:[#allocation15 + $0x68] sm:$0xf]
        %v3321 = vld [vmem:[#allocation15 + $0x6c] sm:$0xf]
        %v3322 = vld [vmem:[#allocation15 + $0x70] sm:$0xf]
        %v3323 = vld [vmem:[#allocation15 + $0x74] sm:$0xf]
        %v3324 = vld [vmem:[#allocation15 + $0x78] sm:$0xf]
        %v3325 = vld [vmem:[#allocation15 + $0x7c] sm:$0xf]
        %v3326 = vld [vmem:[#allocation15 + $0x80] sm:$0xf]
        %v3327 = vld [vmem:[#allocation15 + $0x84] sm:$0xf]
        %v3328 = vld [vmem:[#allocation15 + $0x88] sm:$0xf]
        %v3329 = vld [vmem:[#allocation15 + $0x8c] sm:$0xf]
        %v3330 = vld [vmem:[#allocation15 + $0x90] sm:$0xf]
        %v3331 = vld [vmem:[#allocation15 + $0x94] sm:$0xf]
        %v3332 = vld [vmem:[#allocation15 + $0x98] sm:$0xf]
        %v3333 = vld [vmem:[#allocation15 + $0x9c] sm:$0xf]
        %v3334 = vld [vmem:[#allocation15 + $0xa0] sm:$0xf]
        %v3335 = vld [vmem:[#allocation15 + $0xa4] sm:$0xf]
        %v3336 = vld [vmem:[#allocation15 + $0xa8] sm:$0xf]
        %v3337 = vld [vmem:[#allocation15 + $0xac] sm:$0xf]
        %v3338 = vld [vmem:[#allocation15 + $0xb0] sm:$0xf]
        %v3339 = vld [vmem:[#allocation15 + $0xb4] sm:$0xf]
        %v3340 = vld [vmem:[#allocation15 + $0xb8] sm:$0xf]
        %v3341 = vld [vmem:[#allocation15 + $0xbc] sm:$0xf]
        %v3342 = vld [vmem:[#allocation15 + $0xc0] sm:$0xf]
        %v3343 = vld [vmem:[#allocation15 + $0xc4] sm:$0xf]
        %v3344 = vld [vmem:[#allocation15 + $0xc8] sm:$0xf]
        %v3345 = vld [vmem:[#allocation15 + $0xcc] sm:$0xf]
        %v3346 = vld [vmem:[#allocation15 + $0xd0] sm:$0xf]
        %v3347 = vld [vmem:[#allocation15 + $0xd4] sm:$0xf]
        %v3348 = vld [vmem:[#allocation15 + $0xd8] sm:$0xf]
        %v3349 = vld [vmem:[#allocation15 + $0xdc] sm:$0xf]
        %v3350 = vld [vmem:[#allocation15 + $0xe0] sm:$0xf]
        %v3351 = vld [vmem:[#allocation15 + $0xe4] sm:$0xf]
        %v3352 = vld [vmem:[#allocation15 + $0xe8] sm:$0xf]
        %v3353 = vld [vmem:[#allocation15 + $0xec] sm:$0xf]
        %v3354 = vld [vmem:[#allocation15 + $0xf0] sm:$0xf]
        %v3355 = vld [vmem:[#allocation15 + $0xf4] sm:$0xf]
        %v3356 = vld [vmem:[#allocation15 + $0xf8] sm:$0xf]
        %v3357 = vld [vmem:[#allocation15 + $0xfc] sm:$0xf]
        %v3358 = vld [vmem:[#allocation15 + $0x100] sm:$0xf]
        %v3359 = vld [vmem:[#allocation15 + $0x104] sm:$0xf]
        %v3360 = vld [vmem:[#allocation15 + $0x108] sm:$0xf]
        %v3361 = vld [vmem:[#allocation15 + $0x10c] sm:$0xf]
        %v3362 = vld [vmem:[#allocation15 + $0x110] sm:$0xf]
        %v3363 = vld [vmem:[#allocation15 + $0x114] sm:$0xf]
        %v3364 = vld [vmem:[#allocation15 + $0x118] sm:$0xf]
        %v3365 = vld [vmem:[#allocation15 + $0x11c] sm:$0xf]
        %v3366 = vld [vmem:[#allocation15 + $0x120] sm:$0xf]
        %v3367 = vld [vmem:[#allocation15 + $0x124] sm:$0xf]
        %v3368 = vld [vmem:[#allocation15 + $0x128] sm:$0xf]
        %v3369 = vld [vmem:[#allocation15 + $0x12c] sm:$0xf]
        %v3370 = vld [vmem:[#allocation15 + $0x130] sm:$0xf]
        %v3371 = vld [vmem:[#allocation15 + $0x134] sm:$0xf]
        %v3372 = vld [vmem:[#allocation15 + $0x138] sm:$0xf]
        %v3373 = vld [vmem:[#allocation15 + $0x13c] sm:$0xf]
        %v3374 = vld [vmem:[#allocation15 + $0x140] sm:$0xf]
        %v3375 = vld [vmem:[#allocation15 + $0x144] sm:$0xf]
        %v3376 = vld [vmem:[#allocation15 + $0x148] sm:$0xf]
        %v3377 = vld [vmem:[#allocation15 + $0x14c] sm:$0xf]
        %v3378 = vld [vmem:[#allocation15 + $0x150] sm:$0xf]
        %v3379 = vld [vmem:[#allocation15 + $0x154] sm:$0xf]
        %v3380 = vld [vmem:[#allocation15 + $0x158] sm:$0xf]
        %v3381 = vld [vmem:[#allocation15 + $0x15c] sm:$0xf]
        %v3382 = vld [vmem:[#allocation15 + $0x160] sm:$0xf]
        %v3383 = vld [vmem:[#allocation15 + $0x164] sm:$0xf]
        %v3384 = vld [vmem:[#allocation15 + $0x168] sm:$0xf]
        %v3385 = vld [vmem:[#allocation15 + $0x16c] sm:$0xf]
        %v3386 = vld [vmem:[#allocation15 + $0x170] sm:$0xf]
        %v3387 = vld [vmem:[#allocation15 + $0x174] sm:$0xf]
        %v3388 = vld [vmem:[#allocation15 + $0x178] sm:$0xf]
        %v3389 = vld [vmem:[#allocation15 + $0x17c] sm:$0xf]
        %v3390 = vld [vmem:[#allocation15 + $0x180] sm:$0xf]
        %v3391 = vld [vmem:[#allocation15 + $0x184] sm:$0xf]
        %v3392 = vld [vmem:[#allocation15 + $0x188] sm:$0xf]
        %v3393 = vld [vmem:[#allocation15 + $0x18c] sm:$0xf]
        %v3394 = vld [vmem:[#allocation15 + $0x190] sm:$0xf]
        %v3395 = vld [vmem:[#allocation15 + $0x194] sm:$0xf]
        %v3396 = vld [vmem:[#allocation15 + $0x198] sm:$0xf]
        %v3397 = vld [vmem:[#allocation15 + $0x19c] sm:$0xf]
        %v3398 = vld [vmem:[#allocation15 + $0x1a0] sm:$0xf]
        %v3399 = vld [vmem:[#allocation15 + $0x1a4] sm:$0xf]
        %v3400 = vld [vmem:[#allocation15 + $0x1a8] sm:$0xf]
        %v3401 = vld [vmem:[#allocation15 + $0x1ac] sm:$0xf]
        %v3402 = vld [vmem:[#allocation15 + $0x1b0] sm:$0xf]
        %v3403 = vld [vmem:[#allocation15 + $0x1b4] sm:$0xf]
        %v3404 = vld [vmem:[#allocation15 + $0x1b8] sm:$0xf]
        %v3405 = vld [vmem:[#allocation15 + $0x1bc] sm:$0xf]
        %v3406 = vld [vmem:[#allocation15 + $0x1c0] sm:$0xf]
        %v3407 = vld [vmem:[#allocation15 + $0x1c4] sm:$0xf]
        %v3408 = vld [vmem:[#allocation15 + $0x1c8] sm:$0xf]
        %v3409 = vld [vmem:[#allocation15 + $0x1cc] sm:$0xf]
        %v3410 = vld [vmem:[#allocation15 + $0x1d0] sm:$0xf]
        %v3411 = vld [vmem:[#allocation15 + $0x1d4] sm:$0xf]
        %v3412 = vld [vmem:[#allocation15 + $0x1d8] sm:$0xf]
        %v3413 = vld [vmem:[#allocation15 + $0x1dc] sm:$0xf]
        %v3414 = vld [vmem:[#allocation15 + $0x1e0] sm:$0xf]
        %v3415 = vld [vmem:[#allocation15 + $0x1e4] sm:$0xf]
        %v3416 = vld [vmem:[#allocation15 + $0x1e8] sm:$0xf]
        %v3417 = vld [vmem:[#allocation15 + $0x1ec] sm:$0xf]
        %v3418 = vld [vmem:[#allocation15 + $0x1f0] sm:$0xf]
        %v3419 = vld [vmem:[#allocation15 + $0x1f4] sm:$0xf]
        %v3420 = vld [vmem:[#allocation15 + $0x1f8] sm:$0xf]
        %v3421 = vld [vmem:[#allocation15 + $0x1fc] sm:$0xf]
        %v3422 = vld [vmem:[#allocation15 + $0x200] sm:$0xf]
        %v3423 = vld [vmem:[#allocation15 + $0x204] sm:$0xf]
        %v3424 = vld [vmem:[#allocation15 + $0x208] sm:$0xf]
        %v3425 = vld [vmem:[#allocation15 + $0x20c] sm:$0xf]
        %v3426 = vld [vmem:[#allocation15 + $0x210] sm:$0xf]
        %v3427 = vld [vmem:[#allocation15 + $0x214] sm:$0xf]
        %v3428 = vld [vmem:[#allocation15 + $0x218] sm:$0xf]
        %v3429 = vld [vmem:[#allocation15 + $0x21c] sm:$0xf]
        %v3430 = vld [vmem:[#allocation15 + $0x220] sm:$0xf]
        %v3431 = vld [vmem:[#allocation15 + $0x224] sm:$0xf]
        %v3432 = vld [vmem:[#allocation15 + $0x228] sm:$0xf]
        %v3433 = vld [vmem:[#allocation15 + $0x22c] sm:$0xf]
        %v3434 = vld [vmem:[#allocation15 + $0x230] sm:$0xf]
        %v3435 = vld [vmem:[#allocation15 + $0x234] sm:$0xf]
        %v3436 = vld [vmem:[#allocation15 + $0x238] sm:$0xf]
        %v3437 = vld [vmem:[#allocation15 + $0x23c] sm:$0xf]
        %v3582 = vunpack.c.l.b16 %v3294
        %v3583 = vunpack.c.l.b16 %v3295
        %v3584 = vunpack.c.l.b16 %v3296
        %v3585 = vunpack.c.l.b16 %v3297
        %v3586 = vunpack.c.l.b16 %v3298
        %v3587 = vunpack.c.l.b16 %v3299
        %v3588 = vunpack.c.l.b16 %v3300
        %v3589 = vunpack.c.l.b16 %v3301
        %v3590 = vunpack.c.l.b16 %v3302
        %v3591 = vunpack.c.l.b16 %v3303
        %v3592 = vunpack.c.l.b16 %v3304
        %v3593 = vunpack.c.l.b16 %v3305
        %v3594 = vunpack.c.l.b16 %v3306
        %v3595 = vunpack.c.l.b16 %v3307
        %v3596 = vunpack.c.l.b16 %v3308
        %v3597 = vunpack.c.l.b16 %v3309
        %v3598 = vunpack.c.l.b16 %v3310
        %v3599 = vunpack.c.l.b16 %v3311
        %v3600 = vunpack.c.l.b16 %v3312
        %v3601 = vunpack.c.l.b16 %v3313
        %v3602 = vunpack.c.l.b16 %v3314
        %v3603 = vunpack.c.l.b16 %v3315
        %v3604 = vunpack.c.l.b16 %v3316
        %v3605 = vunpack.c.l.b16 %v3317
        %v3606 = vunpack.c.l.b16 %v3318
        %v3607 = vunpack.c.l.b16 %v3319
        %v3608 = vunpack.c.l.b16 %v3320
        %v3609 = vunpack.c.l.b16 %v3321
        %v3610 = vunpack.c.l.b16 %v3322
        %v3611 = vunpack.c.l.b16 %v3323
        %v3612 = vunpack.c.l.b16 %v3324
        %v3613 = vunpack.c.l.b16 %v3325
        %v3614 = vunpack.c.l.b16 %v3326
        %v3615 = vunpack.c.l.b16 %v3327
        %v3616 = vunpack.c.l.b16 %v3328
        %v3617 = vunpack.c.l.b16 %v3329
        %v3618 = vunpack.c.l.b16 %v3330
        %v3619 = vunpack.c.l.b16 %v3331
        %v3620 = vunpack.c.l.b16 %v3332
        %v3621 = vunpack.c.l.b16 %v3333
        %v3622 = vunpack.c.l.b16 %v3334
        %v3623 = vunpack.c.l.b16 %v3335
        %v3624 = vunpack.c.l.b16 %v3336
        %v3625 = vunpack.c.l.b16 %v3337
        %v3626 = vunpack.c.l.b16 %v3338
        %v3627 = vunpack.c.l.b16 %v3339
        %v3628 = vunpack.c.l.b16 %v3340
        %v3629 = vunpack.c.l.b16 %v3341
        %v3630 = vunpack.c.l.b16 %v3342
        %v3631 = vunpack.c.l.b16 %v3343
        %v3632 = vunpack.c.l.b16 %v3344
        %v3633 = vunpack.c.l.b16 %v3345
        %v3634 = vunpack.c.l.b16 %v3346
        %v3635 = vunpack.c.l.b16 %v3347
        %v3636 = vunpack.c.l.b16 %v3348
        %v3637 = vunpack.c.l.b16 %v3349
        %v3638 = vunpack.c.l.b16 %v3350
        %v3639 = vunpack.c.l.b16 %v3351
        %v3640 = vunpack.c.l.b16 %v3352
        %v3641 = vunpack.c.l.b16 %v3353
        %v3642 = vunpack.c.l.b16 %v3354
        %v3643 = vunpack.c.l.b16 %v3355
        %v3644 = vunpack.c.l.b16 %v3356
        %v3645 = vunpack.c.l.b16 %v3357
        %v3646 = vunpack.c.l.b16 %v3358
        %v3647 = vunpack.c.l.b16 %v3359
        %v3648 = vunpack.c.l.b16 %v3360
        %v3649 = vunpack.c.l.b16 %v3361
        %v3650 = vunpack.c.l.b16 %v3362
        %v3651 = vunpack.c.l.b16 %v3363
        %v3652 = vunpack.c.l.b16 %v3364
        %v3653 = vunpack.c.l.b16 %v3365
        %v3654 = vunpack.c.l.b16 %v3366
        %v3655 = vunpack.c.l.b16 %v3367
        %v3656 = vunpack.c.l.b16 %v3368
        %v3657 = vunpack.c.l.b16 %v3369
        %v3658 = vunpack.c.l.b16 %v3370
        %v3659 = vunpack.c.l.b16 %v3371
        %v3660 = vunpack.c.l.b16 %v3372
        %v3661 = vunpack.c.l.b16 %v3373
        %v3662 = vunpack.c.l.b16 %v3374
        %v3663 = vunpack.c.l.b16 %v3375
        %v3664 = vunpack.c.l.b16 %v3376
        %v3665 = vunpack.c.l.b16 %v3377
        %v3666 = vunpack.c.l.b16 %v3378
        %v3667 = vunpack.c.l.b16 %v3379
        %v3668 = vunpack.c.l.b16 %v3380
        %v3669 = vunpack.c.l.b16 %v3381
        %v3670 = vunpack.c.l.b16 %v3382
        %v3671 = vunpack.c.l.b16 %v3383
        %v3672 = vunpack.c.l.b16 %v3384
        %v3673 = vunpack.c.l.b16 %v3385
        %v3674 = vunpack.c.l.b16 %v3386
        %v3675 = vunpack.c.l.b16 %v3387
        %v3676 = vunpack.c.l.b16 %v3388
        %v3677 = vunpack.c.l.b16 %v3389
        %v3678 = vunpack.c.l.b16 %v3390
        %v3679 = vunpack.c.l.b16 %v3391
        %v3680 = vunpack.c.l.b16 %v3392
        %v3681 = vunpack.c.l.b16 %v3393
        %v3682 = vunpack.c.l.b16 %v3394
        %v3683 = vunpack.c.l.b16 %v3395
        %v3684 = vunpack.c.l.b16 %v3396
        %v3685 = vunpack.c.l.b16 %v3397
        %v3686 = vunpack.c.l.b16 %v3398
        %v3687 = vunpack.c.l.b16 %v3399
        %v3688 = vunpack.c.l.b16 %v3400
        %v3689 = vunpack.c.l.b16 %v3401
        %v3690 = vunpack.c.l.b16 %v3402
        %v3691 = vunpack.c.l.b16 %v3403
        %v3692 = vunpack.c.l.b16 %v3404
        %v3693 = vunpack.c.l.b16 %v3405
        %v3694 = vunpack.c.l.b16 %v3406
        %v3695 = vunpack.c.l.b16 %v3407
        %v3696 = vunpack.c.l.b16 %v3408
        %v3697 = vunpack.c.l.b16 %v3409
        %v3698 = vunpack.c.l.b16 %v3410
        %v3699 = vunpack.c.l.b16 %v3411
        %v3700 = vunpack.c.l.b16 %v3412
        %v3701 = vunpack.c.l.b16 %v3413
        %v3702 = vunpack.c.l.b16 %v3414
        %v3703 = vunpack.c.l.b16 %v3415
        %v3704 = vunpack.c.l.b16 %v3416
        %v3705 = vunpack.c.l.b16 %v3417
        %v3706 = vunpack.c.l.b16 %v3418
        %v3707 = vunpack.c.l.b16 %v3419
        %v3708 = vunpack.c.l.b16 %v3420
        %v3709 = vunpack.c.l.b16 %v3421
        %v3710 = vunpack.c.l.b16 %v3422
        %v3711 = vunpack.c.l.b16 %v3423
        %v3712 = vunpack.c.l.b16 %v3424
        %v3713 = vunpack.c.l.b16 %v3425
        %v3714 = vunpack.c.l.b16 %v3426
        %v3715 = vunpack.c.l.b16 %v3427
        %v3716 = vunpack.c.l.b16 %v3428
        %v3717 = vunpack.c.l.b16 %v3429
        %v3718 = vunpack.c.l.b16 %v3430
        %v3719 = vunpack.c.l.b16 %v3431
        %v3720 = vunpack.c.l.b16 %v3432
        %v3721 = vunpack.c.l.b16 %v3433
        %v3722 = vunpack.c.l.b16 %v3434
        %v3723 = vunpack.c.l.b16 %v3435
        %v3724 = vunpack.c.l.b16 %v3436
        %v3725 = vunpack.c.l.b16 %v3437
        %v3726 = vpack.c.b16 %v3583, %v3582
        %v3727 = vpack.c.b16 %v3585, %v3584
        %v3728 = vpack.c.b16 %v3587, %v3586
        %v3729 = vpack.c.b16 %v3589, %v3588
        %v3730 = vpack.c.b16 %v3591, %v3590
        %v3731 = vpack.c.b16 %v3593, %v3592
        %v3732 = vpack.c.b16 %v3595, %v3594
        %v3733 = vpack.c.b16 %v3597, %v3596
        %v3734 = vpack.c.b16 %v3599, %v3598
        %v3735 = vpack.c.b16 %v3601, %v3600
        %v3736 = vpack.c.b16 %v3603, %v3602
        %v3737 = vpack.c.b16 %v3605, %v3604
        %v3738 = vpack.c.b16 %v3607, %v3606
        %v3739 = vpack.c.b16 %v3609, %v3608
        %v3740 = vpack.c.b16 %v3611, %v3610
        %v3741 = vpack.c.b16 %v3613, %v3612
        %v3742 = vpack.c.b16 %v3615, %v3614
        %v3743 = vpack.c.b16 %v3617, %v3616
        %v3744 = vpack.c.b16 %v3619, %v3618
        %v3745 = vpack.c.b16 %v3621, %v3620
        %v3746 = vpack.c.b16 %v3623, %v3622
        %v3747 = vpack.c.b16 %v3625, %v3624
        %v3748 = vpack.c.b16 %v3627, %v3626
        %v3749 = vpack.c.b16 %v3629, %v3628
        %v3750 = vpack.c.b16 %v3631, %v3630
        %v3751 = vpack.c.b16 %v3633, %v3632
        %v3752 = vpack.c.b16 %v3635, %v3634
        %v3753 = vpack.c.b16 %v3637, %v3636
        %v3754 = vpack.c.b16 %v3639, %v3638
        %v3755 = vpack.c.b16 %v3641, %v3640
        %v3756 = vpack.c.b16 %v3643, %v3642
        %v3757 = vpack.c.b16 %v3645, %v3644
        %v3758 = vpack.c.b16 %v3647, %v3646
        %v3759 = vpack.c.b16 %v3649, %v3648
        %v3760 = vpack.c.b16 %v3651, %v3650
        %v3761 = vpack.c.b16 %v3653, %v3652
        %v3762 = vpack.c.b16 %v3655, %v3654
        %v3763 = vpack.c.b16 %v3657, %v3656
        %v3764 = vpack.c.b16 %v3659, %v3658
        %v3765 = vpack.c.b16 %v3661, %v3660
        %v3766 = vpack.c.b16 %v3663, %v3662
        %v3767 = vpack.c.b16 %v3665, %v3664
        %v3768 = vpack.c.b16 %v3667, %v3666
        %v3769 = vpack.c.b16 %v3669, %v3668
        %v3770 = vpack.c.b16 %v3671, %v3670
        %v3771 = vpack.c.b16 %v3673, %v3672
        %v3772 = vpack.c.b16 %v3675, %v3674
        %v3773 = vpack.c.b16 %v3677, %v3676
        %v3774 = vpack.c.b16 %v3679, %v3678
        %v3775 = vpack.c.b16 %v3681, %v3680
        %v3776 = vpack.c.b16 %v3683, %v3682
        %v3777 = vpack.c.b16 %v3685, %v3684
        %v3778 = vpack.c.b16 %v3687, %v3686
        %v3779 = vpack.c.b16 %v3689, %v3688
        %v3780 = vpack.c.b16 %v3691, %v3690
        %v3781 = vpack.c.b16 %v3693, %v3692
        %v3782 = vpack.c.b16 %v3695, %v3694
        %v3783 = vpack.c.b16 %v3697, %v3696
        %v3784 = vpack.c.b16 %v3699, %v3698
        %v3785 = vpack.c.b16 %v3701, %v3700
        %v3786 = vpack.c.b16 %v3703, %v3702
        %v3787 = vpack.c.b16 %v3705, %v3704
        %v3788 = vpack.c.b16 %v3707, %v3706
        %v3789 = vpack.c.b16 %v3709, %v3708
        %v3790 = vpack.c.b16 %v3711, %v3710
        %v3791 = vpack.c.b16 %v3713, %v3712
        %v3792 = vpack.c.b16 %v3715, %v3714
        %v3793 = vpack.c.b16 %v3717, %v3716
        %v3794 = vpack.c.b16 %v3719, %v3718
        %v3795 = vpack.c.b16 %v3721, %v3720
        %v3796 = vpack.c.b16 %v3723, %v3722
        %v3797 = vpack.c.b16 %v3725, %v3724
        %3870 = vmatprep.subr.bf16.mxu0 0
        %3871 = vmatpush1.bf16.msra.mxu0 %v3726
        %3872 = vmatprep.subr.bf16.mxu0 0
        %3873 = vmatpush1.bf16.msra.mxu0 %v3727
        %3874 = vmatprep.subr.bf16.mxu0 0
        %3875 = vmatpush1.bf16.msra.mxu0 %v3728
        %3876 = vmatprep.subr.bf16.mxu0 0
        %3877 = vmatpush1.bf16.msra.mxu0 %v3729
        %3878 = vmatprep.subr.bf16.mxu0 0
        %3879 = vmatpush1.bf16.msra.mxu0 %v3730
        %3880 = vmatprep.subr.bf16.mxu0 0
        %3881 = vmatpush1.bf16.msra.mxu0 %v3731
        %3882 = vmatprep.subr.bf16.mxu0 0
        %3883 = vmatpush1.bf16.msra.mxu0 %v3732
        %3884 = vmatprep.subr.bf16.mxu0 0
        %3885 = vmatpush1.bf16.msra.mxu0 %v3733
        %3886 = vmatprep.subr.bf16.mxu0 0
        %3887 = vmatpush1.bf16.msra.mxu0 %v3734
        %3888 = vmatprep.subr.bf16.mxu0 0
        %3889 = vmatpush1.bf16.msra.mxu0 %v3735
        %3890 = vmatprep.subr.bf16.mxu0 0
        %3891 = vmatpush1.bf16.msra.mxu0 %v3736
        %3892 = vmatprep.subr.bf16.mxu0 0
        %3893 = vmatpush1.bf16.msra.mxu0 %v3737
        %3894 = vmatprep.subr.bf16.mxu0 0
        %3895 = vmatpush1.bf16.msra.mxu0 %v3738
        %3896 = vmatprep.subr.bf16.mxu0 0
        %3897 = vmatpush1.bf16.msra.mxu0 %v3739
        %3898 = vmatprep.subr.bf16.mxu0 0
        %3899 = vmatpush1.bf16.msra.mxu0 %v3740
        %3900 = vmatprep.subr.bf16.mxu0 0
        %3901 = vmatpush1.bf16.msra.mxu0 %v3741
        %3902 = vmatprep.mubr.bf16.mxu0 %v3214
        %3903 = vmatmul.mubr.bf16.gmra.mrb[0].mxu0 %v3213
        %v3904 = vpop.f32.mrb[0].mxu0
        %v3905 = vadd.f32 0.0, %v3904
        %v3906 = vpop.f32.mrb[0].mxu0
        %v3907 = vpop.f32.mrb[0].mxu0
        %v3908 = vadd.f32 0.0, %v3907
        %v3909 = vpop.f32.mrb[0].mxu0
        %3910 = vmatprep.mubr.bf16.mxu0 %v3223
        %3911 = vmatmul.mubr.bf16.gmra.mrb[0].mxu0 %v3222
        %v3912 = vpop.f32.mrb[0].mxu0
        %v3913 = vadd.f32 0.0, %v3912
        %v3914 = vpop.f32.mrb[0].mxu0
        %v3915 = vpop.f32.mrb[0].mxu0
        %v3916 = vadd.f32 0.0, %v3915
        %v3917 = vpop.f32.mrb[0].mxu0
        %3918 = vmatprep.mubr.bf16.mxu0 %v3232
        %3919 = vmatmul.mubr.bf16.gmra.mrb[0].mxu0 %v3231
        %v3920 = vpop.f32.mrb[0].mxu0
        %v3921 = vadd.f32 0.0, %v3920
        %v3922 = vpop.f32.mrb[0].mxu0
        %v3923 = vpop.f32.mrb[0].mxu0
        %v3924 = vadd.f32 0.0, %v3923
        %v3925 = vpop.f32.mrb[0].mxu0
        %3926 = vmatprep.mubr.bf16.mxu0 %v3241
        %3927 = vmatmul.mubr.bf16.gmra.mrb[0].mxu0 %v3240
        %v3928 = vpop.f32.mrb[0].mxu0
        %v3929 = vadd.f32 0.0, %v3928
        %v3930 = vpop.f32.mrb[0].mxu0
        %v3931 = vpop.f32.mrb[0].mxu0
        %v3932 = vadd.f32 0.0, %v3931
        %v3933 = vpop.f32.mrb[0].mxu0
        %3934 = vmatprep.mubr.bf16.mxu0 %v3250
        %3935 = vmatmul.mubr.bf16.gmra.mrb[0].mxu0 %v3249
        %v3936 = vpop.f32.mrb[0].mxu0
        %v3937 = vadd.f32 0.0, %v3936
        %v3938 = vpop.f32.mrb[0].mxu0
        %v3939 = vpop.f32.mrb[0].mxu0
        %v3940 = vadd.f32 0.0, %v3939
        %v3941 = vpop.f32.mrb[0].mxu0
        %3942 = vmatprep.mubr.bf16.mxu0 %v3259
        %3943 = vmatmul.mubr.bf16.gmra.mrb[0].mxu0 %v3258
        %v3944 = vpop.f32.mrb[0].mxu0
        %v3945 = vadd.f32 0.0, %v3944
        %v3946 = vpop.f32.mrb[0].mxu0
        %v3947 = vpop.f32.mrb[0].mxu0
        %v3948 = vadd.f32 0.0, %v3947
        %v3949 = vpop.f32.mrb[0].mxu0
        %3950 = vmatprep.mubr.bf16.mxu0 %v3268
        %3951 = vmatmul.mubr.bf16.gmra.mrb[0].mxu0 %v3267
        %v3952 = vpop.f32.mrb[0].mxu0
        %v3953 = vadd.f32 0.0, %v3952
        %v3954 = vpop.f32.mrb[0].mxu0
        %v3955 = vpop.f32.mrb[0].mxu0
        %v3956 = vadd.f32 0.0, %v3955
        %v3957 = vpop.f32.mrb[0].mxu0
        %3958 = vmatprep.mubr.bf16.mxu0 %v3277
        %3959 = vmatmul.mubr.bf16.gmra.mrb[0].mxu0 %v3276
        %v3960 = vpop.f32.mrb[0].mxu0
        %v3961 = vadd.f32 0.0, %v3960
        %v3962 = vpop.f32.mrb[0].mxu0
        %v3963 = vpop.f32.mrb[0].mxu0
        %v3964 = vadd.f32 0.0, %v3963
        %v3965 = vpop.f32.mrb[0].mxu0
        %3966 = vmatprep.mubr.bf16.mxu0 %v3286
        %3967 = vmatmul.mubr.bf16.gmra.mrb[0].mxu0 %v3285
        %v3968 = vpop.f32.mrb[0].mxu0
        %v3969 = vadd.f32 0.0, %v3968
        %v3970 = vpop.f32.mrb[0].mxu0
        %v3971 = vpop.f32.mrb[0].mxu0
        %v3972 = vadd.f32 0.0, %v3971
        %v3973 = vpop.f32.mrb[0].mxu0
        %3974 = vdwg.mxu0
        %3975 = vmatprep.subr.bf16.mxu0 0
        %3976 = vmatpush1.bf16.msra.mxu0 %v3742
        %3977 = vmatprep.subr.bf16.mxu0 0
        %3978 = vmatpush1.bf16.msra.mxu0 %v3743
        %3979 = vmatprep.subr.bf16.mxu0 0
        %3980 = vmatpush1.bf16.msra.mxu0 %v3744
        %3981 = vmatprep.subr.bf16.mxu0 0
        %3982 = vmatpush1.bf16.msra.mxu0 %v3745
        %3983 = vmatprep.subr.bf16.mxu0 0
        %3984 = vmatpush1.bf16.msra.mxu0 %v3746
        %3985 = vmatprep.subr.bf16.mxu0 0
        %3986 = vmatpush1.bf16.msra.mxu0 %v3747
        %3987 = vmatprep.subr.bf16.mxu0 0
        %3988 = vmatpush1.bf16.msra.mxu0 %v3748
        %3989 = vmatprep.subr.bf16.mxu0 0
        %3990 = vmatpush1.bf16.msra.mxu0 %v3749
        %3991 = vmatprep.subr.bf16.mxu0 0
        %3992 = vmatpush1.bf16.msra.mxu0 %v3750
        %3993 = vmatprep.subr.bf16.mxu0 0
        %3994 = vmatpush1.bf16.msra.mxu0 %v3751
        %3995 = vmatprep.subr.bf16.mxu0 0
        %3996 = vmatpush1.bf16.msra.mxu0 %v3752
        %3997 = vmatprep.subr.bf16.mxu0 0
        %3998 = vmatpush1.bf16.msra.mxu0 %v3753
        %3999 = vmatprep.subr.bf16.mxu0 0
        %4000 = vmatpush1.bf16.msra.mxu0 %v3754
        %4001 = vmatprep.subr.bf16.mxu0 0
        %4002 = vmatpush1.bf16.msra.mxu0 %v3755
        %4003 = vmatprep.subr.bf16.mxu0 0
        %4004 = vmatpush1.bf16.msra.mxu0 %v3756
        %4005 = vmatprep.subr.bf16.mxu0 0
        %4006 = vmatpush1.bf16.msra.mxu0 %v3757
        %4007 = vmatprep.mubr.bf16.mxu0 %v3216
        %4008 = vmatmul.mubr.bf16.gmra.mrb[0].mxu0 %v3215
        %v4009 = vpop.f32.mrb[0].mxu0
        %v4010 = vadd.f32 %v3905, %v4009
        %v4011 = vpop.f32.mrb[0].mxu0
        %v4012 = vpop.f32.mrb[0].mxu0
        %v4013 = vadd.f32 %v3908, %v4012
        %v4014 = vpop.f32.mrb[0].mxu0
        %4015 = vmatprep.mubr.bf16.mxu0 %v3225
        %4016 = vmatmul.mubr.bf16.gmra.mrb[0].mxu0 %v3224
        %v4017 = vpop.f32.mrb[0].mxu0
        %v4018 = vadd.f32 %v3913, %v4017
        %v4019 = vpop.f32.mrb[0].mxu0
        %v4020 = vpop.f32.mrb[0].mxu0
        %v4021 = vadd.f32 %v3916, %v4020
        %v4022 = vpop.f32.mrb[0].mxu0
        %4023 = vmatprep.mubr.bf16.mxu0 %v3234
        %4024 = vmatmul.mubr.bf16.gmra.mrb[0].mxu0 %v3233
        %v4025 = vpop.f32.mrb[0].mxu0
        %v4026 = vadd.f32 %v3921, %v4025
        %v4027 = vpop.f32.mrb[0].mxu0
        %v4028 = vpop.f32.mrb[0].mxu0
        %v4029 = vadd.f32 %v3924, %v4028
        %v4030 = vpop.f32.mrb[0].mxu0
        %4031 = vmatprep.mubr.bf16.mxu0 %v3243
        %4032 = vmatmul.mubr.bf16.gmra.mrb[0].mxu0 %v3242
        %v4033 = vpop.f32.mrb[0].mxu0
        %v4034 = vadd.f32 %v3929, %v4033
        %v4035 = vpop.f32.mrb[0].mxu0
        %v4036 = vpop.f32.mrb[0].mxu0
        %v4037 = vadd.f32 %v3932, %v4036
        %v4038 = vpop.f32.mrb[0].mxu0
        %4039 = vmatprep.mubr.bf16.mxu0 %v3252
        %4040 = vmatmul.mubr.bf16.gmra.mrb[0].mxu0 %v3251
        %v4041 = vpop.f32.mrb[0].mxu0
        %v4042 = vadd.f32 %v3937, %v4041
        %v4043 = vpop.f32.mrb[0].mxu0
        %v4044 = vpop.f32.mrb[0].mxu0
        %v4045 = vadd.f32 %v3940, %v4044
        %v4046 = vpop.f32.mrb[0].mxu0
        %4047 = vmatprep.mubr.bf16.mxu0 %v3261
        %4048 = vmatmul.mubr.bf16.gmra.mrb[0].mxu0 %v3260
        %v4049 = vpop.f32.mrb[0].mxu0
        %v4050 = vadd.f32 %v3945, %v4049
        %v4051 = vpop.f32.mrb[0].mxu0
        %v4052 = vpop.f32.mrb[0].mxu0
        %v4053 = vadd.f32 %v3948, %v4052
        %v4054 = vpop.f32.mrb[0].mxu0
        %4055 = vmatprep.mubr.bf16.mxu0 %v3270
        %4056 = vmatmul.mubr.bf16.gmra.mrb[0].mxu0 %v3269
        %v4057 = vpop.f32.mrb[0].mxu0
        %v4058 = vadd.f32 %v3953, %v4057
        %v4059 = vpop.f32.mrb[0].mxu0
        %v4060 = vpop.f32.mrb[0].mxu0
        %v4061 = vadd.f32 %v3956, %v4060
        %v4062 = vpop.f32.mrb[0].mxu0
        %4063 = vmatprep.mubr.bf16.mxu0 %v3279
        %4064 = vmatmul.mubr.bf16.gmra.mrb[0].mxu0 %v3278
        %v4065 = vpop.f32.mrb[0].mxu0
        %v4066 = vadd.f32 %v3961, %v4065
        %v4067 = vpop.f32.mrb[0].mxu0
        %v4068 = vpop.f32.mrb[0].mxu0
        %v4069 = vadd.f32 %v3964, %v4068
        %v4070 = vpop.f32.mrb[0].mxu0
        %4071 = vmatprep.mubr.bf16.mxu0 %v3288
        %4072 = vmatmul.mubr.bf16.gmra.mrb[0].mxu0 %v3287
        %v4073 = vpop.f32.mrb[0].mxu0
        %v4074 = vadd.f32 %v3969, %v4073
        %v4075 = vpop.f32.mrb[0].mxu0
        %v4076 = vpop.f32.mrb[0].mxu0
        %v4077 = vadd.f32 %v3972, %v4076
        %v4078 = vpop.f32.mrb[0].mxu0
        %4079 = vdwg.mxu0
        %4080 = vmatprep.subr.bf16.mxu0 0
        %4081 = vmatpush1.bf16.msra.mxu0 %v3758
        %4082 = vmatprep.subr.bf16.mxu0 0
        %4083 = vmatpush1.bf16.msra.mxu0 %v3759
        %4084 = vmatprep.subr.bf16.mxu0 0
        %4085 = vmatpush1.bf16.msra.mxu0 %v3760
        %4086 = vmatprep.subr.bf16.mxu0 0
        %4087 = vmatpush1.bf16.msra.mxu0 %v3761
        %4088 = vmatprep.subr.bf16.mxu0 0
        %4089 = vmatpush1.bf16.msra.mxu0 %v3762
        %4090 = vmatprep.subr.bf16.mxu0 0
        %4091 = vmatpush1.bf16.msra.mxu0 %v3763
        %4092 = vmatprep.subr.bf16.mxu0 0
        %4093 = vmatpush1.bf16.msra.mxu0 %v3764
        %4094 = vmatprep.subr.bf16.mxu0 0
        %4095 = vmatpush1.bf16.msra.mxu0 %v3765
        %4096 = vmatprep.subr.bf16.mxu0 0
        %4097 = vmatpush1.bf16.msra.mxu0 %v3766
        %4098 = vmatprep.subr.bf16.mxu0 0
        %4099 = vmatpush1.bf16.msra.mxu0 %v3767
        %4100 = vmatprep.subr.bf16.mxu0 0
        %4101 = vmatpush1.bf16.msra.mxu0 %v3768
        %4102 = vmatprep.subr.bf16.mxu0 0
        %4103 = vmatpush1.bf16.msra.mxu0 %v3769
        %4104 = vmatprep.subr.bf16.mxu0 0
        %4105 = vmatpush1.bf16.msra.mxu0 %v3770
        %4106 = vmatprep.subr.bf16.mxu0 0
        %4107 = vmatpush1.bf16.msra.mxu0 %v3771
        %4108 = vmatprep.subr.bf16.mxu0 0
        %4109 = vmatpush1.bf16.msra.mxu0 %v3772
        %4110 = vmatprep.subr.bf16.mxu0 0
        %4111 = vmatpush1.bf16.msra.mxu0 %v3773
        %4112 = vmatprep.mubr.bf16.mxu0 %v3218
        %4113 = vmatmul.mubr.bf16.gmra.mrb[0].mxu0 %v3217
        %v4114 = vpop.f32.mrb[0].mxu0
        %v4115 = vadd.f32 %v4010, %v4114
        %v4116 = vpop.f32.mrb[0].mxu0
        %v4117 = vpop.f32.mrb[0].mxu0
        %v4118 = vadd.f32 %v4013, %v4117
        %v4119 = vpop.f32.mrb[0].mxu0
        %4120 = vmatprep.mubr.bf16.mxu0 %v3227
        %4121 = vmatmul.mubr.bf16.gmra.mrb[0].mxu0 %v3226
        %v4122 = vpop.f32.mrb[0].mxu0
        %v4123 = vadd.f32 %v4018, %v4122
        %v4124 = vpop.f32.mrb[0].mxu0
        %v4125 = vpop.f32.mrb[0].mxu0
        %v4126 = vadd.f32 %v4021, %v4125
        %v4127 = vpop.f32.mrb[0].mxu0
        %4128 = vmatprep.mubr.bf16.mxu0 %v3236
        %4129 = vmatmul.mubr.bf16.gmra.mrb[0].mxu0 %v3235
        %v4130 = vpop.f32.mrb[0].mxu0
        %v4131 = vadd.f32 %v4026, %v4130
        %v4132 = vpop.f32.mrb[0].mxu0
        %v4133 = vpop.f32.mrb[0].mxu0
        %v4134 = vadd.f32 %v4029, %v4133
        %v4135 = vpop.f32.mrb[0].mxu0
        %4136 = vmatprep.mubr.bf16.mxu0 %v3245
        %4137 = vmatmul.mubr.bf16.gmra.mrb[0].mxu0 %v3244
        %v4138 = vpop.f32.mrb[0].mxu0
        %v4139 = vadd.f32 %v4034, %v4138
        %v4140 = vpop.f32.mrb[0].mxu0
        %v4141 = vpop.f32.mrb[0].mxu0
        %v4142 = vadd.f32 %v4037, %v4141
        %v4143 = vpop.f32.mrb[0].mxu0
        %4144 = vmatprep.mubr.bf16.mxu0 %v3254
        %4145 = vmatmul.mubr.bf16.gmra.mrb[0].mxu0 %v3253
        %v4146 = vpop.f32.mrb[0].mxu0
        %v4147 = vadd.f32 %v4042, %v4146
        %v4148 = vpop.f32.mrb[0].mxu0
        %v4149 = vpop.f32.mrb[0].mxu0
        %v4150 = vadd.f32 %v4045, %v4149
        %v4151 = vpop.f32.mrb[0].mxu0
        %4152 = vmatprep.mubr.bf16.mxu0 %v3263
        %4153 = vmatmul.mubr.bf16.gmra.mrb[0].mxu0 %v3262
        %v4154 = vpop.f32.mrb[0].mxu0
        %v4155 = vadd.f32 %v4050, %v4154
        %v4156 = vpop.f32.mrb[0].mxu0
        %v4157 = vpop.f32.mrb[0].mxu0
        %v4158 = vadd.f32 %v4053, %v4157
        %v4159 = vpop.f32.mrb[0].mxu0
        %4160 = vmatprep.mubr.bf16.mxu0 %v3272
        %4161 = vmatmul.mubr.bf16.gmra.mrb[0].mxu0 %v3271
        %v4162 = vpop.f32.mrb[0].mxu0
        %v4163 = vadd.f32 %v4058, %v4162
        %v4164 = vpop.f32.mrb[0].mxu0
        %v4165 = vpop.f32.mrb[0].mxu0
        %v4166 = vadd.f32 %v4061, %v4165
        %v4167 = vpop.f32.mrb[0].mxu0
        %4168 = vmatprep.mubr.bf16.mxu0 %v3281
        %4169 = vmatmul.mubr.bf16.gmra.mrb[0].mxu0 %v3280
        %v4170 = vpop.f32.mrb[0].mxu0
        %v4171 = vadd.f32 %v4066, %v4170
        %v4172 = vpop.f32.mrb[0].mxu0
        %v4173 = vpop.f32.mrb[0].mxu0
        %v4174 = vadd.f32 %v4069, %v4173
        %v4175 = vpop.f32.mrb[0].mxu0
        %4176 = vmatprep.mubr.bf16.mxu0 %v3290
        %4177 = vmatmul.mubr.bf16.gmra.mrb[0].mxu0 %v3289
        %v4178 = vpop.f32.mrb[0].mxu0
        %v4179 = vadd.f32 %v4074, %v4178
        %v4180 = vpop.f32.mrb[0].mxu0
        %v4181 = vpop.f32.mrb[0].mxu0
        %v4182 = vadd.f32 %v4077, %v4181
        %v4183 = vpop.f32.mrb[0].mxu0
        %4184 = vdwg.mxu0
        %4185 = vmatprep.subr.bf16.mxu0 0
        %4186 = vmatpush1.bf16.msra.mxu0 %v3774
        %4187 = vmatprep.subr.bf16.mxu0 0
        %4188 = vmatpush1.bf16.msra.mxu0 %v3775
        %4189 = vmatprep.subr.bf16.mxu0 0
        %4190 = vmatpush1.bf16.msra.mxu0 %v3776
        %4191 = vmatprep.subr.bf16.mxu0 0
        %4192 = vmatpush1.bf16.msra.mxu0 %v3777
        %4193 = vmatprep.subr.bf16.mxu0 0
        %4194 = vmatpush1.bf16.msra.mxu0 %v3778
        %4195 = vmatprep.subr.bf16.mxu0 0
        %4196 = vmatpush1.bf16.msra.mxu0 %v3779
        %4197 = vmatprep.subr.bf16.mxu0 0
        %4198 = vmatpush1.bf16.msra.mxu0 %v3780
        %4199 = vmatprep.subr.bf16.mxu0 0
        %4200 = vmatpush1.bf16.msra.mxu0 %v3781
        %4201 = vmatprep.subr.bf16.mxu0 0
        %4202 = vmatpush1.bf16.msra.mxu0 %v3782
        %4203 = vmatprep.subr.bf16.mxu0 0
        %4204 = vmatpush1.bf16.msra.mxu0 %v3783
        %4205 = vmatprep.subr.bf16.mxu0 0
        %4206 = vmatpush1.bf16.msra.mxu0 %v3784
        %4207 = vmatprep.subr.bf16.mxu0 0
        %4208 = vmatpush1.bf16.msra.mxu0 %v3785
        %4209 = vmatprep.subr.bf16.mxu0 0
        %4210 = vmatpush1.bf16.msra.mxu0 %v3786
        %4211 = vmatprep.subr.bf16.mxu0 0
        %4212 = vmatpush1.bf16.msra.mxu0 %v3787
        %4213 = vmatprep.subr.bf16.mxu0 0
        %4214 = vmatpush1.bf16.msra.mxu0 %v3788
        %4215 = vmatprep.subr.bf16.mxu0 0
        %4216 = vmatpush1.bf16.msra.mxu0 %v3789
        %4217 = vmatprep.mubr.bf16.mxu0 %v3220
        %4218 = vmatmul.mubr.bf16.gmra.mrb[0].mxu0 %v3219
        %v4219 = vpop.f32.mrb[0].mxu0
        %v4220 = vadd.f32 %v4115, %v4219
        %v4221 = vpop.f32.mrb[0].mxu0
        %v4222 = vpop.f32.mrb[0].mxu0
        %v4223 = vadd.f32 %v4118, %v4222
        %v4224 = vpop.f32.mrb[0].mxu0
        %4225 = vmatprep.mubr.bf16.mxu0 %v3229
        %4226 = vmatmul.mubr.bf16.gmra.mrb[0].mxu0 %v3228
        %v4227 = vpop.f32.mrb[0].mxu0
        %v4228 = vadd.f32 %v4123, %v4227
        %v4229 = vpop.f32.mrb[0].mxu0
        %v4230 = vpop.f32.mrb[0].mxu0
        %v4231 = vadd.f32 %v4126, %v4230
        %v4232 = vpop.f32.mrb[0].mxu0
        %4233 = vmatprep.mubr.bf16.mxu0 %v3238
        %4234 = vmatmul.mubr.bf16.gmra.mrb[0].mxu0 %v3237
        %v4235 = vpop.f32.mrb[0].mxu0
        %v4236 = vadd.f32 %v4131, %v4235
        %v4237 = vpop.f32.mrb[0].mxu0
        %v4238 = vpop.f32.mrb[0].mxu0
        %v4239 = vadd.f32 %v4134, %v4238
        %v4240 = vpop.f32.mrb[0].mxu0
        %4241 = vmatprep.mubr.bf16.mxu0 %v3247
        %4242 = vmatmul.mubr.bf16.gmra.mrb[0].mxu0 %v3246
        %v4243 = vpop.f32.mrb[0].mxu0
        %v4244 = vadd.f32 %v4139, %v4243
        %v4245 = vpop.f32.mrb[0].mxu0
        %v4246 = vpop.f32.mrb[0].mxu0
        %v4247 = vadd.f32 %v4142, %v4246
        %v4248 = vpop.f32.mrb[0].mxu0
        %4249 = vmatprep.mubr.bf16.mxu0 %v3256
        %4250 = vmatmul.mubr.bf16.gmra.mrb[0].mxu0 %v3255
        %v4251 = vpop.f32.mrb[0].mxu0
        %v4252 = vadd.f32 %v4147, %v4251
        %v4253 = vpop.f32.mrb[0].mxu0
        %v4254 = vpop.f32.mrb[0].mxu0
        %v4255 = vadd.f32 %v4150, %v4254
        %v4256 = vpop.f32.mrb[0].mxu0
        %4257 = vmatprep.mubr.bf16.mxu0 %v3265
        %4258 = vmatmul.mubr.bf16.gmra.mrb[0].mxu0 %v3264
        %v4259 = vpop.f32.mrb[0].mxu0
        %v4260 = vadd.f32 %v4155, %v4259
        %v4261 = vpop.f32.mrb[0].mxu0
        %v4262 = vpop.f32.mrb[0].mxu0
        %v4263 = vadd.f32 %v4158, %v4262
        %v4264 = vpop.f32.mrb[0].mxu0
        %4265 = vmatprep.mubr.bf16.mxu0 %v3274
        %4266 = vmatmul.mubr.bf16.gmra.mrb[0].mxu0 %v3273
        %v4267 = vpop.f32.mrb[0].mxu0
        %v4268 = vadd.f32 %v4163, %v4267
        %v4269 = vpop.f32.mrb[0].mxu0
        %v4270 = vpop.f32.mrb[0].mxu0
        %v4271 = vadd.f32 %v4166, %v4270
        %v4272 = vpop.f32.mrb[0].mxu0
        %4273 = vmatprep.mubr.bf16.mxu0 %v3283
        %4274 = vmatmul.mubr.bf16.gmra.mrb[0].mxu0 %v3282
        %v4275 = vpop.f32.mrb[0].mxu0
        %v4276 = vadd.f32 %v4171, %v4275
        %v4277 = vpop.f32.mrb[0].mxu0
        %v4278 = vpop.f32.mrb[0].mxu0
        %v4279 = vadd.f32 %v4174, %v4278
        %v4280 = vpop.f32.mrb[0].mxu0
        %4281 = vmatprep.mubr.bf16.mxu0 %v3292
        %4282 = vmatmul.mubr.bf16.gmra.mrb[0].mxu0 %v3291
        %v4283 = vpop.f32.mrb[0].mxu0
        %v4284 = vadd.f32 %v4179, %v4283
        %v4285 = vpop.f32.mrb[0].mxu0
        %v4286 = vpop.f32.mrb[0].mxu0
        %v4287 = vadd.f32 %v4182, %v4286
        %v4288 = vpop.f32.mrb[0].mxu0
        %4289 = vdwg.mxu0
        %4290 = vmatprep.subr.bf16.mxu0 0
        %4291 = vmatpush1.bf16.msra.mxu0 %v3790
        %4292 = vmatprep.subr.bf16.mxu0 0
        %4293 = vmatpush1.bf16.msra.mxu0 %v3791
        %4294 = vmatprep.subr.bf16.mxu0 0
        %4295 = vmatpush1.bf16.msra.mxu0 %v3792
        %4296 = vmatprep.subr.bf16.mxu0 0
        %4297 = vmatpush1.bf16.msra.mxu0 %v3793
        %4298 = vmatprep.subr.bf16.mxu0 0
        %4299 = vmatpush1.bf16.msra.mxu0 %v3794
        %4300 = vmatprep.subr.bf16.mxu0 0
        %4301 = vmatpush1.bf16.msra.mxu0 %v3795
        %4302 = vmatprep.subr.bf16.mxu0 0
        %4303 = vmatpush1.bf16.msra.mxu0 %v3796
        %4304 = vmatprep.subr.bf16.mxu0 0
        %4305 = vmatpush1.bf16.msra.mxu0 %v3797
        %4306 = vmatprep.subr.bf16.mxu0 0
        %4307 = vmatpush1.bf16.msra.mxu0 0
        %4308 = vmatprep.subr.bf16.mxu0 0
        %4309 = vmatpush1.bf16.msra.mxu0 0
        %4310 = vmatprep.subr.bf16.mxu0 0
        %4311 = vmatpush1.bf16.msra.mxu0 0
        %4312 = vmatprep.subr.bf16.mxu0 0
        %4313 = vmatpush1.bf16.msra.mxu0 0
        %4314 = vmatprep.subr.bf16.mxu0 0
        %4315 = vmatpush1.bf16.msra.mxu0 0
        %4316 = vmatprep.subr.bf16.mxu0 0
        %4317 = vmatpush1.bf16.msra.mxu0 0
        %4318 = vmatprep.subr.bf16.mxu0 0
        %4319 = vmatpush1.bf16.msra.mxu0 0
        %4320 = vmatprep.subr.bf16.mxu0 0
        %4321 = vmatpush1.bf16.msra.mxu0 0
        %4322 = vmatprep.mubr.bf16.mxu0 0
        %4323 = vmatmul.mubr.bf16.gmra.mrb[0].mxu0 %v3221
        %v4324 = vpop.f32.mrb[0].mxu0
        %v4325 = vadd.f32 %v4220, %v4324
        %v4326 = vpop.f32.mrb[0].mxu0
        %v4327 = vpop.f32.mrb[0].mxu0
        %v4328 = vadd.f32 %v4223, %v4327
        %v4329 = vpop.f32.mrb[0].mxu0
        %4330 = vmatprep.mubr.bf16.mxu0 0
        %4331 = vmatmul.mubr.bf16.gmra.mrb[0].mxu0 %v3230
        %v4332 = vpop.f32.mrb[0].mxu0
        %v4333 = vadd.f32 %v4228, %v4332
        %v4334 = vpop.f32.mrb[0].mxu0
        %v4335 = vpop.f32.mrb[0].mxu0
        %v4336 = vadd.f32 %v4231, %v4335
        %v4337 = vpop.f32.mrb[0].mxu0
        %4338 = vmatprep.mubr.bf16.mxu0 0
        %4339 = vmatmul.mubr.bf16.gmra.mrb[0].mxu0 %v3239
        %v4340 = vpop.f32.mrb[0].mxu0
        %v4341 = vadd.f32 %v4236, %v4340
        %v4342 = vpop.f32.mrb[0].mxu0
        %v4343 = vpop.f32.mrb[0].mxu0
        %v4344 = vadd.f32 %v4239, %v4343
        %v4345 = vpop.f32.mrb[0].mxu0
        %4346 = vmatprep.mubr.bf16.mxu0 0
        %4347 = vmatmul.mubr.bf16.gmra.mrb[0].mxu0 %v3248
        %v4348 = vpop.f32.mrb[0].mxu0
        %v4349 = vadd.f32 %v4244, %v4348
        %v4350 = vpop.f32.mrb[0].mxu0
        %v4351 = vpop.f32.mrb[0].mxu0
        %v4352 = vadd.f32 %v4247, %v4351
        %v4353 = vpop.f32.mrb[0].mxu0
        %4354 = vmatprep.mubr.bf16.mxu0 0
        %4355 = vmatmul.mubr.bf16.gmra.mrb[0].mxu0 %v3257
        %v4356 = vpop.f32.mrb[0].mxu0
        %v4357 = vadd.f32 %v4252, %v4356
        %v4358 = vpop.f32.mrb[0].mxu0
        %v4359 = vpop.f32.mrb[0].mxu0
        %v4360 = vadd.f32 %v4255, %v4359
        %v4361 = vpop.f32.mrb[0].mxu0
        %4362 = vmatprep.mubr.bf16.mxu0 0
        %4363 = vmatmul.mubr.bf16.gmra.mrb[0].mxu0 %v3266
        %v4364 = vpop.f32.mrb[0].mxu0
        %v4365 = vadd.f32 %v4260, %v4364
        %v4366 = vpop.f32.mrb[0].mxu0
        %v4367 = vpop.f32.mrb[0].mxu0
        %v4368 = vadd.f32 %v4263, %v4367
        %v4369 = vpop.f32.mrb[0].mxu0
        %4370 = vmatprep.mubr.bf16.mxu0 0
        %4371 = vmatmul.mubr.bf16.gmra.mrb[0].mxu0 %v3275
        %v4372 = vpop.f32.mrb[0].mxu0
        %v4373 = vadd.f32 %v4268, %v4372
        %v4374 = vpop.f32.mrb[0].mxu0
        %v4375 = vpop.f32.mrb[0].mxu0
        %v4376 = vadd.f32 %v4271, %v4375
        %v4377 = vpop.f32.mrb[0].mxu0
        %4378 = vmatprep.mubr.bf16.mxu0 0
        %4379 = vmatmul.mubr.bf16.gmra.mrb[0].mxu0 %v3284
        %v4380 = vpop.f32.mrb[0].mxu0
        %v4381 = vadd.f32 %v4276, %v4380
        %v4382 = vpop.f32.mrb[0].mxu0
        %v4383 = vpop.f32.mrb[0].mxu0
        %v4384 = vadd.f32 %v4279, %v4383
        %v4385 = vpop.f32.mrb[0].mxu0
        %4386 = vmatprep.mubr.bf16.mxu0 0
        %4387 = vmatmul.mubr.bf16.gmra.mrb[0].mxu0 %v3293
        %v4388 = vpop.f32.mrb[0].mxu0
        %v4389 = vadd.f32 %v4284, %v4388
        %v4390 = vpop.f32.mrb[0].mxu0
        %v4391 = vpop.f32.mrb[0].mxu0
        %v4392 = vadd.f32 %v4287, %v4391
        %v4393 = vpop.f32.mrb[0].mxu0
        %4394 = vdwg.mxu0
        %v4413 = vcombine.high %v4325, %v4325
        %v4415 = vunpack.c.l.s4 1983009808
        %v4416 = vunpack.c.0.s8 %v4415
        %v4417 = vlaneseq
        %v4418 = vshrl.u32 %v4417, 7
        %v4419 = vsub.s32 %v4416, %v4418
        %v4420 = vrot.slane %v4325, %v4419
        %v4422 = vunpack.c.l.s4 1983009808
        %v4423 = vunpack.c.0.s8 %v4422
        %v4424 = vlaneseq
        %v4425 = vshrl.u32 %v4424, 7
        %v4426 = vsub.s32 %v4423, %v4425
        %v4427 = vrot.slane %v4413, %v4426
        %v4428 = vcombine.high %v4420, %v4420
        %v4429 = vcombine.high %v4427, %v4427
        %v4430 = vcombine.high %v4328, %v4328
        %v4432 = vunpack.c.l.s4 1983009808
        %v4433 = vunpack.c.0.s8 %v4432
        %v4434 = vlaneseq
        %v4435 = vshrl.u32 %v4434, 7
        %v4436 = vsub.s32 %v4433, %v4435
        %v4437 = vrot.slane %v4328, %v4436
        %v4439 = vunpack.c.l.s4 1983009808
        %v4440 = vunpack.c.0.s8 %v4439
        %v4441 = vlaneseq
        %v4442 = vshrl.u32 %v4441, 7
        %v4443 = vsub.s32 %v4440, %v4442
        %v4444 = vrot.slane %v4430, %v4443
        %v4445 = vcombine.high %v4437, %v4437
        %v4446 = vcombine.high %v4444, %v4444
        %v4447 = vcombine.high %v4333, %v4333
        %v4449 = vunpack.c.l.s4 1983009808
        %v4450 = vunpack.c.0.s8 %v4449
        %v4451 = vlaneseq
        %v4452 = vshrl.u32 %v4451, 7
        %v4453 = vsub.s32 %v4450, %v4452
        %v4454 = vrot.slane %v4333, %v4453
        %v4456 = vunpack.c.l.s4 1983009808
        %v4457 = vunpack.c.0.s8 %v4456
        %v4458 = vlaneseq
        %v4459 = vshrl.u32 %v4458, 7
        %v4460 = vsub.s32 %v4457, %v4459
        %v4461 = vrot.slane %v4447, %v4460
        %v4462 = vcombine.high %v4454, %v4454
        %v4463 = vcombine.high %v4461, %v4461
        %v4464 = vcombine.high %v4336, %v4336
        %v4466 = vunpack.c.l.s4 1983009808
        %v4467 = vunpack.c.0.s8 %v4466
        %v4468 = vlaneseq
        %v4469 = vshrl.u32 %v4468, 7
        %v4470 = vsub.s32 %v4467, %v4469
        %v4471 = vrot.slane %v4336, %v4470
        %v4473 = vunpack.c.l.s4 1983009808
        %v4474 = vunpack.c.0.s8 %v4473
        %v4475 = vlaneseq
        %v4476 = vshrl.u32 %v4475, 7
        %v4477 = vsub.s32 %v4474, %v4476
        %v4478 = vrot.slane %v4464, %v4477
        %v4479 = vcombine.high %v4471, %v4471
        %v4480 = vcombine.high %v4478, %v4478
        %v4481 = vcombine.high %v4341, %v4341
        %v4483 = vunpack.c.l.s4 1983009808
        %v4484 = vunpack.c.0.s8 %v4483
        %v4485 = vlaneseq
        %v4486 = vshrl.u32 %v4485, 7
        %v4487 = vsub.s32 %v4484, %v4486
        %v4488 = vrot.slane %v4341, %v4487
        %v4490 = vunpack.c.l.s4 1983009808
        %v4491 = vunpack.c.0.s8 %v4490
        %v4492 = vlaneseq
        %v4493 = vshrl.u32 %v4492, 7
        %v4494 = vsub.s32 %v4491, %v4493
        %v4495 = vrot.slane %v4481, %v4494
        %v4496 = vcombine.high %v4495, %v4495
        %v4497 = vcombine.high %v4344, %v4344
        %v4499 = vunpack.c.l.s4 1983009808
        %v4500 = vunpack.c.0.s8 %v4499
        %v4501 = vlaneseq
        %v4502 = vshrl.u32 %v4501, 7
        %v4503 = vsub.s32 %v4500, %v4502
        %v4504 = vrot.slane %v4344, %v4503
        %v4506 = vunpack.c.l.s4 1983009808
        %v4507 = vunpack.c.0.s8 %v4506
        %v4508 = vlaneseq
        %v4509 = vshrl.u32 %v4508, 7
        %v4510 = vsub.s32 %v4507, %v4509
        %v4511 = vrot.slane %v4497, %v4510
        %v4512 = vcombine.high %v4504, %v4504
        %v4513 = vcombine.high %v4511, %v4511
        %v4514 = vcombine.high %v4349, %v4349
        %v4516 = vunpack.c.l.s4 1983009808
        %v4517 = vunpack.c.0.s8 %v4516
        %v4518 = vlaneseq
        %v4519 = vshrl.u32 %v4518, 7
        %v4520 = vsub.s32 %v4517, %v4519
        %v4521 = vrot.slane %v4349, %v4520
        %v4523 = vunpack.c.l.s4 1983009808
        %v4524 = vunpack.c.0.s8 %v4523
        %v4525 = vlaneseq
        %v4526 = vshrl.u32 %v4525, 7
        %v4527 = vsub.s32 %v4524, %v4526
        %v4528 = vrot.slane %v4514, %v4527
        %v4529 = vcombine.high %v4521, %v4521
        %v4530 = vcombine.high %v4528, %v4528
        %v4531 = vcombine.high %v4352, %v4352
        %v4533 = vunpack.c.l.s4 1983009808
        %v4534 = vunpack.c.0.s8 %v4533
        %v4535 = vlaneseq
        %v4536 = vshrl.u32 %v4535, 7
        %v4537 = vsub.s32 %v4534, %v4536
        %v4538 = vrot.slane %v4352, %v4537
        %v4540 = vunpack.c.l.s4 1983009808
        %v4541 = vunpack.c.0.s8 %v4540
        %v4542 = vlaneseq
        %v4543 = vshrl.u32 %v4542, 7
        %v4544 = vsub.s32 %v4541, %v4543
        %v4545 = vrot.slane %v4531, %v4544
        %v4546 = vcombine.high %v4538, %v4538
        %v4547 = vcombine.high %v4545, %v4545
        %v4548 = vcombine.high %v4357, %v4357
        %v4550 = vunpack.c.l.s4 1983009808
        %v4551 = vunpack.c.0.s8 %v4550
        %v4552 = vlaneseq
        %v4553 = vshrl.u32 %v4552, 7
        %v4554 = vsub.s32 %v4551, %v4553
        %v4555 = vrot.slane %v4357, %v4554
        %v4557 = vunpack.c.l.s4 1983009808
        %v4558 = vunpack.c.0.s8 %v4557
        %v4559 = vlaneseq
        %v4560 = vshrl.u32 %v4559, 7
        %v4561 = vsub.s32 %v4558, %v4560
        %v4562 = vrot.slane %v4548, %v4561
        %v4563 = vcombine.high %v4555, %v4555
        %v4564 = vcombine.high %v4360, %v4360
        %v4566 = vunpack.c.l.s4 1983009808
        %v4567 = vunpack.c.0.s8 %v4566
        %v4568 = vlaneseq
        %v4569 = vshrl.u32 %v4568, 7
        %v4570 = vsub.s32 %v4567, %v4569
        %v4571 = vrot.slane %v4360, %v4570
        %v4573 = vunpack.c.l.s4 1983009808
        %v4574 = vunpack.c.0.s8 %v4573
        %v4575 = vlaneseq
        %v4576 = vshrl.u32 %v4575, 7
        %v4577 = vsub.s32 %v4574, %v4576
        %v4578 = vrot.slane %v4564, %v4577
        %v4579 = vcombine.high %v4571, %v4571
        %v4580 = vcombine.high %v4578, %v4578
        %v4581 = vcombine.high %v4365, %v4365
        %v4583 = vunpack.c.l.s4 1983009808
        %v4584 = vunpack.c.0.s8 %v4583
        %v4585 = vlaneseq
        %v4586 = vshrl.u32 %v4585, 7
        %v4587 = vsub.s32 %v4584, %v4586
        %v4588 = vrot.slane %v4365, %v4587
        %v4590 = vunpack.c.l.s4 1983009808
        %v4591 = vunpack.c.0.s8 %v4590
        %v4592 = vlaneseq
        %v4593 = vshrl.u32 %v4592, 7
        %v4594 = vsub.s32 %v4591, %v4593
        %v4595 = vrot.slane %v4581, %v4594
        %v4596 = vcombine.high %v4588, %v4588
        %v4597 = vcombine.high %v4595, %v4595
        %v4598 = vcombine.high %v4368, %v4368
        %v4600 = vunpack.c.l.s4 1983009808
        %v4601 = vunpack.c.0.s8 %v4600
        %v4602 = vlaneseq
        %v4603 = vshrl.u32 %v4602, 7
        %v4604 = vsub.s32 %v4601, %v4603
        %v4605 = vrot.slane %v4368, %v4604
        %v4607 = vunpack.c.l.s4 1983009808
        %v4608 = vunpack.c.0.s8 %v4607
        %v4609 = vlaneseq
        %v4610 = vshrl.u32 %v4609, 7
        %v4611 = vsub.s32 %v4608, %v4610
        %v4612 = vrot.slane %v4598, %v4611
        %v4613 = vcombine.high %v4605, %v4605
        %v4614 = vcombine.high %v4612, %v4612
        %v4615 = vcombine.high %v4373, %v4373
        %v4617 = vunpack.c.l.s4 1983009808
        %v4618 = vunpack.c.0.s8 %v4617
        %v4619 = vlaneseq
        %v4620 = vshrl.u32 %v4619, 7
        %v4621 = vsub.s32 %v4618, %v4620
        %v4622 = vrot.slane %v4373, %v4621
        %v4624 = vunpack.c.l.s4 1983009808
        %v4625 = vunpack.c.0.s8 %v4624
        %v4626 = vlaneseq
        %v4627 = vshrl.u32 %v4626, 7
        %v4628 = vsub.s32 %v4625, %v4627
        %v4629 = vrot.slane %v4615, %v4628
        %v4630 = vcombine.high %v4622, %v4622
        %v4631 = vcombine.high %v4629, %v4629
        %v4632 = vcombine.high %v4376, %v4376
        %v4634 = vunpack.c.l.s4 1983009808
        %v4635 = vunpack.c.0.s8 %v4634
        %v4636 = vlaneseq
        %v4637 = vshrl.u32 %v4636, 7
        %v4638 = vsub.s32 %v4635, %v4637
        %v4639 = vrot.slane %v4376, %v4638
        %v4641 = vunpack.c.l.s4 1983009808
        %v4642 = vunpack.c.0.s8 %v4641
        %v4643 = vlaneseq
        %v4644 = vshrl.u32 %v4643, 7
        %v4645 = vsub.s32 %v4642, %v4644
        %v4646 = vrot.slane %v4632, %v4645
        %v4647 = vcombine.high %v4646, %v4646
        %v4648 = vcombine.high %v4381, %v4381
        %v4650 = vunpack.c.l.s4 1983009808
        %v4651 = vunpack.c.0.s8 %v4650
        %v4652 = vlaneseq
        %v4653 = vshrl.u32 %v4652, 7
        %v4654 = vsub.s32 %v4651, %v4653
        %v4655 = vrot.slane %v4381, %v4654
        %v4657 = vunpack.c.l.s4 1983009808
        %v4658 = vunpack.c.0.s8 %v4657
        %v4659 = vlaneseq
        %v4660 = vshrl.u32 %v4659, 7
        %v4661 = vsub.s32 %v4658, %v4660
        %v4662 = vrot.slane %v4648, %v4661
        %v4663 = vcombine.high %v4655, %v4655
        %v4664 = vcombine.high %v4662, %v4662
        %v4665 = vcombine.high %v4384, %v4384
        %v4667 = vunpack.c.l.s4 1983009808
        %v4668 = vunpack.c.0.s8 %v4667
        %v4669 = vlaneseq
        %v4670 = vshrl.u32 %v4669, 7
        %v4671 = vsub.s32 %v4668, %v4670
        %v4672 = vrot.slane %v4384, %v4671
        %v4674 = vunpack.c.l.s4 1983009808
        %v4675 = vunpack.c.0.s8 %v4674
        %v4676 = vlaneseq
        %v4677 = vshrl.u32 %v4676, 7
        %v4678 = vsub.s32 %v4675, %v4677
        %v4679 = vrot.slane %v4665, %v4678
        %v4680 = vcombine.high %v4672, %v4672
        %v4681 = vcombine.high %v4679, %v4679
        %v4682 = vcombine.high %v4389, %v4389
        %v4684 = vunpack.c.l.s4 1983009808
        %v4685 = vunpack.c.0.s8 %v4684
        %v4686 = vlaneseq
        %v4687 = vshrl.u32 %v4686, 7
        %v4688 = vsub.s32 %v4685, %v4687
        %v4689 = vrot.slane %v4389, %v4688
        %v4691 = vunpack.c.l.s4 1983009808
        %v4692 = vunpack.c.0.s8 %v4691
        %v4693 = vlaneseq
        %v4694 = vshrl.u32 %v4693, 7
        %v4695 = vsub.s32 %v4692, %v4694
        %v4696 = vrot.slane %v4682, %v4695
        %v4697 = vcombine.high %v4689, %v4689
        %v4698 = vcombine.high %v4696, %v4696
        %v4699 = vcombine.high %v4392, %v4392
        %v4701 = vunpack.c.l.s4 1983009808
        %v4702 = vunpack.c.0.s8 %v4701
        %v4703 = vlaneseq
        %v4704 = vshrl.u32 %v4703, 7
        %v4705 = vsub.s32 %v4702, %v4704
        %v4706 = vrot.slane %v4392, %v4705
        %v4708 = vunpack.c.l.s4 1983009808
        %v4709 = vunpack.c.0.s8 %v4708
        %v4710 = vlaneseq
        %v4711 = vshrl.u32 %v4710, 7
        %v4712 = vsub.s32 %v4709, %v4711
        %v4713 = vrot.slane %v4699, %v4712
        %v4714 = vcombine.high %v4706, %v4706
        %v4779 = vld [vmem:[%s8] sm:$0x1]
        %v4781 = vlaneseq
        %v4782 = vshrl.u32 %v4781, 7
        %v4783 = vsub.s32 0, %v4782
        %v4784 = vrot.slane %v4779, %v4783
        %v4785 = vcombine.high %v4784, %v4784
        %v4787 = vunpack.c.l.s4 1983009808
        %v4788 = vunpack.c.0.s8 %v4787
        %v4789 = vlaneseq
        %v4790 = vshrl.u32 %v4789, 7
        %v4791 = vsub.s32 %v4788, %v4790
        %v4792 = vrot.slane %v4784, %v4791
        %v4794 = vunpack.c.l.s4 1983009808
        %v4795 = vunpack.c.0.s8 %v4794
        %v4796 = vlaneseq
        %v4797 = vshrl.u32 %v4796, 7
        %v4798 = vsub.s32 %v4795, %v4797
        %v4799 = vrot.slane %v4785, %v4798
        %v4800 = vcombine.high %v4792, %v4792
        %v4801 = vcombine.high %v4799, %v4799
        %v4806 = vadd.f32 %v4420, %v4792
        %v4807 = vadd.f32 %v4428, %v4800
        %v4808 = vadd.f32 %v4427, %v4799
        %v4809 = vadd.f32 %v4429, %v4801
        %v4810 = vadd.f32 %v4437, %v4792
        %v4811 = vadd.f32 %v4445, %v4800
        %v4812 = vadd.f32 %v4444, %v4799
        %v4813 = vadd.f32 %v4446, %v4801
        %v4814 = vadd.f32 %v4462, %v4792
        %v4815 = vadd.f32 %v4461, %v4800
        %v4816 = vadd.f32 %v4463, %v4799
        %v4817 = vadd.f32 %v4471, %v4801
        %v4818 = vadd.f32 %v4479, %v4792
        %v4819 = vadd.f32 %v4478, %v4800
        %v4820 = vadd.f32 %v4480, %v4799
        %v4821 = vadd.f32 %v4488, %v4801
        %v4822 = vadd.f32 %v4495, %v4792
        %v4823 = vadd.f32 %v4496, %v4800
        %v4824 = vadd.f32 %v4504, %v4799
        %v4825 = vadd.f32 %v4512, %v4801
        %v4826 = vadd.f32 %v4511, %v4792
        %v4827 = vadd.f32 %v4513, %v4800
        %v4828 = vadd.f32 %v4521, %v4799
        %v4829 = vadd.f32 %v4529, %v4801
        %v4830 = vadd.f32 %v4530, %v4792
        %v4831 = vadd.f32 %v4538, %v4800
        %v4832 = vadd.f32 %v4546, %v4799
        %v4833 = vadd.f32 %v4545, %v4801
        %v4834 = vadd.f32 %v4547, %v4792
        %v4835 = vadd.f32 %v4555, %v4800
        %v4836 = vadd.f32 %v4563, %v4799
        %v4837 = vadd.f32 %v4562, %v4801
        %v4838 = vadd.f32 %v4571, %v4792
        %v4839 = vadd.f32 %v4579, %v4800
        %v4840 = vadd.f32 %v4578, %v4799
        %v4841 = vadd.f32 %v4580, %v4801
        %v4842 = vadd.f32 %v4588, %v4792
        %v4843 = vadd.f32 %v4596, %v4800
        %v4844 = vadd.f32 %v4595, %v4799
        %v4845 = vadd.f32 %v4597, %v4801
        %v4846 = vadd.f32 %v4613, %v4792
        %v4847 = vadd.f32 %v4612, %v4800
        %v4848 = vadd.f32 %v4614, %v4799
        %v4849 = vadd.f32 %v4622, %v4801
        %v4850 = vadd.f32 %v4630, %v4792
        %v4851 = vadd.f32 %v4629, %v4800
        %v4852 = vadd.f32 %v4631, %v4799
        %v4853 = vadd.f32 %v4639, %v4801
        %v4854 = vadd.f32 %v4646, %v4792
        %v4855 = vadd.f32 %v4647, %v4800
        %v4856 = vadd.f32 %v4655, %v4799
        %v4857 = vadd.f32 %v4663, %v4801
        %v4858 = vadd.f32 %v4662, %v4792
        %v4859 = vadd.f32 %v4664, %v4800
        %v4860 = vadd.f32 %v4672, %v4799
        %v4861 = vadd.f32 %v4680, %v4801
        %v4862 = vadd.f32 %v4681, %v4792
        %v4863 = vadd.f32 %v4689, %v4800
        %v4864 = vadd.f32 %v4697, %v4799
        %v4865 = vadd.f32 %v4696, %v4801
        %v4866 = vadd.f32 %v4698, %v4792
        %v4867 = vadd.f32 %v4706, %v4800
        %v4868 = vadd.f32 %v4714, %v4799
        %v4869 = vadd.f32 %v4713, %v4801
        %v4870 = vmax.f32 %v4806, 0.0
        %v4871 = vmax.f32 %v4807, 0.0
        %v4872 = vmax.f32 %v4808, 0.0
        %v4873 = vmax.f32 %v4809, 0.0
        %v4874 = vmax.f32 %v4810, 0.0
        %v4875 = vmax.f32 %v4811, 0.0
        %v4876 = vmax.f32 %v4812, 0.0
        %v4877 = vmax.f32 %v4813, 0.0
        %v4878 = vmax.f32 %v4814, 0.0
        %v4879 = vmax.f32 %v4815, 0.0
        %v4880 = vmax.f32 %v4816, 0.0
        %v4881 = vmax.f32 %v4817, 0.0
        %v4882 = vmax.f32 %v4818, 0.0
        %v4883 = vmax.f32 %v4819, 0.0
        %v4884 = vmax.f32 %v4820, 0.0
        %v4885 = vmax.f32 %v4821, 0.0
        %v4886 = vmax.f32 %v4822, 0.0
        %v4887 = vmax.f32 %v4823, 0.0
        %v4888 = vmax.f32 %v4824, 0.0
        %v4889 = vmax.f32 %v4825, 0.0
        %v4890 = vmax.f32 %v4826, 0.0
        %v4891 = vmax.f32 %v4827, 0.0
        %v4892 = vmax.f32 %v4828, 0.0
        %v4893 = vmax.f32 %v4829, 0.0
        %v4894 = vmax.f32 %v4830, 0.0
        %v4895 = vmax.f32 %v4831, 0.0
        %v4896 = vmax.f32 %v4832, 0.0
        %v4897 = vmax.f32 %v4833, 0.0
        %v4898 = vmax.f32 %v4834, 0.0
        %v4899 = vmax.f32 %v4835, 0.0
        %v4900 = vmax.f32 %v4836, 0.0
        %v4901 = vmax.f32 %v4837, 0.0
        %v4902 = vmax.f32 %v4838, 0.0
        %v4903 = vmax.f32 %v4839, 0.0
        %v4904 = vmax.f32 %v4840, 0.0
        %v4905 = vmax.f32 %v4841, 0.0
        %v4906 = vmax.f32 %v4842, 0.0
        %v4907 = vmax.f32 %v4843, 0.0
        %v4908 = vmax.f32 %v4844, 0.0
        %v4909 = vmax.f32 %v4845, 0.0
        %v4910 = vmax.f32 %v4846, 0.0
        %v4911 = vmax.f32 %v4847, 0.0
        %v4912 = vmax.f32 %v4848, 0.0
        %v4913 = vmax.f32 %v4849, 0.0
        %v4914 = vmax.f32 %v4850, 0.0
        %v4915 = vmax.f32 %v4851, 0.0
        %v4916 = vmax.f32 %v4852, 0.0
        %v4917 = vmax.f32 %v4853, 0.0
        %v4918 = vmax.f32 %v4854, 0.0
        %v4919 = vmax.f32 %v4855, 0.0
        %v4920 = vmax.f32 %v4856, 0.0
        %v4921 = vmax.f32 %v4857, 0.0
        %v4922 = vmax.f32 %v4858, 0.0
        %v4923 = vmax.f32 %v4859, 0.0
        %v4924 = vmax.f32 %v4860, 0.0
        %v4925 = vmax.f32 %v4861, 0.0
        %v4926 = vmax.f32 %v4862, 0.0
        %v4927 = vmax.f32 %v4863, 0.0
        %v4928 = vmax.f32 %v4864, 0.0
        %v4929 = vmax.f32 %v4865, 0.0
        %v4930 = vmax.f32 %v4866, 0.0
        %v4931 = vmax.f32 %v4867, 0.0
        %v4932 = vmax.f32 %v4868, 0.0
        %v4933 = vmax.f32 %v4869, 0.0
        %v4998 = vcombine.low %v4870, %v4871
        %v4999 = vcombine.low %v4872, %v4873
        %v5001 = vunpack.c.l.s4 1983009808
        %v5002 = vunpack.c.0.s8 %v5001
        %v5003 = vlaneseq
        %v5004 = vshrl.u32 %v5003, 7
        %v5005 = vsub.s32 %v5002, %v5004
        %v5006 = vrot.slane %v4998, %v5005
        %v5008 = vunpack.c.l.s4 1983009808
        %v5009 = vunpack.c.0.s8 %v5008
        %v5010 = vlaneseq
        %v5011 = vshrl.u32 %v5010, 7
        %v5012 = vsub.s32 %v5009, %v5011
        %v5013 = vrot.slane %v4999, %v5012
        %v5014 = vcombine.low %v5006, %v5013
        %v5015 = vcombine.low %v4874, %v4875
        %v5016 = vcombine.low %v4876, %v4877
        %v5018 = vunpack.c.l.s4 1983009808
        %v5019 = vunpack.c.0.s8 %v5018
        %v5020 = vlaneseq
        %v5021 = vshrl.u32 %v5020, 7
        %v5022 = vsub.s32 %v5019, %v5021
        %v5023 = vrot.slane %v5015, %v5022
        %v5025 = vunpack.c.l.s4 1983009808
        %v5026 = vunpack.c.0.s8 %v5025
        %v5027 = vlaneseq
        %v5028 = vshrl.u32 %v5027, 7
        %v5029 = vsub.s32 %v5026, %v5028
        %v5030 = vrot.slane %v5016, %v5029
        %v5031 = vcombine.low %v5023, %v5030
        %v5032 = vcombine.low %v4878, %v4879
        %v5033 = vcombine.low %v4880, %v4881
        %v5035 = vunpack.c.l.s4 1983009808
        %v5036 = vunpack.c.0.s8 %v5035
        %v5037 = vlaneseq
        %v5038 = vshrl.u32 %v5037, 7
        %v5039 = vsub.s32 %v5036, %v5038
        %v5040 = vrot.slane %v5032, %v5039
        %v5042 = vunpack.c.l.s4 1983009808
        %v5043 = vunpack.c.0.s8 %v5042
        %v5044 = vlaneseq
        %v5045 = vshrl.u32 %v5044, 7
        %v5046 = vsub.s32 %v5043, %v5045
        %v5047 = vrot.slane %v5033, %v5046
        %v5048 = vcombine.low %v5040, %v5047
        %v5049 = vcombine.low %v4882, %v4883
        %v5050 = vcombine.low %v4884, %v4885
        %v5052 = vunpack.c.l.s4 1983009808
        %v5053 = vunpack.c.0.s8 %v5052
        %v5054 = vlaneseq
        %v5055 = vshrl.u32 %v5054, 7
        %v5056 = vsub.s32 %v5053, %v5055
        %v5057 = vrot.slane %v5049, %v5056
        %v5059 = vunpack.c.l.s4 1983009808
        %v5060 = vunpack.c.0.s8 %v5059
        %v5061 = vlaneseq
        %v5062 = vshrl.u32 %v5061, 7
        %v5063 = vsub.s32 %v5060, %v5062
        %v5064 = vrot.slane %v5050, %v5063
        %v5065 = vcombine.low %v5057, %v5064
        %v5066 = vcombine.low %v4886, %v4887
        %v5067 = vcombine.low %v4888, %v4889
        %v5069 = vunpack.c.l.s4 1983009808
        %v5070 = vunpack.c.0.s8 %v5069
        %v5071 = vlaneseq
        %v5072 = vshrl.u32 %v5071, 7
        %v5073 = vsub.s32 %v5070, %v5072
        %v5074 = vrot.slane %v5066, %v5073
        %v5076 = vunpack.c.l.s4 1983009808
        %v5077 = vunpack.c.0.s8 %v5076
        %v5078 = vlaneseq
        %v5079 = vshrl.u32 %v5078, 7
        %v5080 = vsub.s32 %v5077, %v5079
        %v5081 = vrot.slane %v5067, %v5080
        %v5082 = vcombine.low %v5074, %v5081
        %v5083 = vcombine.low %v4890, %v4891
        %v5084 = vcombine.low %v4892, %v4893
        %v5086 = vunpack.c.l.s4 1983009808
        %v5087 = vunpack.c.0.s8 %v5086
        %v5088 = vlaneseq
        %v5089 = vshrl.u32 %v5088, 7
        %v5090 = vsub.s32 %v5087, %v5089
        %v5091 = vrot.slane %v5083, %v5090
        %v5093 = vunpack.c.l.s4 1983009808
        %v5094 = vunpack.c.0.s8 %v5093
        %v5095 = vlaneseq
        %v5096 = vshrl.u32 %v5095, 7
        %v5097 = vsub.s32 %v5094, %v5096
        %v5098 = vrot.slane %v5084, %v5097
        %v5099 = vcombine.low %v5091, %v5098
        %v5100 = vcombine.low %v4894, %v4895
        %v5101 = vcombine.low %v4896, %v4897
        %v5103 = vunpack.c.l.s4 1983009808
        %v5104 = vunpack.c.0.s8 %v5103
        %v5105 = vlaneseq
        %v5106 = vshrl.u32 %v5105, 7
        %v5107 = vsub.s32 %v5104, %v5106
        %v5108 = vrot.slane %v5100, %v5107
        %v5110 = vunpack.c.l.s4 1983009808
        %v5111 = vunpack.c.0.s8 %v5110
        %v5112 = vlaneseq
        %v5113 = vshrl.u32 %v5112, 7
        %v5114 = vsub.s32 %v5111, %v5113
        %v5115 = vrot.slane %v5101, %v5114
        %v5116 = vcombine.low %v5108, %v5115
        %v5117 = vcombine.low %v4898, %v4899
        %v5118 = vcombine.low %v4900, %v4901
        %v5120 = vunpack.c.l.s4 1983009808
        %v5121 = vunpack.c.0.s8 %v5120
        %v5122 = vlaneseq
        %v5123 = vshrl.u32 %v5122, 7
        %v5124 = vsub.s32 %v5121, %v5123
        %v5125 = vrot.slane %v5117, %v5124
        %v5127 = vunpack.c.l.s4 1983009808
        %v5128 = vunpack.c.0.s8 %v5127
        %v5129 = vlaneseq
        %v5130 = vshrl.u32 %v5129, 7
        %v5131 = vsub.s32 %v5128, %v5130
        %v5132 = vrot.slane %v5118, %v5131
        %v5133 = vcombine.low %v5125, %v5132
        %v5134 = vcombine.low %v4902, %v4903
        %v5135 = vcombine.low %v4904, %v4905
        %v5137 = vunpack.c.l.s4 1983009808
        %v5138 = vunpack.c.0.s8 %v5137
        %v5139 = vlaneseq
        %v5140 = vshrl.u32 %v5139, 7
        %v5141 = vsub.s32 %v5138, %v5140
        %v5142 = vrot.slane %v5134, %v5141
        %v5144 = vunpack.c.l.s4 1983009808
        %v5145 = vunpack.c.0.s8 %v5144
        %v5146 = vlaneseq
        %v5147 = vshrl.u32 %v5146, 7
        %v5148 = vsub.s32 %v5145, %v5147
        %v5149 = vrot.slane %v5135, %v5148
        %v5150 = vcombine.low %v5142, %v5149
        %v5151 = vcombine.low %v4906, %v4907
        %v5152 = vcombine.low %v4908, %v4909
        %v5154 = vunpack.c.l.s4 1983009808
        %v5155 = vunpack.c.0.s8 %v5154
        %v5156 = vlaneseq
        %v5157 = vshrl.u32 %v5156, 7
        %v5158 = vsub.s32 %v5155, %v5157
        %v5159 = vrot.slane %v5151, %v5158
        %v5161 = vunpack.c.l.s4 1983009808
        %v5162 = vunpack.c.0.s8 %v5161
        %v5163 = vlaneseq
        %v5164 = vshrl.u32 %v5163, 7
        %v5165 = vsub.s32 %v5162, %v5164
        %v5166 = vrot.slane %v5152, %v5165
        %v5167 = vcombine.low %v5159, %v5166
        %v5168 = vcombine.low %v4910, %v4911
        %v5169 = vcombine.low %v4912, %v4913
        %v5171 = vunpack.c.l.s4 1983009808
        %v5172 = vunpack.c.0.s8 %v5171
        %v5173 = vlaneseq
        %v5174 = vshrl.u32 %v5173, 7
        %v5175 = vsub.s32 %v5172, %v5174
        %v5176 = vrot.slane %v5168, %v5175
        %v5178 = vunpack.c.l.s4 1983009808
        %v5179 = vunpack.c.0.s8 %v5178
        %v5180 = vlaneseq
        %v5181 = vshrl.u32 %v5180, 7
        %v5182 = vsub.s32 %v5179, %v5181
        %v5183 = vrot.slane %v5169, %v5182
        %v5184 = vcombine.low %v5176, %v5183
        %v5185 = vcombine.low %v4914, %v4915
        %v5186 = vcombine.low %v4916, %v4917
        %v5188 = vunpack.c.l.s4 1983009808
        %v5189 = vunpack.c.0.s8 %v5188
        %v5190 = vlaneseq
        %v5191 = vshrl.u32 %v5190, 7
        %v5192 = vsub.s32 %v5189, %v5191
        %v5193 = vrot.slane %v5185, %v5192
        %v5195 = vunpack.c.l.s4 1983009808
        %v5196 = vunpack.c.0.s8 %v5195
        %v5197 = vlaneseq
        %v5198 = vshrl.u32 %v5197, 7
        %v5199 = vsub.s32 %v5196, %v5198
        %v5200 = vrot.slane %v5186, %v5199
        %v5201 = vcombine.low %v5193, %v5200
        %v5202 = vcombine.low %v4918, %v4919
        %v5203 = vcombine.low %v4920, %v4921
        %v5205 = vunpack.c.l.s4 1983009808
        %v5206 = vunpack.c.0.s8 %v5205
        %v5207 = vlaneseq
        %v5208 = vshrl.u32 %v5207, 7
        %v5209 = vsub.s32 %v5206, %v5208
        %v5210 = vrot.slane %v5202, %v5209
        %v5212 = vunpack.c.l.s4 1983009808
        %v5213 = vunpack.c.0.s8 %v5212
        %v5214 = vlaneseq
        %v5215 = vshrl.u32 %v5214, 7
        %v5216 = vsub.s32 %v5213, %v5215
        %v5217 = vrot.slane %v5203, %v5216
        %v5218 = vcombine.low %v5210, %v5217
        %v5219 = vcombine.low %v4922, %v4923
        %v5220 = vcombine.low %v4924, %v4925
        %v5222 = vunpack.c.l.s4 1983009808
        %v5223 = vunpack.c.0.s8 %v5222
        %v5224 = vlaneseq
        %v5225 = vshrl.u32 %v5224, 7
        %v5226 = vsub.s32 %v5223, %v5225
        %v5227 = vrot.slane %v5219, %v5226
        %v5229 = vunpack.c.l.s4 1983009808
        %v5230 = vunpack.c.0.s8 %v5229
        %v5231 = vlaneseq
        %v5232 = vshrl.u32 %v5231, 7
        %v5233 = vsub.s32 %v5230, %v5232
        %v5234 = vrot.slane %v5220, %v5233
        %v5235 = vcombine.low %v5227, %v5234
        %v5236 = vcombine.low %v4926, %v4927
        %v5237 = vcombine.low %v4928, %v4929
        %v5239 = vunpack.c.l.s4 1983009808
        %v5240 = vunpack.c.0.s8 %v5239
        %v5241 = vlaneseq
        %v5242 = vshrl.u32 %v5241, 7
        %v5243 = vsub.s32 %v5240, %v5242
        %v5244 = vrot.slane %v5236, %v5243
        %v5246 = vunpack.c.l.s4 1983009808
        %v5247 = vunpack.c.0.s8 %v5246
        %v5248 = vlaneseq
        %v5249 = vshrl.u32 %v5248, 7
        %v5250 = vsub.s32 %v5247, %v5249
        %v5251 = vrot.slane %v5237, %v5250
        %v5252 = vcombine.low %v5244, %v5251
        %v5253 = vcombine.low %v4930, %v4931
        %v5254 = vcombine.low %v4932, %v4933
        %v5256 = vunpack.c.l.s4 1983009808
        %v5257 = vunpack.c.0.s8 %v5256
        %v5258 = vlaneseq
        %v5259 = vshrl.u32 %v5258, 7
        %v5260 = vsub.s32 %v5257, %v5259
        %v5261 = vrot.slane %v5253, %v5260
        %v5263 = vunpack.c.l.s4 1983009808
        %v5264 = vunpack.c.0.s8 %v5263
        %v5265 = vlaneseq
        %v5266 = vshrl.u32 %v5265, 7
        %v5267 = vsub.s32 %v5264, %v5266
        %v5268 = vrot.slane %v5254, %v5267
        %v5269 = vcombine.low %v5261, %v5268
        %v5286 = vpack.c.bf16 %v5031, %v5014
        %v5287 = vpack.c.bf16 %v5065, %v5048
        %v5288 = vpack.c.bf16 %v5099, %v5082
        %v5289 = vpack.c.bf16 %v5133, %v5116
        %v5290 = vpack.c.bf16 %v5167, %v5150
        %v5291 = vpack.c.bf16 %v5201, %v5184
        %v5292 = vpack.c.bf16 %v5235, %v5218
        %v5293 = vpack.c.bf16 %v5269, %v5252
        %v5294 = vld [vmem:[#allocation16] sm:$0xff]
        %v5295 = vld [vmem:[#allocation16 + $0x8] sm:$0xff]
        %v5296 = vld [vmem:[#allocation16 + $0x10] sm:$0xff]
        %v5297 = vld [vmem:[#allocation16 + $0x18] sm:$0xff]
        %v5298 = vld [vmem:[#allocation16 + $0x20] sm:$0xff]
        %v5299 = vld [vmem:[#allocation16 + $0x28] sm:$0xff]
        %v5300 = vld [vmem:[#allocation16 + $0x30] sm:$0xff]
        %v5301 = vld [vmem:[#allocation16 + $0x38] sm:$0xff]
        %v5302 = vld [vmem:[#allocation16 + $0x40] sm:$0xff]
        %v5303 = vld [vmem:[#allocation16 + $0x48] sm:$0xff]
        %v5304 = vld [vmem:[#allocation16 + $0x50] sm:$0xff]
        %v5305 = vld [vmem:[#allocation16 + $0x58] sm:$0xff]
        %v5306 = vld [vmem:[#allocation16 + $0x60] sm:$0xff]
        %v5307 = vld [vmem:[#allocation16 + $0x68] sm:$0xff]
        %v5308 = vld [vmem:[#allocation16 + $0x70] sm:$0xff]
        %v5309 = vld [vmem:[#allocation16 + $0x78] sm:$0xff]
        %v5310 = vld [vmem:[%s10] sm:$0x3]
        %v5312 = vlaneseq
        %v5313 = vshrl.u32 %v5312, 7
        %v5314 = vsub.s32 0, %v5313
        %v5315 = vrot.slane %v5310, %v5314
        %v5316 = vlaneseq
        %v5317 = vshrl.u32 %v5316, 7
        %v5318 = vsub.s32 1, %v5317
        %v5319 = vrot.slane %v5310, %v5318
        %v5338 = vunpack.c.l.b16 %v5294
        %v5339 = vunpack.c.h.b16 %v5294
        %v5340 = vunpack.c.l.b16 %v5295
        %v5341 = vunpack.c.h.b16 %v5295
        %v5342 = vunpack.c.l.b16 %v5296
        %v5343 = vunpack.c.h.b16 %v5296
        %v5344 = vunpack.c.l.b16 %v5297
        %v5345 = vunpack.c.h.b16 %v5297
        %v5346 = vunpack.c.l.b16 %v5298
        %v5347 = vunpack.c.h.b16 %v5298
        %v5348 = vunpack.c.l.b16 %v5299
        %v5349 = vunpack.c.h.b16 %v5299
        %v5350 = vunpack.c.l.b16 %v5300
        %v5351 = vunpack.c.h.b16 %v5300
        %v5352 = vunpack.c.l.b16 %v5301
        %v5353 = vunpack.c.h.b16 %v5301
        %v5354 = vunpack.c.l.b16 %v5302
        %v5355 = vunpack.c.h.b16 %v5302
        %v5356 = vunpack.c.l.b16 %v5303
        %v5357 = vunpack.c.h.b16 %v5303
        %v5358 = vunpack.c.l.b16 %v5304
        %v5359 = vunpack.c.h.b16 %v5304
        %v5360 = vunpack.c.l.b16 %v5305
        %v5361 = vunpack.c.h.b16 %v5305
        %v5362 = vunpack.c.l.b16 %v5306
        %v5363 = vunpack.c.h.b16 %v5306
        %v5364 = vunpack.c.l.b16 %v5307
        %v5365 = vunpack.c.h.b16 %v5307
        %v5366 = vunpack.c.l.b16 %v5308
        %v5367 = vunpack.c.h.b16 %v5308
        %v5368 = vunpack.c.l.b16 %v5309
        %v5369 = vunpack.c.h.b16 %v5309
        %v5370 = vpack.c.b16 %v5340, %v5338
        %v5371 = vpack.c.b16 %v5341, %v5339
        %v5372 = vpack.c.b16 %v5344, %v5342
        %v5373 = vpack.c.b16 %v5345, %v5343
        %v5374 = vpack.c.b16 %v5348, %v5346
        %v5375 = vpack.c.b16 %v5349, %v5347
        %v5376 = vpack.c.b16 %v5352, %v5350
        %v5377 = vpack.c.b16 %v5353, %v5351
        %v5378 = vpack.c.b16 %v5356, %v5354
        %v5379 = vpack.c.b16 %v5357, %v5355
        %v5380 = vpack.c.b16 %v5360, %v5358
        %v5381 = vpack.c.b16 %v5361, %v5359
        %v5382 = vpack.c.b16 %v5364, %v5362
        %v5383 = vpack.c.b16 %v5365, %v5363
        %v5384 = vpack.c.b16 %v5368, %v5366
        %v5385 = vpack.c.b16 %v5369, %v5367
        %5402 = vmatprep.subr.bf16.mxu0 %v5371
        %5403 = vmatpush1.bf16.msra.mxu0 %v5370
        %5404 = vmatprep.subr.bf16.mxu0 %v5373
        %5405 = vmatpush1.bf16.msra.mxu0 %v5372
        %5406 = vmatprep.subr.bf16.mxu0 %v5375
        %5407 = vmatpush1.bf16.msra.mxu0 %v5374
        %5408 = vmatprep.subr.bf16.mxu0 %v5377
        %5409 = vmatpush1.bf16.msra.mxu0 %v5376
        %5410 = vmatprep.subr.bf16.mxu0 %v5379
        %5411 = vmatpush1.bf16.msra.mxu0 %v5378
        %5412 = vmatprep.subr.bf16.mxu0 %v5381
        %5413 = vmatpush1.bf16.msra.mxu0 %v5380
        %5414 = vmatprep.subr.bf16.mxu0 %v5383
        %5415 = vmatpush1.bf16.msra.mxu0 %v5382
        %5416 = vmatprep.subr.bf16.mxu0 %v5385
        %5417 = vmatpush1.bf16.msra.mxu0 %v5384
        %5418 = vmatprep.subr.bf16.mxu0 0
        %5419 = vmatpush1.bf16.msra.mxu0 0
        %5420 = vmatprep.subr.bf16.mxu0 0
        %5421 = vmatpush1.bf16.msra.mxu0 0
        %5422 = vmatprep.subr.bf16.mxu0 0
        %5423 = vmatpush1.bf16.msra.mxu0 0
        %5424 = vmatprep.subr.bf16.mxu0 0
        %5425 = vmatpush1.bf16.msra.mxu0 0
        %5426 = vmatprep.subr.bf16.mxu0 0
        %5427 = vmatpush1.bf16.msra.mxu0 0
        %5428 = vmatprep.subr.bf16.mxu0 0
        %5429 = vmatpush1.bf16.msra.mxu0 0
        %5430 = vmatprep.subr.bf16.mxu0 0
        %5431 = vmatpush1.bf16.msra.mxu0 0
        %5432 = vmatprep.subr.bf16.mxu0 0
        %5433 = vmatpush1.bf16.msra.mxu0 0
        %5434 = vmatprep.mubr.bf16.mxu0 0
        %5435 = vmatmul.mubr.bf16.gmra.mrb[0].mxu0 %v5286
        %v5436 = vpop.f32.mrb[0].mxu0
        %v5437 = vadd.f32 %v5315, %v5436
        %v5438 = vpop.f32.mrb[0].mxu0
        %v5439 = vadd.f32 %v5319, %v5438
        %v5440 = vpop.f32.mrb[0].mxu0
        %v5441 = vadd.f32 %v5315, %v5440
        %v5442 = vpop.f32.mrb[0].mxu0
        %v5443 = vadd.f32 %v5319, %v5442
        %5444 = vmatprep.mubr.bf16.mxu0 0
        %5445 = vmatmul.mubr.bf16.gmra.mrb[0].mxu0 %v5287
        %v5446 = vpop.f32.mrb[0].mxu0
        %v5447 = vadd.f32 %v5315, %v5446
        %v5448 = vpop.f32.mrb[0].mxu0
        %v5449 = vadd.f32 %v5319, %v5448
        %v5450 = vpop.f32.mrb[0].mxu0
        %v5451 = vadd.f32 %v5315, %v5450
        %v5452 = vpop.f32.mrb[0].mxu0
        %v5453 = vadd.f32 %v5319, %v5452
        %5454 = vmatprep.mubr.bf16.mxu0 0
        %5455 = vmatmul.mubr.bf16.gmra.mrb[0].mxu0 %v5288
        %v5456 = vpop.f32.mrb[0].mxu0
        %v5457 = vadd.f32 %v5315, %v5456
        %v5458 = vpop.f32.mrb[0].mxu0
        %v5459 = vadd.f32 %v5319, %v5458
        %v5460 = vpop.f32.mrb[0].mxu0
        %v5461 = vadd.f32 %v5315, %v5460
        %v5462 = vpop.f32.mrb[0].mxu0
        %v5463 = vadd.f32 %v5319, %v5462
        %5464 = vmatprep.mubr.bf16.mxu0 0
        %5465 = vmatmul.mubr.bf16.gmra.mrb[0].mxu0 %v5289
        %v5466 = vpop.f32.mrb[0].mxu0
        %v5467 = vadd.f32 %v5315, %v5466
        %v5468 = vpop.f32.mrb[0].mxu0
        %v5469 = vadd.f32 %v5319, %v5468
        %v5470 = vpop.f32.mrb[0].mxu0
        %v5471 = vadd.f32 %v5315, %v5470
        %v5472 = vpop.f32.mrb[0].mxu0
        %v5473 = vadd.f32 %v5319, %v5472
        %5474 = vmatprep.mubr.bf16.mxu0 0
        %5475 = vmatmul.mubr.bf16.gmra.mrb[0].mxu0 %v5290
        %v5476 = vpop.f32.mrb[0].mxu0
        %v5477 = vadd.f32 %v5315, %v5476
        %v5478 = vpop.f32.mrb[0].mxu0
        %v5479 = vadd.f32 %v5319, %v5478
        %v5480 = vpop.f32.mrb[0].mxu0
        %v5481 = vadd.f32 %v5315, %v5480
        %v5482 = vpop.f32.mrb[0].mxu0
        %v5483 = vadd.f32 %v5319, %v5482
        %5484 = vmatprep.mubr.bf16.mxu0 0
        %5485 = vmatmul.mubr.bf16.gmra.mrb[0].mxu0 %v5291
        %v5486 = vpop.f32.mrb[0].mxu0
        %v5487 = vadd.f32 %v5315, %v5486
        %v5488 = vpop.f32.mrb[0].mxu0
        %v5489 = vadd.f32 %v5319, %v5488
        %v5490 = vpop.f32.mrb[0].mxu0
        %v5491 = vadd.f32 %v5315, %v5490
        %v5492 = vpop.f32.mrb[0].mxu0
        %v5493 = vadd.f32 %v5319, %v5492
        %5494 = vmatprep.mubr.bf16.mxu0 0
        %5495 = vmatmul.mubr.bf16.gmra.mrb[0].mxu0 %v5292
        %v5496 = vpop.f32.mrb[0].mxu0
        %v5497 = vadd.f32 %v5315, %v5496
        %v5498 = vpop.f32.mrb[0].mxu0
        %v5499 = vadd.f32 %v5319, %v5498
        %v5500 = vpop.f32.mrb[0].mxu0
        %v5501 = vadd.f32 %v5315, %v5500
        %v5502 = vpop.f32.mrb[0].mxu0
        %v5503 = vadd.f32 %v5319, %v5502
        %5504 = vmatprep.mubr.bf16.mxu0 0
        %5505 = vmatmul.mubr.bf16.gmra.mrb[0].mxu0 %v5293
        %v5506 = vpop.f32.mrb[0].mxu0
        %v5507 = vadd.f32 %v5315, %v5506
        %v5508 = vpop.f32.mrb[0].mxu0
        %v5509 = vadd.f32 %v5319, %v5508
        %v5510 = vpop.f32.mrb[0].mxu0
        %v5511 = vadd.f32 %v5315, %v5510
        %v5512 = vpop.f32.mrb[0].mxu0
        %v5513 = vadd.f32 %v5319, %v5512
        %5514 = vdwg.mxu0
        %v5515 = vadd.f32 %v5437, %v557
        %v5516 = vadd.f32 %v5439, %v558
        %v5517 = vadd.f32 %v5441, %v559
        %v5518 = vadd.f32 %v5443, %v560
        %v5519 = vadd.f32 %v5447, %v561
        %v5520 = vadd.f32 %v5449, %v562
        %v5521 = vadd.f32 %v5451, %v563
        %v5522 = vadd.f32 %v5453, %v564
        %v5523 = vadd.f32 %v5457, %v565
        %v5524 = vadd.f32 %v5459, %v566
        %v5525 = vadd.f32 %v5461, %v567
        %v5526 = vadd.f32 %v5463, %v568
        %v5527 = vadd.f32 %v5467, %v569
        %v5528 = vadd.f32 %v5469, %v570
        %v5529 = vadd.f32 %v5471, %v571
        %v5530 = vadd.f32 %v5473, %v572
        %v5531 = vadd.f32 %v5477, %v573
        %v5532 = vadd.f32 %v5479, %v574
        %v5533 = vadd.f32 %v5481, %v575
        %v5534 = vadd.f32 %v5483, %v576
        %v5535 = vadd.f32 %v5487, %v577
        %v5536 = vadd.f32 %v5489, %v578
        %v5537 = vadd.f32 %v5491, %v579
        %v5538 = vadd.f32 %v5493, %v580
        %v5539 = vadd.f32 %v5497, %v581
        %v5540 = vadd.f32 %v5499, %v582
        %v5541 = vadd.f32 %v5501, %v583
        %v5542 = vadd.f32 %v5503, %v584
        %v5543 = vadd.f32 %v5507, %v585
        %v5544 = vadd.f32 %v5509, %v586
        %v5545 = vadd.f32 %v5511, %v587
        %v5546 = vadd.f32 %v5513, %v588
        %5547 = vst [vmem:[%s516] sm:$0xff] %v5515
        %5548 = vst [vmem:[%s516 + $0x8] sm:$0xff] %v5516
        %5549 = vst [vmem:[%s516 + $0x10] sm:$0xff] %v5517
        %5550 = vst [vmem:[%s516 + $0x18] sm:$0xff] %v5518
        %5551 = vst [vmem:[%s516 + $0x20] sm:$0xff] %v5519
        %5552 = vst [vmem:[%s516 + $0x28] sm:$0xff] %v5520
        %5553 = vst [vmem:[%s516 + $0x30] sm:$0xff] %v5521
        %5554 = vst [vmem:[%s516 + $0x38] sm:$0xff] %v5522
        %5555 = vst [vmem:[%s516 + $0x40] sm:$0xff] %v5523
        %5556 = vst [vmem:[%s516 + $0x48] sm:$0xff] %v5524
        %5557 = vst [vmem:[%s516 + $0x50] sm:$0xff] %v5525
        %5558 = vst [vmem:[%s516 + $0x58] sm:$0xff] %v5526
        %5559 = vst [vmem:[%s516 + $0x60] sm:$0xff] %v5527
        %5560 = vst [vmem:[%s516 + $0x68] sm:$0xff] %v5528
        %5561 = vst [vmem:[%s516 + $0x70] sm:$0xff] %v5529
        %5562 = vst [vmem:[%s516 + $0x78] sm:$0xff] %v5530
        %5563 = vst [vmem:[%s516 + $0x80] sm:$0xff] %v5531
        %5564 = vst [vmem:[%s516 + $0x88] sm:$0xff] %v5532
        %5565 = vst [vmem:[%s516 + $0x90] sm:$0xff] %v5533
        %5566 = vst [vmem:[%s516 + $0x98] sm:$0xff] %v5534
        %5567 = vst [vmem:[%s516 + $0xa0] sm:$0xff] %v5535
        %5568 = vst [vmem:[%s516 + $0xa8] sm:$0xff] %v5536
        %5569 = vst [vmem:[%s516 + $0xb0] sm:$0xff] %v5537
        %5570 = vst [vmem:[%s516 + $0xb8] sm:$0xff] %v5538
        %5571 = vst [vmem:[%s516 + $0xc0] sm:$0xff] %v5539
        %5572 = vst [vmem:[%s516 + $0xc8] sm:$0xff] %v5540
        %5573 = vst [vmem:[%s516 + $0xd0] sm:$0xff] %v5541
        %5574 = vst [vmem:[%s516 + $0xd8] sm:$0xff] %v5542
        %5575 = vst [vmem:[%s516 + $0xe0] sm:$0xff] %v5543
        %5576 = vst [vmem:[%s516 + $0xe8] sm:$0xff] %v5544
        %5577 = vst [vmem:[%s516 + $0xf0] sm:$0xff] %v5545
        %5578 = vst [vmem:[%s516 + $0xf8] sm:$0xff] %v5546
        %s5579 = sand.u32 %s277, 1
        %s5580 = scalar_lea.sflag [#allocation9], %s5579
        %s5581 = sand.u32 %s277, 1
        %s5582 = smul.addr %s5581, 256
        %s5583 = scalar_lea.vmem [#allocation18], %s5582
        // Predicated region
        $region89: #{tpu_custom_call.1} parent=55 // pred_check
          %p5584 = pneg %p287
        $region90: #{tpu_custom_call.1} parent=55 // pred_check_branch
          %5586 = sbr.rel (%p5584) target = $region92
        $region91: #{tpu_custom_call.1} parent=55 // pred_region
          %s5587 = smul.u32 16, %s46
          %s5589 = ssub.s32 4096, 4096
          %5590 = vsyncadd %s5580, %s5589
          %s5591 = smul.addr %s5587, 2
          %s5592 = smul.addr %s45, 64
          %s5593 = sadd.s32 %s5591, %s5592
          %s5594 = smul.addr %s5593, 128
          %s5595 = scalar_lea.hbm %s11, %s5594
          %s5596 = sshll.u32 %s5583, 4
          %s5597 = int_to_ptr.vmem [resolvable:$true] %s5596
          %5602 = dma.vmem_to_hbm [thread:$0]  %s5597, 4096, %s5595, %s5580, 256, 256, 16
        $region92: #{tpu_custom_call.1} parent=55 // pred_fallthru
          _
      $region56: #{tpu_custom_call.1} parent=5 // pred_fallthru
        _
      %p5603 = scmp.le.s32.totalorder 2, %s36
      // Predicated region
      $region93: #{tpu_custom_call.1} parent=5 // pred_check
        %p5604 = pneg %p5603
      $region94: #{tpu_custom_call.1} parent=5 // pred_check_branch
        %5606 = sbr.rel (%p5604) target = $region96
      $region95: #{tpu_custom_call.1} parent=5 // pred_region
        %s5607 = ssub.s32 %s36, 2
        // Predicated region
        $region97: #{tpu_custom_call.1} parent=95 // pred_check
          %p5608 = pneg %p293
        $region98: #{tpu_custom_call.1} parent=95 // pred_check_branch
          %5610 = sbr.rel (%p5608) target = $region100
        $region99: #{tpu_custom_call.1} parent=95 // pred_region
          %s5611 = sand.u32 %s278, 1
          %s5612 = scalar_lea.sflag [#allocation9], %s5611
          %s5613 = sand.u32 %s278, 1
          %s5614 = smul.addr %s5613, 256
          %s5615 = scalar_lea.vmem [#allocation18], %s5614
          %5616 = dma.done %s5612, 4096
        $region100: #{tpu_custom_call.1} parent=95 // pred_fallthru
          _
      $region96: #{tpu_custom_call.1} parent=5 // pred_fallthru
        _
    $region6: #{tpu_custom_call.1} parent=1 // loop_footer
      %s40 = sadd.s32 1, %s36
    $region7: #{tpu_custom_call.1} parent=1 // loop_footer_branch
      %35 = sbr.rel target = $region3
    $region8: #{tpu_custom_call.1} parent=1 // loop_exit
      _
    %5617 = vsyncpa [#allocation8], 1
    %s5618 = scalar_lea.sflag [#allocation8], 1
    %5619 = vsyncpa %s5618, 1
    %5620 = vsyncpa [#allocation11], 1
    %s5621 = scalar_lea.sflag [#allocation11], 1
    %5622 = vsyncpa %s5621, 1
    %5623 = vsyncpa [#allocation14], 1
    %5624 = vsyncpa [#allocation17], 1
    %5625 = vsyncpa [#allocation9], 1
    %s5626 = scalar_lea.sflag [#allocation9], 1
    %5627 = vsyncpa %s5626, 1

</llo_original>
